<compile_context>
chip_gen: v7x
topology: tpu7x:2x2x1
jax: 0.10.0
libtpu: 0.0.40
codegen_flags: <defaults>
</compile_context>

<pallas_src>
import functools
import math

import jax
import jax.numpy as jnp
from jax import lax
from jax.experimental import pallas as pl
from jax.experimental.pallas import tpu as pltpu


_VMEM_LIMIT = 32 * 1024 * 1024      # explicit scoped-VMEM budget (safe on v5e..v7x)
_DEFAULT_TILE_M = 1024              # row tile for the fused per-point stages
_DEFAULT_TILE_P = 512               # point tile for the fused mlp6 + max stage


def _round_up(x, m):
    return (x + m - 1) // m * m


def _row_tiling(m, tile_m):
    """Pick (tm, m_pad): tm divides m_pad; tm sublane-aligned or full-extent.

    Tries to give the grid >= 2 tiles so both v7x TensorCores get work; for
    power-of-two point counts no padding (and no post-call slice) is needed."""
    if m <= 32:
        return m, m                                    # one full-extent tile
    tm = min(tile_m, _round_up(-(-m // 2), 16))
    return tm, _round_up(m, tm)


def _compiler_params(semantics):
    return pltpu.CompilerParams(dimension_semantics=semantics,
                                vmem_limit_bytes=_VMEM_LIMIT)


# ---------------------------------------------------------------------------
# Stage 1: confidence head + concat + mlp1 + mlp2   (fused)
# ---------------------------------------------------------------------------
def _stage1_kernel(x_ref, wc_ref, bc_ref, w1x_ref, w1c_ref, b1_ref,
                   w2_ref, b2_ref, conf_ref, l2_ref):
    x = x_ref[...]                                                       # (TM, 3) f32
    # TODO(synk): ConfidenceScorePredictor is undefined in the reference source;
    # stand-in is a per-point Linear(3 -> 1) + Sigmoid.
    conf = jax.nn.sigmoid(
        jnp.dot(x, wc_ref[...], preferred_element_type=jnp.float32) + bc_ref[...])
    conf_ref[...] = conf.astype(conf_ref.dtype)                          # (TM, 1)

    # layer1 = relu([conf, x] @ W1 + b1); the concat is split into two products.
    h1 = jnp.dot(x, w1x_ref[...], preferred_element_type=jnp.float32)
    h1 = h1 + conf * w1c_ref[...] + b1_ref[...]                          # (TM, 64) f32
    h1 = jnp.maximum(h1, 0.0).astype(jnp.bfloat16)

    # layer2 = relu(layer1 @ W2 + b2)
    l2 = jnp.dot(h1, w2_ref[...], preferred_element_type=jnp.float32) + b2_ref[...]
    l2_ref[...] = jnp.maximum(l2, 0.0).astype(l2_ref.dtype)              # (TM, 256) bf16


def _stage1(x, p, tile_m=_DEFAULT_TILE_M):
    """(B, N, 3) f32 -> conf (B, N, 1) f32, layer2 (B, N, 256) bf16."""
    b, n, _ = x.shape
    m = b * n
    c1 = p["w2"].shape[0]      # 64
    c2 = p["w2"].shape[1]      # 256
    x2 = x.reshape(m, 3).astype(jnp.float32)
    tm, m_pad = _row_tiling(m, tile_m)
    if m_pad != m:
        x2 = jnp.pad(x2, ((0, m_pad - m), (0, 0)))

    resident = lambda i: (0, 0)
    conf, l2 = pl.pallas_call(
        _stage1_kernel,
        out_shape=(jax.ShapeDtypeStruct((m_pad, 1), jnp.float32),
                   jax.ShapeDtypeStruct((m_pad, c2), jnp.bfloat16)),
        grid_spec=pltpu.PrefetchScalarGridSpec(
            num_scalar_prefetch=0,
            grid=(m_pad // tm,),
            in_specs=[
                pl.BlockSpec((tm, 3), lambda i: (i, 0)),      # streamed activations
                pl.BlockSpec((3, 1), resident),               # weights: VMEM-resident
                pl.BlockSpec((1, 1), resident),
                pl.BlockSpec((3, c1), resident),
                pl.BlockSpec((1, c1), resident),
                pl.BlockSpec((1, c1), resident),
                pl.BlockSpec((c1, c2), resident),
                pl.BlockSpec((1, c2), resident),
            ],
            out_specs=(pl.BlockSpec((tm, 1), lambda i: (i, 0)),
                       pl.BlockSpec((tm, c2), lambda i: (i, 0))),
        ),
        compiler_params=_compiler_params(("parallel",)),
    )(x2, p["wc"], p["bc"], p["w1x"], p["w1c"], p["b1"], p["w2"], p["b2"])

    if m_pad != m:
        conf, l2 = conf[:m], l2[:m]
    return conf.reshape(b, n, 1), l2.reshape(b, n, c2)


# ---------------------------------------------------------------------------
# Stage 2: pConv1 + concat + mlp3 + mlp4   (fused)
# ---------------------------------------------------------------------------
def _stage2_kernel(xyz_ref, f_ref, wp_ref, bp_ref, w3x_ref, w3f_ref, b3_ref,
                   w4_ref, b4_ref, l5_ref):
    xyz = xyz_ref[...]                                                   # (TM, 3) f32
    # layer3 = feat @ Wp + bp  (Conv1d k=1, no activation)
    l3 = jnp.dot(f_ref[...], wp_ref[...],
                 preferred_element_type=jnp.float32) + bp_ref[...]       # (TM, 256) f32
    # layer4 = relu([xyz, layer3] @ W3 + b3); concat split into two dots.
    h = jnp.dot(xyz, w3x_ref[...], preferred_element_type=jnp.float32)
    h = h + jnp.dot(l3.astype(jnp.bfloat16), w3f_ref[...],
                    preferred_element_type=jnp.float32) + b3_ref[...]
    h = jnp.maximum(h, 0.0).astype(jnp.bfloat16)                         # (TM, 256)
    # layer5 = relu(layer4 @ W4 + b4)
    l5 = jnp.dot(h, w4_ref[...], preferred_element_type=jnp.float32) + b4_ref[...]
    l5_ref[...] = jnp.maximum(l5, 0.0).astype(l5_ref.dtype)              # (TM, 384) bf16


def _stage2(xyz1, feat1, p, tile_m=_DEFAULT_TILE_M):
    """(B, N1, 3) f32 + (B, N1, 256) bf16 -> layer5 (B, N1, 384) bf16."""
    b, n1, _ = xyz1.shape
    m = b * n1
    cf = feat1.shape[-1]       # 256
    co = p["w4"].shape[1]      # 384
    xyz2d = xyz1.reshape(m, 3).astype(jnp.float32)
    f2d = feat1.reshape(m, cf)
    tm, m_pad = _row_tiling(m, tile_m)
    if m_pad != m:
        xyz2d = jnp.pad(xyz2d, ((0, m_pad - m), (0, 0)))
        f2d = jnp.pad(f2d, ((0, m_pad - m), (0, 0)))

    resident = lambda i: (0, 0)
    l5 = pl.pallas_call(
        _stage2_kernel,
        out_shape=jax.ShapeDtypeStruct((m_pad, co), jnp.bfloat16),
        grid_spec=pltpu.PrefetchScalarGridSpec(
            num_scalar_prefetch=0,
            grid=(m_pad // tm,),
            in_specs=[
                pl.BlockSpec((tm, 3), lambda i: (i, 0)),
                pl.BlockSpec((tm, cf), lambda i: (i, 0)),
                pl.BlockSpec((cf, cf), resident),
                pl.BlockSpec((1, cf), resident),
                pl.BlockSpec((3, cf), resident),
                pl.BlockSpec((cf, cf), resident),
                pl.BlockSpec((1, cf), resident),
                pl.BlockSpec((cf, co), resident),
                pl.BlockSpec((1, co), resident),
            ],
            out_specs=pl.BlockSpec((tm, co), lambda i: (i, 0)),
        ),
        compiler_params=_compiler_params(("parallel",)),
    )(xyz2d, f2d, p["wp1"], p["bp1"], p["w3x"], p["w3f"], p["b3"],
      p["w4"], p["b4"])
    if m_pad != m:
        l5 = l5[:m]
    return l5.reshape(b, n1, co)


# ---------------------------------------------------------------------------
# Stage 3: pConv2 + concat + mlp5   (fused)
# ---------------------------------------------------------------------------
def _stage3_kernel(xyz_ref, f_ref, wp_ref, bp_ref, w5x_ref, w5f_ref, b5_ref, l7_ref):
    xyz = xyz_ref[...]                                                   # (TM, 3) f32
    l6 = jnp.dot(f_ref[...], wp_ref[...],
                 preferred_element_type=jnp.float32) + bp_ref[...]       # (TM, 384) f32
    h = jnp.dot(xyz, w5x_ref[...], preferred_element_type=jnp.float32)
    h = h + jnp.dot(l6.astype(jnp.bfloat16), w5f_ref[...],
                    preferred_element_type=jnp.float32) + b5_ref[...]
    l7_ref[...] = jnp.maximum(h, 0.0).astype(l7_ref.dtype)               # (TM, 384) bf16


def _stage3(xyz2, feat2, p, tile_m=_DEFAULT_TILE_M):
    """(B, N2, 3) f32 + (B, N2, 384) bf16 -> layer7 (B, N2, 384) bf16."""
    b, n2, _ = xyz2.shape
    m = b * n2
    cf = feat2.shape[-1]       # 384
    xyz2d = xyz2.reshape(m, 3).astype(jnp.float32)
    f2d = feat2.reshape(m, cf)
    tm, m_pad = _row_tiling(m, tile_m)
    if m_pad != m:
        xyz2d = jnp.pad(xyz2d, ((0, m_pad - m), (0, 0)))
        f2d = jnp.pad(f2d, ((0, m_pad - m), (0, 0)))

    resident = lambda i: (0, 0)
    l7 = pl.pallas_call(
        _stage3_kernel,
        out_shape=jax.ShapeDtypeStruct((m_pad, cf), jnp.bfloat16),
        grid_spec=pltpu.PrefetchScalarGridSpec(
            num_scalar_prefetch=0,
            grid=(m_pad // tm,),
            in_specs=[
                pl.BlockSpec((tm, 3), lambda i: (i, 0)),
                pl.BlockSpec((tm, cf), lambda i: (i, 0)),
                pl.BlockSpec((cf, cf), resident),
                pl.BlockSpec((1, cf), resident),
                pl.BlockSpec((3, cf), resident),
                pl.BlockSpec((cf, cf), resident),
                pl.BlockSpec((1, cf), resident),
            ],
            out_specs=pl.BlockSpec((tm, cf), lambda i: (i, 0)),
        ),
        compiler_params=_compiler_params(("parallel",)),
    )(xyz2d, f2d, p["wp2"], p["bp2"], p["w5x"], p["w5f"], p["b5"])
    if m_pad != m:
        l7 = l7[:m]
    return l7.reshape(b, n2, cf)


# ---------------------------------------------------------------------------
# Stage 4: mlp6 + max over the point axis   (fused; layer8 never hits HBM)
# ---------------------------------------------------------------------------
def _stage4_kernel(f_ref, w6_ref, b6_ref, out_ref, acc_ref, *,
                   n_valid, tile_p, masked):
    kp = pl.program_id(1)

    @pl.when(kp == 0)
    def _():
        acc_ref[...] = jnp.zeros_like(acc_ref)       # ReLU output is >= 0

    l8 = jnp.dot(f_ref[0], w6_ref[...],
                 preferred_element_type=jnp.float32) + b6_ref[...]       # (TP, 512)
    l8 = jnp.maximum(l8, 0.0)
    if masked:
        # Zero out padded rows; since ReLU(valid) >= 0 they cannot win the max.
        row = kp * tile_p + lax.broadcasted_iota(jnp.int32, l8.shape, 0)
        l8 = jnp.where(row < n_valid, l8, 0.0)
    acc_ref[...] = jnp.maximum(acc_ref[...], jnp.max(l8, axis=0, keepdims=True))

    @pl.when(kp == pl.num_programs(1) - 1)
    def _():
        out_ref[0] = acc_ref[...].astype(out_ref.dtype)


def _stage4(feat3, p, tile_p=_DEFAULT_TILE_P):
    """(B, N3, 384) bf16 -> (B, 512) f32."""
    b, n3, cf = feat3.shape
    co = p["w6"].shape[1]      # 512
    if n3 <= tile_p:
        tp, n_pad, masked = n3, n3, False
    else:
        tp = tile_p
        n_pad = _round_up(n3, tp)
        masked = n_pad != n3
        if masked:
            feat3 = jnp.pad(feat3, ((0, 0), (0, n_pad - n3), (0, 0)))

    out = pl.pallas_call(
        functools.partial(_stage4_kernel, n_valid=n3, tile_p=tp, masked=masked),
        out_shape=jax.ShapeDtypeStruct((b, 1, co), jnp.float32),
        grid_spec=pltpu.PrefetchScalarGridSpec(
            num_scalar_prefetch=0,
            grid=(b, n_pad // tp),
            in_specs=[
                pl.BlockSpec((1, tp, cf), lambda bi, pi: (bi, pi, 0)),
                pl.BlockSpec((cf, co), lambda bi, pi: (0, 0)),
                pl.BlockSpec((1, co), lambda bi, pi: (0, 0)),
            ],
            out_specs=pl.BlockSpec((1, 1, co), lambda bi, pi: (bi, 0, 0)),
            scratch_shapes=[pltpu.VMEM((1, co), jnp.float32)],
        ),
        compiler_params=_compiler_params(("parallel", "arbitrary")),
    )(feat3, p["w6"], p["b6"])
    return out.reshape(b, co)


# ---------------------------------------------------------------------------
# Plain-JAX pieces: FPS (sequential data-dependent argmax) and point gathers.
# ---------------------------------------------------------------------------
# TODO(synk): farthest_point_sampling stays in plain JAX; a VMEM-resident
# Pallas FPS (one grid step per batch, fori_loop over npoint) is future work.
def farthest_point_sampling(xyz, npoint):
    """Matches the torch reference, except the seed point is index 0 instead
    of torch.randint (deterministic)."""
    b, n, _ = xyz.shape
    centroids0 = jnp.zeros((b, npoint), dtype=jnp.int32)
    distance0 = jnp.full((b, n), 1e10, dtype=jnp.float32)
    farthest0 = jnp.zeros((b,), dtype=jnp.int32)
    batch_idx = jnp.arange(b)

    def body(i, carry):
        centroids, distance, farthest = carry
        centroids = centroids.at[:, i].set(farthest)
        centroid = xyz[batch_idx, farthest][:, None, :]          # (B, 1, 3)
        dist = jnp.sum((xyz - centroid) ** 2, axis=-1).astype(jnp.float32)
        distance = jnp.minimum(distance, dist)
        farthest = jnp.argmax(distance, axis=-1).astype(jnp.int32)
        return centroids, distance, farthest

    centroids, _, _ = lax.fori_loop(0, npoint, body,
                                    (centroids0, distance0, farthest0))
    return centroids


def gather_points(x, idx):
    """torch.gather(x, 1, idx.unsqueeze(-1).expand(-1, -1, C))."""
    b, s = idx.shape
    c = x.shape[-1]
    return jnp.take_along_axis(
        x, jnp.broadcast_to(idx[:, :, None], (b, s, c)), axis=1)


# ---------------------------------------------------------------------------
# Parameter preparation: split the concat weights, cast wide matrices to bf16.
# ---------------------------------------------------------------------------
def _prep_params(params):
    f32 = lambda a: a.astype(jnp.float32)
    bf16 = lambda a: a.astype(jnp.bfloat16)
    return {
        "wc":  f32(params["conf_w"]),                       # (3, 1)
        "bc":  f32(params["conf_b"]).reshape(1, 1),
        "w1c": f32(params["mlp1_w"][0:1]),                  # (1, 64)  conf column
        "w1x": f32(params["mlp1_w"][1:4]),                  # (3, 64)  xyz columns
        "b1":  f32(params["mlp1_b"]).reshape(1, -1),
        "w2":  bf16(params["mlp2_w"]),                      # (64, 256)
        "b2":  f32(params["mlp2_b"]).reshape(1, -1),
        "wp1": bf16(params["pconv1_w"]),                    # (256, 256)
        "bp1": f32(params["pconv1_b"]).reshape(1, -1),
        "w3x": f32(params["mlp3_w"][0:3]),                  # (3, 256) xyz columns
        "w3f": bf16(params["mlp3_w"][3:]),                  # (256, 256)
        "b3":  f32(params["mlp3_b"]).reshape(1, -1),
        "w4":  bf16(params["mlp4_w"]),                      # (256, 384)
        "b4":  f32(params["mlp4_b"]).reshape(1, -1),
        "wp2": bf16(params["pconv2_w"]),                    # (384, 384)
        "bp2": f32(params["pconv2_b"]).reshape(1, -1),
        "w5x": f32(params["mlp5_w"][0:3]),                  # (3, 384) xyz columns
        "w5f": bf16(params["mlp5_w"][3:]),                  # (384, 384)
        "b5":  f32(params["mlp5_b"]).reshape(1, -1),
        "w6":  bf16(params["mlp6_w"]),                      # (384, 512)
        "b6":  f32(params["mlp6_b"]).reshape(1, -1),
    }


# ---------------------------------------------------------------------------
# Full module forward (Pallas path)
# ---------------------------------------------------------------------------
def noise_aware_feature_extractor(params, x):
    p = _prep_params(params)
    b, n, _ = x.shape

    conf, layer2 = _stage1(x, p)                       # (B,N,1) f32, (B,N,256) bf16

    idx1 = farthest_point_sampling(x, n // 2)
    xyz1 = gather_points(x, idx1)                      # (B, N/2, 3)   f32
    feat1 = gather_points(layer2, idx1)                # (B, N/2, 256) bf16
    layer5 = _stage2(xyz1, feat1, p)                   # (B, N/2, 384) bf16

    idx2 = farthest_point_sampling(xyz1, n // 4)
    xyz2 = gather_points(xyz1, idx2)                   # (B, N/4, 3)   f32
    feat2 = gather_points(layer5, idx2)                # (B, N/4, 384) bf16
    layer7 = _stage3(xyz2, feat2, p)                   # (B, N/4, 384) bf16

    idx3 = farthest_point_sampling(xyz2, n // 8)
    # (The torch code re-gathers xyz from the ORIGINAL x here, but that tensor
    #  is never used downstream, so it is not computed.)
    feat3 = gather_points(layer7, idx3)                # (B, N/8, 384) bf16
    output = _stage4(feat3, p)                         # (B, 512) f32
    return output, conf


# ---------------------------------------------------------------------------
# Pure-JAX reference with identical dtype transitions (for correctness check)
# ---------------------------------------------------------------------------
def noise_aware_feature_extractor_ref(params, x):
    p = _prep_params(params)
    b, n, _ = x.shape
    bf = jnp.bfloat16
    dot = lambda a, w: jnp.dot(a, w, preferred_element_type=jnp.float32)

    xf = x.astype(jnp.float32)
    conf = jax.nn.sigmoid(dot(xf, p["wc"]) + p["bc"])
    h1 = jnp.maximum(dot(xf, p["w1x"]) + conf * p["w1c"] + p["b1"], 0.0).astype(bf)
    layer2 = jnp.maximum(dot(h1, p["w2"]) + p["b2"], 0.0).astype(bf)

    idx1 = farthest_point_sampling(x, n // 2)
    xyz1 = gather_points(x, idx1).astype(jnp.float32)
    feat1 = gather_points(layer2, idx1)
    l3 = dot(feat1, p["wp1"]) + p["bp1"]
    h = jnp.maximum(dot(xyz1, p["w3x"]) + dot(l3.astype(bf), p["w3f"]) + p["b3"],
                    0.0).astype(bf)
    layer5 = jnp.maximum(dot(h, p["w4"]) + p["b4"], 0.0).astype(bf)

    idx2 = farthest_point_sampling(xyz1, n // 4)
    xyz2 = gather_points(xyz1, idx2)
    feat2 = gather_points(layer5, idx2)
    l6 = dot(feat2, p["wp2"]) + p["bp2"]
    layer7 = jnp.maximum(dot(xyz2, p["w5x"]) + dot(l6.astype(bf), p["w5f"]) + p["b5"],
                         0.0).astype(bf)

    idx3 = farthest_point_sampling(xyz2, n // 8)
    feat3 = gather_points(layer7, idx3)
    layer8 = jnp.maximum(dot(feat3, p["w6"]) + p["b6"], 0.0)
    output = jnp.max(layer8, axis=1)
    return output, conf


# ---------------------------------------------------------------------------
# Parameters (weights stored as (C_in, C_out), i.e. pre-transposed once)
# ---------------------------------------------------------------------------
_LAYER_DIMS = {
    "conf":   (3, 1),      # ConfidenceScorePredictor stand-in
    "mlp1":   (4, 64),
    "mlp2":   (64, 256),
    "pconv1": (256, 256),  # PointConvLayer = Conv1d(k=1) = per-point linear
    "mlp3":   (259, 256),
    "mlp4":   (256, 384),
    "pconv2": (384, 384),
    "mlp5":   (387, 384),
    "mlp6":   (384, 512),
}


def init_params(key):
    params = {}
    keys = jax.random.split(key, 2 * len(_LAYER_DIMS))
    for i, (name, (cin, cout)) in enumerate(_LAYER_DIMS.items()):
        scale = 1.0 / math.sqrt(cin)
        params[f"{name}_w"] = scale * jax.random.normal(
            keys[2 * i], (cin, cout), jnp.float32)
        params[f"{name}_b"] = scale * jax.random.normal(
            keys[2 * i + 1], (cout,), jnp.float32)
    return params


if __name__ == "__main__":
    key = jax.random.PRNGKey(0)
    k_x, k_p = jax.random.split(key)

    B, N = 2, 16                                  # small demo point cloud
    x = jax.random.normal(k_x, (B, N, 3), dtype=jnp.float32)
    params = init_params(k_p)

    fwd = jax.jit(noise_aware_feature_extractor)
    out, conf = fwd(params, x)
    jax.block_until_ready((out, conf))

    out_ref, conf_ref = jax.jit(noise_aware_feature_extractor_ref)(params, x)
    jax.block_until_ready((out_ref, conf_ref))

    assert out.shape == (B, 512)
    assert conf.shape == (B, N, 1)
    # bf16 activation chain (same casts in both paths) -> relaxed tolerance.
    assert jnp.allclose(conf, conf_ref, atol=2e-2, rtol=2e-2), "confidence mismatch"
    assert jnp.allclose(out, out_ref, atol=2e-2, rtol=2e-2), "feature mismatch"

    print("KERNEL_OK")
</pallas_src>

<mosaic_0001>
module attributes {stable_mosaic.version = 11 : i64} {
  func.func private @main(%arg0: i32) attributes {dimension_semantics = [#tpu.dimension_semantics<core_parallel>], iteration_bounds = array<i64: 2>, tpu.core_type = #tpu.core_type<sc_scalar_subcore>, window_params = []} {
    return
  }
}

module attributes {stable_mosaic.version = 11 : i64} {
  func.func private @main(%arg0: i32) attributes {dimension_semantics = [#tpu.dimension_semantics<core_parallel>], iteration_bounds = array<i64: 2>, tpu.core_type = #tpu.core_type<sc_scalar_subcore>, window_params = []} {
    return
  }
}

module attributes {stable_mosaic.version = 11 : i64} {
  func.func @_stage1_kernel(%arg0: i32, %arg1: memref<32x3xf32, #tpu.memory_space<vmem>>, %arg2: memref<3x1xf32, #tpu.memory_space<vmem>>, %arg3: memref<1x1xf32, #tpu.memory_space<vmem>>, %arg4: memref<3x64xf32, #tpu.memory_space<vmem>>, %arg5: memref<1x64xf32, #tpu.memory_space<vmem>>, %arg6: memref<1x64xf32, #tpu.memory_space<vmem>>, %arg7: memref<64x256xbf16, #tpu.memory_space<vmem>>, %arg8: memref<1x256xf32, #tpu.memory_space<vmem>>, %arg9: memref<32x1xf32, #tpu.memory_space<vmem>>, %arg10: memref<32x256xbf16, #tpu.memory_space<vmem>>) attributes {dimension_semantics = [#tpu.dimension_semantics<parallel>], iteration_bounds = array<i64: 1>, scalar_prefetch = 0 : i64, scratch_operands = 0 : i64, tpu.core_type = #tpu.core_type<tc>, window_params = [{transform_indices = @transform_0, window_bounds = array<i64: 32, 3>}, {pipeline_mode = #tpu.pipeline_mode<synchronous>, transform_indices = @transform_1, window_bounds = array<i64: 3, 1>}, {pipeline_mode = #tpu.pipeline_mode<synchronous>, transform_indices = @transform_2, window_bounds = array<i64: 1, 1>}, {pipeline_mode = #tpu.pipeline_mode<synchronous>, transform_indices = @transform_3, window_bounds = array<i64: 3, 64>}, {pipeline_mode = #tpu.pipeline_mode<synchronous>, transform_indices = @transform_4, window_bounds = array<i64: 1, 64>}, {pipeline_mode = #tpu.pipeline_mode<synchronous>, transform_indices = @transform_5, window_bounds = array<i64: 1, 64>}, {pipeline_mode = #tpu.pipeline_mode<synchronous>, transform_indices = @transform_6, window_bounds = array<i64: 64, 256>}, {pipeline_mode = #tpu.pipeline_mode<synchronous>, transform_indices = @transform_7, window_bounds = array<i64: 1, 256>}, {transform_indices = @transform_8, window_bounds = array<i64: 32, 1>}, {transform_indices = @transform_9, window_bounds = array<i64: 32, 256>}]} {
    %c0 = arith.constant 0 : index
    %c0_0 = arith.constant 0 : index
    %0 = vector.load %arg1[%c0, %c0_0] : memref<32x3xf32, #tpu.memory_space<vmem>>, vector<32x3xf32>
    %c0_1 = arith.constant 0 : index
    %c0_2 = arith.constant 0 : index
    %1 = vector.load %arg2[%c0_1, %c0_2] : memref<3x1xf32, #tpu.memory_space<vmem>>, vector<3x1xf32>
    %cst = arith.constant dense<0.000000e+00> : vector<32x1xf32>
    %2 = tpu.matmul %0, %1, %cst {dimension_numbers = #tpu.dot_dimension_numbers<[1], [0], [0], [1], [0, 0, 1, 1], [], []>} : vector<32x3xf32>, vector<3x1xf32>, vector<32x1xf32> -> vector<32x1xf32>
    %c0_3 = arith.constant 0 : index
    %c0_4 = arith.constant 0 : index
    %3 = vector.load %arg3[%c0_3, %c0_4] : memref<1x1xf32, #tpu.memory_space<vmem>>, vector<1x1xf32>
    %4 = vector.broadcast %3 : vector<1x1xf32> to vector<32x1xf32>
    %5 = arith.addf %2, %4 : vector<32x1xf32>
    %6 = arith.negf %5 : vector<32x1xf32>
    %7 = math.exp %6 : vector<32x1xf32>
    %cst_5 = arith.constant 1.000000e+00 : f32
    %8 = vector.broadcast %cst_5 : f32 to vector<32x1xf32>
    %9 = arith.addf %8, %7 : vector<32x1xf32>
    %10 = arith.divf %8, %9 : vector<32x1xf32>
    %c0_6 = arith.constant 0 : index
    %c0_7 = arith.constant 0 : index
    %11 = vector.load %arg9[%c0_6, %c0_7] : memref<32x1xf32, #tpu.memory_space<vmem>>, vector<32x1xf32>
    tpu.vector_store %arg9[%c0_6, %c0_7], %10 {strides = array<i32>} : memref<32x1xf32, #tpu.memory_space<vmem>>, vector<32x1xf32>,
    %c0_8 = arith.constant 0 : index
    %c0_9 = arith.constant 0 : index
    %12 = vector.load %arg4[%c0_8, %c0_9] : memref<3x64xf32, #tpu.memory_space<vmem>>, vector<3x64xf32>
    %cst_10 = arith.constant dense<0.000000e+00> : vector<32x64xf32>
    %13 = tpu.matmul %0, %12, %cst_10 {dimension_numbers = #tpu.dot_dimension_numbers<[1], [0], [0], [1], [0, 0, 1, 1], [], []>} : vector<32x3xf32>, vector<3x64xf32>, vector<32x64xf32> -> vector<32x64xf32>
    %c0_11 = arith.constant 0 : index
    %c0_12 = arith.constant 0 : index
    %14 = vector.load %arg5[%c0_11, %c0_12] : memref<1x64xf32, #tpu.memory_space<vmem>>, vector<1x64xf32>
    %15 = vector.broadcast %10 : vector<32x1xf32> to vector<32x64xf32>
    %16 = vector.broadcast %14 : vector<1x64xf32> to vector<32x64xf32>
    %17 = arith.mulf %15, %16 : vector<32x64xf32>
    %18 = arith.addf %13, %17 : vector<32x64xf32>
    %c0_13 = arith.constant 0 : index
    %c0_14 = arith.constant 0 : index
    %19 = vector.load %arg6[%c0_13, %c0_14] : memref<1x64xf32, #tpu.memory_space<vmem>>, vector<1x64xf32>
    %20 = vector.broadcast %19 : vector<1x64xf32> to vector<32x64xf32>
    %21 = arith.addf %18, %20 : vector<32x64xf32>
    %cst_15 = arith.constant 0.000000e+00 : f32
    %22 = vector.broadcast %cst_15 : f32 to vector<32x64xf32>
    %23 = arith.maximumf %21, %22 : vector<32x64xf32>
    %24 = arith.truncf %23 : vector<32x64xf32> to vector<32x64xbf16>
    %c0_16 = arith.constant 0 : index
    %c0_17 = arith.constant 0 : index
    %25 = vector.load %arg7[%c0_16, %c0_17] : memref<64x256xbf16, #tpu.memory_space<vmem>>, vector<64x256xbf16>
    %cst_18 = arith.constant dense<0.000000e+00> : vector<32x256xf32>
    %26 = tpu.matmul %24, %25, %cst_18 {dimension_numbers = #tpu.dot_dimension_numbers<[1], [0], [0], [1], [0, 0, 1, 1], [], []>} : vector<32x64xbf16>, vector<64x256xbf16>, vector<32x256xf32> -> vector<32x256xf32>
    %c0_19 = arith.constant 0 : index
    %c0_20 = arith.constant 0 : index
    %27 = vector.load %arg8[%c0_19, %c0_20] : memref<1x256xf32, #tpu.memory_space<vmem>>, vector<1x256xf32>
    %28 = vector.broadcast %27 : vector<1x256xf32> to vector<32x256xf32>
    %29 = arith.addf %26, %28 : vector<32x256xf32>
    %cst_21 = arith.constant 0.000000e+00 : f32
    %30 = vector.broadcast %cst_21 : f32 to vector<32x256xf32>
    %31 = arith.maximumf %29, %30 : vector<32x256xf32>
    %32 = arith.truncf %31 : vector<32x256xf32> to vector<32x256xbf16>
    %c0_22 = arith.constant 0 : index
    %c0_23 = arith.constant 0 : index
    %33 = vector.load %arg10[%c0_22, %c0_23] : memref<32x256xbf16, #tpu.memory_space<vmem>>, vector<32x256xbf16>
    tpu.vector_store %arg10[%c0_22, %c0_23], %32 {strides = array<i32>} : memref<32x256xbf16, #tpu.memory_space<vmem>>, vector<32x256xbf16>,
    return
  }
  func.func @transform_0(%arg0: i32) -> (i32, i32) {
    %c0_i32 = arith.constant 0 : i32
    %c0_i32_0 = arith.constant 0 : i32
    return %arg0, %c0_i32 : i32, i32
  }
  func.func @transform_1(%arg0: i32) -> (i32, i32) {
    %c0_i32 = arith.constant 0 : i32
    %c0_i32_0 = arith.constant 0 : i32
    %c0_i32_1 = arith.constant 0 : i32
    return %c0_i32, %c0_i32_0 : i32, i32
  }
  func.func @transform_2(%arg0: i32) -> (i32, i32) {
    %c0_i32 = arith.constant 0 : i32
    %c0_i32_0 = arith.constant 0 : i32
    %c0_i32_1 = arith.constant 0 : i32
    return %c0_i32, %c0_i32_0 : i32, i32
  }
  func.func @transform_3(%arg0: i32) -> (i32, i32) {
    %c0_i32 = arith.constant 0 : i32
    %c0_i32_0 = arith.constant 0 : i32
    %c0_i32_1 = arith.constant 0 : i32
    return %c0_i32, %c0_i32_0 : i32, i32
  }
  func.func @transform_4(%arg0: i32) -> (i32, i32) {
    %c0_i32 = arith.constant 0 : i32
    %c0_i32_0 = arith.constant 0 : i32
    %c0_i32_1 = arith.constant 0 : i32
    return %c0_i32, %c0_i32_0 : i32, i32
  }
  func.func @transform_5(%arg0: i32) -> (i32, i32) {
    %c0_i32 = arith.constant 0 : i32
    %c0_i32_0 = arith.constant 0 : i32
    %c0_i32_1 = arith.constant 0 : i32
    return %c0_i32, %c0_i32_0 : i32, i32
  }
  func.func @transform_6(%arg0: i32) -> (i32, i32) {
    %c0_i32 = arith.constant 0 : i32
    %c0_i32_0 = arith.constant 0 : i32
    %c0_i32_1 = arith.constant 0 : i32
    return %c0_i32, %c0_i32_0 : i32, i32
  }
  func.func @transform_7(%arg0: i32) -> (i32, i32) {
    %c0_i32 = arith.constant 0 : i32
    %c0_i32_0 = arith.constant 0 : i32
    %c0_i32_1 = arith.constant 0 : i32
    return %c0_i32, %c0_i32_0 : i32, i32
  }
  func.func @transform_8(%arg0: i32) -> (i32, i32) {
    %c0_i32 = arith.constant 0 : i32
    %c0_i32_0 = arith.constant 0 : i32
    return %arg0, %c0_i32 : i32, i32
  }
  func.func @transform_9(%arg0: i32) -> (i32, i32) {
    %c0_i32 = arith.constant 0 : i32
    %c0_i32_0 = arith.constant 0 : i32
    return %arg0, %c0_i32 : i32, i32
  }
}

module attributes {stable_mosaic.version = 11 : i64} {
  func.func @_stage2_kernel(%arg0: i32, %arg1: memref<16x3xf32, #tpu.memory_space<vmem>>, %arg2: memref<16x256xbf16, #tpu.memory_space<vmem>>, %arg3: memref<256x256xbf16, #tpu.memory_space<vmem>>, %arg4: memref<1x256xf32, #tpu.memory_space<vmem>>, %arg5: memref<3x256xf32, #tpu.memory_space<vmem>>, %arg6: memref<256x256xbf16, #tpu.memory_space<vmem>>, %arg7: memref<1x256xf32, #tpu.memory_space<vmem>>, %arg8: memref<256x384xbf16, #tpu.memory_space<vmem>>, %arg9: memref<1x384xf32, #tpu.memory_space<vmem>>, %arg10: memref<16x384xbf16, #tpu.memory_space<vmem>>) attributes {dimension_semantics = [#tpu.dimension_semantics<parallel>], iteration_bounds = array<i64: 1>, scalar_prefetch = 0 : i64, scratch_operands = 0 : i64, tpu.core_type = #tpu.core_type<tc>, window_params = [{transform_indices = @transform_0, window_bounds = array<i64: 16, 3>}, {transform_indices = @transform_1, window_bounds = array<i64: 16, 256>}, {pipeline_mode = #tpu.pipeline_mode<synchronous>, transform_indices = @transform_2, window_bounds = array<i64: 256, 256>}, {pipeline_mode = #tpu.pipeline_mode<synchronous>, transform_indices = @transform_3, window_bounds = array<i64: 1, 256>}, {pipeline_mode = #tpu.pipeline_mode<synchronous>, transform_indices = @transform_4, window_bounds = array<i64: 3, 256>}, {pipeline_mode = #tpu.pipeline_mode<synchronous>, transform_indices = @transform_5, window_bounds = array<i64: 256, 256>}, {pipeline_mode = #tpu.pipeline_mode<synchronous>, transform_indices = @transform_6, window_bounds = array<i64: 1, 256>}, {pipeline_mode = #tpu.pipeline_mode<synchronous>, transform_indices = @transform_7, window_bounds = array<i64: 256, 384>}, {pipeline_mode = #tpu.pipeline_mode<synchronous>, transform_indices = @transform_8, window_bounds = array<i64: 1, 384>}, {transform_indices = @transform_9, window_bounds = array<i64: 16, 384>}]} {
    %c0 = arith.constant 0 : index
    %c0_0 = arith.constant 0 : index
    %0 = vector.load %arg1[%c0, %c0_0] : memref<16x3xf32, #tpu.memory_space<vmem>>, vector<16x3xf32>
    %c0_1 = arith.constant 0 : index
    %c0_2 = arith.constant 0 : index
    %1 = vector.load %arg2[%c0_1, %c0_2] : memref<16x256xbf16, #tpu.memory_space<vmem>>, vector<16x256xbf16>
    %c0_3 = arith.constant 0 : index
    %c0_4 = arith.constant 0 : index
    %2 = vector.load %arg3[%c0_3, %c0_4] : memref<256x256xbf16, #tpu.memory_space<vmem>>, vector<256x256xbf16>
    %cst = arith.constant dense<0.000000e+00> : vector<16x256xf32>
    %3 = tpu.matmul %1, %2, %cst {dimension_numbers = #tpu.dot_dimension_numbers<[1], [0], [0], [1], [0, 0, 1, 1], [], []>} : vector<16x256xbf16>, vector<256x256xbf16>, vector<16x256xf32> -> vector<16x256xf32>
    %c0_5 = arith.constant 0 : index
    %c0_6 = arith.constant 0 : index
    %4 = vector.load %arg4[%c0_5, %c0_6] : memref<1x256xf32, #tpu.memory_space<vmem>>, vector<1x256xf32>
    %5 = vector.broadcast %4 : vector<1x256xf32> to vector<16x256xf32>
    %6 = arith.addf %3, %5 : vector<16x256xf32>
    %c0_7 = arith.constant 0 : index
    %c0_8 = arith.constant 0 : index
    %7 = vector.load %arg5[%c0_7, %c0_8] : memref<3x256xf32, #tpu.memory_space<vmem>>, vector<3x256xf32>
    %cst_9 = arith.constant dense<0.000000e+00> : vector<16x256xf32>
    %8 = tpu.matmul %0, %7, %cst_9 {dimension_numbers = #tpu.dot_dimension_numbers<[1], [0], [0], [1], [0, 0, 1, 1], [], []>} : vector<16x3xf32>, vector<3x256xf32>, vector<16x256xf32> -> vector<16x256xf32>
    %9 = arith.truncf %6 : vector<16x256xf32> to vector<16x256xbf16>
    %c0_10 = arith.constant 0 : index
    %c0_11 = arith.constant 0 : index
    %10 = vector.load %arg6[%c0_10, %c0_11] : memref<256x256xbf16, #tpu.memory_space<vmem>>, vector<256x256xbf16>
    %cst_12 = arith.constant dense<0.000000e+00> : vector<16x256xf32>
    %11 = tpu.matmul %9, %10, %cst_12 {dimension_numbers = #tpu.dot_dimension_numbers<[1], [0], [0], [1], [0, 0, 1, 1], [], []>} : vector<16x256xbf16>, vector<256x256xbf16>, vector<16x256xf32> -> vector<16x256xf32>
    %12 = arith.addf %8, %11 : vector<16x256xf32>
    %c0_13 = arith.constant 0 : index
    %c0_14 = arith.constant 0 : index
    %13 = vector.load %arg7[%c0_13, %c0_14] : memref<1x256xf32, #tpu.memory_space<vmem>>, vector<1x256xf32>
    %14 = vector.broadcast %13 : vector<1x256xf32> to vector<16x256xf32>
    %15 = arith.addf %12, %14 : vector<16x256xf32>
    %cst_15 = arith.constant 0.000000e+00 : f32
    %16 = vector.broadcast %cst_15 : f32 to vector<16x256xf32>
    %17 = arith.maximumf %15, %16 : vector<16x256xf32>
    %18 = arith.truncf %17 : vector<16x256xf32> to vector<16x256xbf16>
    %c0_16 = arith.constant 0 : index
    %c0_17 = arith.constant 0 : index
    %19 = vector.load %arg8[%c0_16, %c0_17] : memref<256x384xbf16, #tpu.memory_space<vmem>>, vector<256x384xbf16>
    %cst_18 = arith.constant dense<0.000000e+00> : vector<16x384xf32>
    %20 = tpu.matmul %18, %19, %cst_18 {dimension_numbers = #tpu.dot_dimension_numbers<[1], [0], [0], [1], [0, 0, 1, 1], [], []>} : vector<16x256xbf16>, vector<256x384xbf16>, vector<16x384xf32> -> vector<16x384xf32>
    %c0_19 = arith.constant 0 : index
    %c0_20 = arith.constant 0 : index
    %21 = vector.load %arg9[%c0_19, %c0_20] : memref<1x384xf32, #tpu.memory_space<vmem>>, vector<1x384xf32>
    %22 = vector.broadcast %21 : vector<1x384xf32> to vector<16x384xf32>
    %23 = arith.addf %20, %22 : vector<16x384xf32>
    %cst_21 = arith.constant 0.000000e+00 : f32
    %24 = vector.broadcast %cst_21 : f32 to vector<16x384xf32>
    %25 = arith.maximumf %23, %24 : vector<16x384xf32>
    %26 = arith.truncf %25 : vector<16x384xf32> to vector<16x384xbf16>
    %c0_22 = arith.constant 0 : index
    %c0_23 = arith.constant 0 : index
    %27 = vector.load %arg10[%c0_22, %c0_23] : memref<16x384xbf16, #tpu.memory_space<vmem>>, vector<16x384xbf16>
    tpu.vector_store %arg10[%c0_22, %c0_23], %26 {strides = array<i32>} : memref<16x384xbf16, #tpu.memory_space<vmem>>, vector<16x384xbf16>,
    return
  }
  func.func @transform_0(%arg0: i32) -> (i32, i32) {
    %c0_i32 = arith.constant 0 : i32
    %c0_i32_0 = arith.constant 0 : i32
    return %arg0, %c0_i32 : i32, i32
  }
  func.func @transform_1(%arg0: i32) -> (i32, i32) {
    %c0_i32 = arith.constant 0 : i32
    %c0_i32_0 = arith.constant 0 : i32
    return %arg0, %c0_i32 : i32, i32
  }
  func.func @transform_2(%arg0: i32) -> (i32, i32) {
    %c0_i32 = arith.constant 0 : i32
    %c0_i32_0 = arith.constant 0 : i32
    %c0_i32_1 = arith.constant 0 : i32
    return %c0_i32, %c0_i32_0 : i32, i32
  }
  func.func @transform_3(%arg0: i32) -> (i32, i32) {
    %c0_i32 = arith.constant 0 : i32
    %c0_i32_0 = arith.constant 0 : i32
    %c0_i32_1 = arith.constant 0 : i32
    return %c0_i32, %c0_i32_0 : i32, i32
  }
  func.func @transform_4(%arg0: i32) -> (i32, i32) {
    %c0_i32 = arith.constant 0 : i32
    %c0_i32_0 = arith.constant 0 : i32
    %c0_i32_1 = arith.constant 0 : i32
    return %c0_i32, %c0_i32_0 : i32, i32
  }
  func.func @transform_5(%arg0: i32) -> (i32, i32) {
    %c0_i32 = arith.constant 0 : i32
    %c0_i32_0 = arith.constant 0 : i32
    %c0_i32_1 = arith.constant 0 : i32
    return %c0_i32, %c0_i32_0 : i32, i32
  }
  func.func @transform_6(%arg0: i32) -> (i32, i32) {
    %c0_i32 = arith.constant 0 : i32
    %c0_i32_0 = arith.constant 0 : i32
    %c0_i32_1 = arith.constant 0 : i32
    return %c0_i32, %c0_i32_0 : i32, i32
  }
  func.func @transform_7(%arg0: i32) -> (i32, i32) {
    %c0_i32 = arith.constant 0 : i32
    %c0_i32_0 = arith.constant 0 : i32
    %c0_i32_1 = arith.constant 0 : i32
    return %c0_i32, %c0_i32_0 : i32, i32
  }
  func.func @transform_8(%arg0: i32) -> (i32, i32) {
    %c0_i32 = arith.constant 0 : i32
    %c0_i32_0 = arith.constant 0 : i32
    %c0_i32_1 = arith.constant 0 : i32
    return %c0_i32, %c0_i32_0 : i32, i32
  }
  func.func @transform_9(%arg0: i32) -> (i32, i32) {
    %c0_i32 = arith.constant 0 : i32
    %c0_i32_0 = arith.constant 0 : i32
    return %arg0, %c0_i32 : i32, i32
  }
}

module attributes {stable_mosaic.version = 11 : i64} {
  func.func @_stage3_kernel(%arg0: i32, %arg1: memref<8x3xf32, #tpu.memory_space<vmem>>, %arg2: memref<8x384xbf16, #tpu.memory_space<vmem>>, %arg3: memref<384x384xbf16, #tpu.memory_space<vmem>>, %arg4: memref<1x384xf32, #tpu.memory_space<vmem>>, %arg5: memref<3x384xf32, #tpu.memory_space<vmem>>, %arg6: memref<384x384xbf16, #tpu.memory_space<vmem>>, %arg7: memref<1x384xf32, #tpu.memory_space<vmem>>, %arg8: memref<8x384xbf16, #tpu.memory_space<vmem>>) attributes {dimension_semantics = [#tpu.dimension_semantics<parallel>], iteration_bounds = array<i64: 1>, scalar_prefetch = 0 : i64, scratch_operands = 0 : i64, tpu.core_type = #tpu.core_type<tc>, window_params = [{transform_indices = @transform_0, window_bounds = array<i64: 8, 3>}, {transform_indices = @transform_1, window_bounds = array<i64: 8, 384>}, {pipeline_mode = #tpu.pipeline_mode<synchronous>, transform_indices = @transform_2, window_bounds = array<i64: 384, 384>}, {pipeline_mode = #tpu.pipeline_mode<synchronous>, transform_indices = @transform_3, window_bounds = array<i64: 1, 384>}, {pipeline_mode = #tpu.pipeline_mode<synchronous>, transform_indices = @transform_4, window_bounds = array<i64: 3, 384>}, {pipeline_mode = #tpu.pipeline_mode<synchronous>, transform_indices = @transform_5, window_bounds = array<i64: 384, 384>}, {pipeline_mode = #tpu.pipeline_mode<synchronous>, transform_indices = @transform_6, window_bounds = array<i64: 1, 384>}, {transform_indices = @transform_7, window_bounds = array<i64: 8, 384>}]} {
    %c0 = arith.constant 0 : index
    %c0_0 = arith.constant 0 : index
    %0 = vector.load %arg1[%c0, %c0_0] : memref<8x3xf32, #tpu.memory_space<vmem>>, vector<8x3xf32>
    %c0_1 = arith.constant 0 : index
    %c0_2 = arith.constant 0 : index
    %1 = vector.load %arg2[%c0_1, %c0_2] : memref<8x384xbf16, #tpu.memory_space<vmem>>, vector<8x384xbf16>
    %c0_3 = arith.constant 0 : index
    %c0_4 = arith.constant 0 : index
    %2 = vector.load %arg3[%c0_3, %c0_4] : memref<384x384xbf16, #tpu.memory_space<vmem>>, vector<384x384xbf16>
    %cst = arith.constant dense<0.000000e+00> : vector<8x384xf32>
    %3 = tpu.matmul %1, %2, %cst {dimension_numbers = #tpu.dot_dimension_numbers<[1], [0], [0], [1], [0, 0, 1, 1], [], []>} : vector<8x384xbf16>, vector<384x384xbf16>, vector<8x384xf32> -> vector<8x384xf32>
    %c0_5 = arith.constant 0 : index
    %c0_6 = arith.constant 0 : index
    %4 = vector.load %arg4[%c0_5, %c0_6] : memref<1x384xf32, #tpu.memory_space<vmem>>, vector<1x384xf32>
    %5 = vector.broadcast %4 : vector<1x384xf32> to vector<8x384xf32>
    %6 = arith.addf %3, %5 : vector<8x384xf32>
    %c0_7 = arith.constant 0 : index
    %c0_8 = arith.constant 0 : index
    %7 = vector.load %arg5[%c0_7, %c0_8] : memref<3x384xf32, #tpu.memory_space<vmem>>, vector<3x384xf32>
    %cst_9 = arith.constant dense<0.000000e+00> : vector<8x384xf32>
    %8 = tpu.matmul %0, %7, %cst_9 {dimension_numbers = #tpu.dot_dimension_numbers<[1], [0], [0], [1], [0, 0, 1, 1], [], []>} : vector<8x3xf32>, vector<3x384xf32>, vector<8x384xf32> -> vector<8x384xf32>
    %9 = arith.truncf %6 : vector<8x384xf32> to vector<8x384xbf16>
    %c0_10 = arith.constant 0 : index
    %c0_11 = arith.constant 0 : index
    %10 = vector.load %arg6[%c0_10, %c0_11] : memref<384x384xbf16, #tpu.memory_space<vmem>>, vector<384x384xbf16>
    %cst_12 = arith.constant dense<0.000000e+00> : vector<8x384xf32>
    %11 = tpu.matmul %9, %10, %cst_12 {dimension_numbers = #tpu.dot_dimension_numbers<[1], [0], [0], [1], [0, 0, 1, 1], [], []>} : vector<8x384xbf16>, vector<384x384xbf16>, vector<8x384xf32> -> vector<8x384xf32>
    %12 = arith.addf %8, %11 : vector<8x384xf32>
    %c0_13 = arith.constant 0 : index
    %c0_14 = arith.constant 0 : index
    %13 = vector.load %arg7[%c0_13, %c0_14] : memref<1x384xf32, #tpu.memory_space<vmem>>, vector<1x384xf32>
    %14 = vector.broadcast %13 : vector<1x384xf32> to vector<8x384xf32>
    %15 = arith.addf %12, %14 : vector<8x384xf32>
    %cst_15 = arith.constant 0.000000e+00 : f32
    %16 = vector.broadcast %cst_15 : f32 to vector<8x384xf32>
    %17 = arith.maximumf %15, %16 : vector<8x384xf32>
    %18 = arith.truncf %17 : vector<8x384xf32> to vector<8x384xbf16>
    %c0_16 = arith.constant 0 : index
    %c0_17 = arith.constant 0 : index
    %19 = vector.load %arg8[%c0_16, %c0_17] : memref<8x384xbf16, #tpu.memory_space<vmem>>, vector<8x384xbf16>
    tpu.vector_store %arg8[%c0_16, %c0_17], %18 {strides = array<i32>} : memref<8x384xbf16, #tpu.memory_space<vmem>>, vector<8x384xbf16>,
    return
  }
  func.func @transform_0(%arg0: i32) -> (i32, i32) {
    %c0_i32 = arith.constant 0 : i32
    %c0_i32_0 = arith.constant 0 : i32
    return %arg0, %c0_i32 : i32, i32
  }
  func.func @transform_1(%arg0: i32) -> (i32, i32) {
    %c0_i32 = arith.constant 0 : i32
    %c0_i32_0 = arith.constant 0 : i32
    return %arg0, %c0_i32 : i32, i32
  }
  func.func @transform_2(%arg0: i32) -> (i32, i32) {
    %c0_i32 = arith.constant 0 : i32
    %c0_i32_0 = arith.constant 0 : i32
    %c0_i32_1 = arith.constant 0 : i32
    return %c0_i32, %c0_i32_0 : i32, i32
  }
  func.func @transform_3(%arg0: i32) -> (i32, i32) {
    %c0_i32 = arith.constant 0 : i32
    %c0_i32_0 = arith.constant 0 : i32
    %c0_i32_1 = arith.constant 0 : i32
    return %c0_i32, %c0_i32_0 : i32, i32
  }
  func.func @transform_4(%arg0: i32) -> (i32, i32) {
    %c0_i32 = arith.constant 0 : i32
    %c0_i32_0 = arith.constant 0 : i32
    %c0_i32_1 = arith.constant 0 : i32
    return %c0_i32, %c0_i32_0 : i32, i32
  }
  func.func @transform_5(%arg0: i32) -> (i32, i32) {
    %c0_i32 = arith.constant 0 : i32
    %c0_i32_0 = arith.constant 0 : i32
    %c0_i32_1 = arith.constant 0 : i32
    return %c0_i32, %c0_i32_0 : i32, i32
  }
  func.func @transform_6(%arg0: i32) -> (i32, i32) {
    %c0_i32 = arith.constant 0 : i32
    %c0_i32_0 = arith.constant 0 : i32
    %c0_i32_1 = arith.constant 0 : i32
    return %c0_i32, %c0_i32_0 : i32, i32
  }
  func.func @transform_7(%arg0: i32) -> (i32, i32) {
    %c0_i32 = arith.constant 0 : i32
    %c0_i32_0 = arith.constant 0 : i32
    return %arg0, %c0_i32 : i32, i32
  }
}

module attributes {stable_mosaic.version = 11 : i64} {
  func.func @_stage4_kernel(%arg0: i32, %arg1: i32, %arg2: memref<1x2x384xbf16, #tpu.memory_space<vmem>>, %arg3: memref<384x512xbf16, #tpu.memory_space<vmem>>, %arg4: memref<1x512xf32, #tpu.memory_space<vmem>>, %arg5: memref<1x1x512xf32, #tpu.memory_space<vmem>>, %arg6: memref<1x512xf32, #tpu.memory_space<vmem>>) attributes {dimension_semantics = [#tpu.dimension_semantics<parallel>, #tpu.dimension_semantics<arbitrary>], iteration_bounds = array<i64: 2, 1>, scalar_prefetch = 0 : i64, scratch_operands = 1 : i64, tpu.core_type = #tpu.core_type<tc>, window_params = [{transform_indices = @transform_0, window_bounds = array<i64: 1, 2, 384>}, {pipeline_mode = #tpu.pipeline_mode<synchronous>, transform_indices = @transform_1, window_bounds = array<i64: 384, 512>}, {pipeline_mode = #tpu.pipeline_mode<synchronous>, transform_indices = @transform_2, window_bounds = array<i64: 1, 512>}, {transform_indices = @transform_3, window_bounds = array<i64: 1, 1, 512>}]} {
    %c0_i32 = arith.constant 0 : i32
    %0 = arith.cmpi eq, %arg1, %c0_i32 : i32
    %1 = arith.extui %0 : i1 to i32
    %c0_i32_0 = arith.constant 0 : i32
    %2 = arith.cmpi ne, %1, %c0_i32_0 : i32
    scf.if %2 {
      %cst_15 = arith.constant 0.000000e+00 : f32
      %20 = vector.broadcast %cst_15 : f32 to vector<1x512xf32>
      %c0_16 = arith.constant 0 : index
      %c0_17 = arith.constant 0 : index
      %21 = vector.load %arg6[%c0_16, %c0_17] : memref<1x512xf32, #tpu.memory_space<vmem>>, vector<1x512xf32>
      tpu.vector_store %arg6[%c0_16, %c0_17], %20 {strides = array<i32>} : memref<1x512xf32, #tpu.memory_space<vmem>>, vector<1x512xf32>,
    } else {
    }
    %c0 = arith.constant 0 : index
    %c0_1 = arith.constant 0 : index
    %c0_2 = arith.constant 0 : index
    %3 = vector.load %arg2[%c0, %c0_1, %c0_2] : memref<1x2x384xbf16, #tpu.memory_space<vmem>>, vector<1x2x384xbf16>
    %4 = vector.shape_cast %3 : vector<1x2x384xbf16> to vector<2x384xbf16>
    %c0_3 = arith.constant 0 : index
    %c0_4 = arith.constant 0 : index
    %5 = vector.load %arg3[%c0_3, %c0_4] : memref<384x512xbf16, #tpu.memory_space<vmem>>, vector<384x512xbf16>
    %cst = arith.constant dense<0.000000e+00> : vector<2x512xf32>
    %6 = tpu.matmul %4, %5, %cst {dimension_numbers = #tpu.dot_dimension_numbers<[1], [0], [0], [1], [0, 0, 1, 1], [], []>} : vector<2x384xbf16>, vector<384x512xbf16>, vector<2x512xf32> -> vector<2x512xf32>
    %c0_5 = arith.constant 0 : index
    %c0_6 = arith.constant 0 : index
    %7 = vector.load %arg4[%c0_5, %c0_6] : memref<1x512xf32, #tpu.memory_space<vmem>>, vector<1x512xf32>
    %8 = vector.broadcast %7 : vector<1x512xf32> to vector<2x512xf32>
    %9 = arith.addf %6, %8 : vector<2x512xf32>
    %cst_7 = arith.constant 0.000000e+00 : f32
    %10 = vector.broadcast %cst_7 : f32 to vector<2x512xf32>
    %11 = arith.maximumf %9, %10 : vector<2x512xf32>
    %c0_8 = arith.constant 0 : index
    %c0_9 = arith.constant 0 : index
    %12 = vector.load %arg6[%c0_8, %c0_9] : memref<1x512xf32, #tpu.memory_space<vmem>>, vector<1x512xf32>
    %cst_10 = arith.constant dense<0xFF800000> : vector<512xf32>
    %13 = vector.multi_reduction <maximumf>, %11, %cst_10 [0] : vector<2x512xf32> to vector<512xf32>
    %14 = vector.shape_cast %13 : vector<512xf32> to vector<1x512xf32>
    %15 = arith.maximumf %12, %14 : vector<1x512xf32>
    %c0_11 = arith.constant 0 : index
    %c0_12 = arith.constant 0 : index
    %16 = vector.load %arg6[%c0_11, %c0_12] : memref<1x512xf32, #tpu.memory_space<vmem>>, vector<1x512xf32>
    tpu.vector_store %arg6[%c0_11, %c0_12], %15 {strides = array<i32>} : memref<1x512xf32, #tpu.memory_space<vmem>>, vector<1x512xf32>,
    %c0_i32_13 = arith.constant 0 : i32
    %17 = arith.cmpi eq, %arg1, %c0_i32_13 : i32
    %18 = arith.extui %17 : i1 to i32
    %c0_i32_14 = arith.constant 0 : i32
    %19 = arith.cmpi ne, %18, %c0_i32_14 : i32
    scf.if %19 {
      %c0_15 = arith.constant 0 : index
      %c0_16 = arith.constant 0 : index
      %20 = vector.load %arg6[%c0_15, %c0_16] : memref<1x512xf32, #tpu.memory_space<vmem>>, vector<1x512xf32>
      %c0_17 = arith.constant 0 : index
      %c0_18 = arith.constant 0 : index
      %c0_19 = arith.constant 0 : index
      %21 = vector.load %arg5[%c0_17, %c0_18, %c0_19] : memref<1x1x512xf32, #tpu.memory_space<vmem>>, vector<1x1x512xf32>
      %22 = vector.shape_cast %21 : vector<1x1x512xf32> to vector<1x512xf32>
      %23 = vector.shape_cast %20 : vector<1x512xf32> to vector<1x1x512xf32>
      tpu.vector_store %arg5[%c0_17, %c0_18, %c0_19], %23 {strides = array<i32>} : memref<1x1x512xf32, #tpu.memory_space<vmem>>, vector<1x1x512xf32>,
    } else {
    }
    return
  }
  func.func @transform_0(%arg0: i32, %arg1: i32) -> (i32, i32, i32) {
    %c0_i32 = arith.constant 0 : i32
    %c0_i32_0 = arith.constant 0 : i32
    return %arg0, %arg1, %c0_i32 : i32, i32, i32
  }
  func.func @transform_1(%arg0: i32, %arg1: i32) -> (i32, i32) {
    %c0_i32 = arith.constant 0 : i32
    %c0_i32_0 = arith.constant 0 : i32
    %c0_i32_1 = arith.constant 0 : i32
    return %c0_i32, %c0_i32_0 : i32, i32
  }
  func.func @transform_2(%arg0: i32, %arg1: i32) -> (i32, i32) {
    %c0_i32 = arith.constant 0 : i32
    %c0_i32_0 = arith.constant 0 : i32
    %c0_i32_1 = arith.constant 0 : i32
    return %c0_i32, %c0_i32_0 : i32, i32
  }
  func.func @transform_3(%arg0: i32, %arg1: i32) -> (i32, i32, i32) {
    %c0_i32 = arith.constant 0 : i32
    %c0_i32_0 = arith.constant 0 : i32
    %c0_i32_1 = arith.constant 0 : i32
    return %arg0, %c0_i32, %c0_i32_0 : i32, i32, i32
  }
}

</mosaic_0001>

<llo_original>
// kernel: custom-call.16
$region0: #{custom-call.16}
  %s0 = inlined_call_operand.vmem [shape: f32[2,16], index: 0, kind: output, shape index: {}]

// kernel: custom-call.18
$region0: #{custom-call.18}
  %s0 = inlined_call_operand.vmem [shape: f32[2,4], index: 0, kind: output, shape index: {}]

// kernel: custom-call.17
$region0: #{custom-call.17}
  %s0 = inlined_call_operand.vmem [shape: f32[2,8], index: 0, kind: output, shape index: {}]

// kernel: noise_aware_feature_extractor.4
$region0: #{noise_aware_feature_extractor.4}
  #allocation0 [shape = 'u32[]', space=smem, size = 0x4, offset = 0x4, fixed_abs, tag = 'smem constant byte address 0x4 - core index']
  #allocation1 [shape = 'u32[144,128]{1,0:T(1,128)}', space=vmem, size = 0x12000, scoped, tag = 'internal scratch']
  #allocation2 [shape = 'f32[1,1]{1,0:T(1,128)S(1)}', space=vmem, size = 0x200, scoped, tag = 'scoped memory for noise_aware_feature_extractor.4']
  %s0 = inlined_call_operand.vmem [shape: f32[32,3], index: 0, kind: input, shape index: {}]
  %s1 = inlined_call_operand.vmem [shape: f32[3,1], index: 1, kind: input, shape index: {}]
  %s2 = inlined_call_operand.<no memory space> [shape: f32[1,1], index: 2, kind: input, shape index: {}]
  %s3 = inlined_call_operand.vmem [shape: f32[3,64], index: 3, kind: input, shape index: {}]
  %s4 = inlined_call_operand.vmem [shape: f32[1,64], index: 4, kind: input, shape index: {}]
  %s5 = inlined_call_operand.hbm [shape: f32[1,64], index: 5, kind: input, shape index: {}]
  %s6 = inlined_call_operand.vmem [shape: bf16[64,256], index: 6, kind: input, shape index: {}]
  %s7 = inlined_call_operand.hbm [shape: f32[1,256], index: 7, kind: input, shape index: {}]
  %s8 = inlined_call_operand.vmem [shape: f32[32,1], index: 8, kind: output, shape index: {0}]
  %s9 = inlined_call_operand.hbm [shape: bf16[32,256], index: 9, kind: output, shape index: {1}]
  %10 = xla_tuple %s8, %s9
  %s11 = sld [smem:[#allocation0]]
  $region58: #{noise_aware_feature_extractor.4} parent=0
    _
  %s13 = ssub.s32 1, %s11
  %s14 = scalar_select 0, %s13, %s11
  %v15 = vstv %s2
  %16 = vst [vmem:[#allocation2] sm:$0x1] %v15
  $region1: #{noise_aware_feature_extractor.4} parent=0
    #allocation3 [shape = 'u8[512]{0}', space=vmem, size = 0x400, scoped, tag = 'input window, operand 5, single buffered']
    #allocation4 [shape = 's32[1]{0}', space=sflag, size = 0x4, scoped, tag = 'scoped memory for noise_aware_feature_extractor.4']
    #allocation5 [shape = 's32[1]{0}', space=sflag, size = 0x4, scoped, tag = 'scoped memory for noise_aware_feature_extractor.4']
    #allocation6 [shape = 'u8[1024]{0}', space=vmem, size = 0x400, scoped, tag = 'input window, operand 7, single buffered']
    #allocation7 [shape = 's32[1]{0}', space=sflag, size = 0x4, scoped, tag = 'scoped memory for noise_aware_feature_extractor.4']
    #allocation8 [shape = 'u8[16384]{0}', space=vmem, size = 0x4000, scoped, tag = 'output window, operand 1, single buffered']
    %17 = vsyncpa [#allocation4], 0
    %18 = vsyncpa [#allocation7], 0
    %19 = vsyncpa [#allocation5], 0
    // Predicated region
    $region2: #{noise_aware_feature_extractor.4} parent=1 // pred_check
      _
    $region3: #{noise_aware_feature_extractor.4} parent=1 // pred_check_branch
      %21 = sbr.rel (0) target = $region5
    $region4: #{noise_aware_feature_extractor.4} parent=1 // pred_region
      _
    $region5: #{noise_aware_feature_extractor.4} parent=1 // pred_fallthru
      _
    // Predicated region
    $region6: #{noise_aware_feature_extractor.4} parent=1 // pred_check
      _
    $region7: #{noise_aware_feature_extractor.4} parent=1 // pred_check_branch
      %23 = sbr.rel (0) target = $region9
    $region8: #{noise_aware_feature_extractor.4} parent=1 // pred_region
      _
    $region9: #{noise_aware_feature_extractor.4} parent=1 // pred_fallthru
      _
    // Predicated region
    $region10: #{noise_aware_feature_extractor.4} parent=1 // pred_check
      _
    $region11: #{noise_aware_feature_extractor.4} parent=1 // pred_check_branch
      %25 = sbr.rel (0) target = $region13
    $region12: #{noise_aware_feature_extractor.4} parent=1 // pred_region
      _
    $region13: #{noise_aware_feature_extractor.4} parent=1 // pred_fallthru
      _
    // Predicated region
    $region14: #{noise_aware_feature_extractor.4} parent=1 // pred_check
      _
    $region15: #{noise_aware_feature_extractor.4} parent=1 // pred_check_branch
      %27 = sbr.rel (0) target = $region17
    $region16: #{noise_aware_feature_extractor.4} parent=1 // pred_region
      _
    $region17: #{noise_aware_feature_extractor.4} parent=1 // pred_fallthru
      _
    // Predicated region
    $region18: #{noise_aware_feature_extractor.4} parent=1 // pred_check
      _
    $region19: #{noise_aware_feature_extractor.4} parent=1 // pred_check_branch
      %29 = sbr.rel (0) target = $region21
    $region20: #{noise_aware_feature_extractor.4} parent=1 // pred_region
      _
    $region21: #{noise_aware_feature_extractor.4} parent=1 // pred_fallthru
      _
    // Predicated region
    $region22: #{noise_aware_feature_extractor.4} parent=1 // pred_check
      _
    $region23: #{noise_aware_feature_extractor.4} parent=1 // pred_check_branch
      %31 = sbr.rel (0) target = $region25
    $region24: #{noise_aware_feature_extractor.4} parent=1 // pred_region
      %s33 = ssub.s32 16, 16
      %34 = vsyncadd [#allocation4], %s33
      %s36 = sshll.u32 [#allocation3], 4
      %s37 = int_to_ptr.vmem [resolvable:$true] %s36
      %39 = dma.hbm_to_vmem [thread:$0]  %s5, 16, %s37, [#allocation4]
    $region25: #{noise_aware_feature_extractor.4} parent=1 // pred_fallthru
      _
    // Predicated region
    $region26: #{noise_aware_feature_extractor.4} parent=1 // pred_check
      _
    $region27: #{noise_aware_feature_extractor.4} parent=1 // pred_check_branch
      %41 = sbr.rel (0) target = $region29
    $region28: #{noise_aware_feature_extractor.4} parent=1 // pred_region
      _
    $region29: #{noise_aware_feature_extractor.4} parent=1 // pred_fallthru
      _
    // Predicated region
    $region30: #{noise_aware_feature_extractor.4} parent=1 // pred_check
      _
    $region31: #{noise_aware_feature_extractor.4} parent=1 // pred_check_branch
      %43 = sbr.rel (0) target = $region33
    $region32: #{noise_aware_feature_extractor.4} parent=1 // pred_region
      %s45 = ssub.s32 32, 32
      %46 = vsyncadd [#allocation7], %s45
      %s48 = sshll.u32 [#allocation6], 4
      %s49 = int_to_ptr.vmem [resolvable:$true] %s48
      %51 = dma.hbm_to_vmem [thread:$0]  %s7, 32, %s49, [#allocation7]
    $region33: #{noise_aware_feature_extractor.4} parent=1 // pred_fallthru
      _
    // Predicated region
    $region34: #{noise_aware_feature_extractor.4} parent=1 // pred_check
      _
    $region35: #{noise_aware_feature_extractor.4} parent=1 // pred_check_branch
      %53 = sbr.rel (0) target = $region37
    $region36: #{noise_aware_feature_extractor.4} parent=1 // pred_region
      %54 = dma.done [#allocation4], 16
    $region37: #{noise_aware_feature_extractor.4} parent=1 // pred_fallthru
      _
    // Predicated region
    $region38: #{noise_aware_feature_extractor.4} parent=1 // pred_check
      _
    $region39: #{noise_aware_feature_extractor.4} parent=1 // pred_check_branch
      %56 = sbr.rel (0) target = $region41
    $region40: #{noise_aware_feature_extractor.4} parent=1 // pred_region
      %57 = dma.done [#allocation7], 32
    $region41: #{noise_aware_feature_extractor.4} parent=1 // pred_fallthru
      _
    %v59 = vld [vmem:[%s0] sm:$0xff]
    %v60 = vld [vmem:[%s0 + $0x8] sm:$0xff]
    %v61 = vld [vmem:[%s0 + $0x10] sm:$0xff]
    %v62 = vld [vmem:[%s0 + $0x18] sm:$0xff]
    %v63 = vld [vmem:[%s1] sm:$0x7]
    %v64 = vld [vmem:[#allocation2] sm:$0x1]
    %v66 = vlaneseq
    %v67 = vshrl.u32 %v66, 7
    %v68 = vsub.s32 0, %v67
    %v69 = vrot.slane %v64, %v68
    %vm71 = vcmask 23552
    %v73 = vsel %vm71, %v59, 0
    %v76 = vsel %vm71, %v60, 0
    %v79 = vsel %vm71, %v61, 0
    %v82 = vsel %vm71, %v62, 0
    %vm84 = vcmask 1042432
    %v86 = vsel %vm84, %v63, 0
    %88 = vmatprep.subr.mxu0 0.0
    %89 = vmatpush1.msra.mxu0 %v86
    %90 = vmatprep.subr.mxu0 0.0
    %91 = vmatpush1.msra.mxu0 0.0
    %92 = vmatprep.subr.mxu0 0.0
    %93 = vmatpush1.msra.mxu0 0.0
    %94 = vmatprep.subr.mxu0 0.0
    %95 = vmatpush1.msra.mxu0 0.0
    %96 = vmatprep.subr.mxu0 0.0
    %97 = vmatpush1.msra.mxu0 0.0
    %98 = vmatprep.subr.mxu0 0.0
    %99 = vmatpush1.msra.mxu0 0.0
    %100 = vmatprep.subr.mxu0 0.0
    %101 = vmatpush1.msra.mxu0 0.0
    %102 = vmatprep.subr.mxu0 0.0
    %103 = vmatpush1.msra.mxu0 0.0
    %104 = vmatprep.subr.mxu0 0.0
    %105 = vmatpush1.msra.mxu0 0.0
    %106 = vmatprep.subr.mxu0 0.0
    %107 = vmatpush1.msra.mxu0 0.0
    %108 = vmatprep.subr.mxu0 0.0
    %109 = vmatpush1.msra.mxu0 0.0
    %110 = vmatprep.subr.mxu0 0.0
    %111 = vmatpush1.msra.mxu0 0.0
    %112 = vmatprep.subr.mxu0 0.0
    %113 = vmatpush1.msra.mxu0 0.0
    %114 = vmatprep.subr.mxu0 0.0
    %115 = vmatpush1.msra.mxu0 0.0
    %116 = vmatprep.subr.mxu0 0.0
    %117 = vmatpush1.msra.mxu0 0.0
    %118 = vmatprep.subr.mxu0 0.0
    %119 = vmatpush1.msra.mxu0 0.0
    %120 = vmatprep.subr.mxu0 0.0
    %121 = vmatpush1.msra.mxu0 0.0
    %122 = vmatprep.subr.mxu0 0.0
    %123 = vmatpush1.msra.mxu0 0.0
    %124 = vmatprep.subr.mxu0 0.0
    %125 = vmatpush1.msra.mxu0 0.0
    %126 = vmatprep.subr.mxu0 0.0
    %127 = vmatpush1.msra.mxu0 0.0
    %128 = vmatprep.subr.mxu0 0.0
    %129 = vmatpush1.msra.mxu0 0.0
    %130 = vmatprep.subr.mxu0 0.0
    %131 = vmatpush1.msra.mxu0 0.0
    %132 = vmatprep.subr.mxu0 0.0
    %133 = vmatpush1.msra.mxu0 0.0
    %134 = vmatprep.subr.mxu0 0.0
    %135 = vmatpush1.msra.mxu0 0.0
    %136 = vmatprep.subr.mxu0 0.0
    %137 = vmatpush1.msra.mxu0 0.0
    %138 = vmatprep.subr.mxu0 0.0
    %139 = vmatpush1.msra.mxu0 0.0
    %140 = vmatprep.subr.mxu0 0.0
    %141 = vmatpush1.msra.mxu0 0.0
    %142 = vmatprep.subr.mxu0 0.0
    %143 = vmatpush1.msra.mxu0 0.0
    %144 = vmatprep.subr.mxu0 0.0
    %145 = vmatpush1.msra.mxu0 0.0
    %146 = vmatprep.subr.mxu0 0.0
    %147 = vmatpush1.msra.mxu0 0.0
    %148 = vmatprep.subr.mxu0 0.0
    %149 = vmatpush1.msra.mxu0 0.0
    %150 = vmatprep.subr.mxu0 0.0
    %151 = vmatpush1.msra.mxu0 0.0
    %152 = vmatprep.mubr.f32.mxu0 0.0
    %153 = vmatmul.mubr.f32.gmra.mrb[0].mxu0 %v73
    %v154 = vpop.f32.mrb[0].mxu0
    %v155 = vadd.f32 %v69, %v154
    %v156 = vpop.f32.mrb[0].mxu0
    %157 = vmatprep.mubr.f32.mxu0 0.0
    %158 = vmatmul.mubr.f32.gmra.mrb[0].mxu0 %v76
    %v159 = vpop.f32.mrb[0].mxu0
    %v160 = vadd.f32 %v69, %v159
    %v161 = vpop.f32.mrb[0].mxu0
    %162 = vmatprep.mubr.f32.mxu0 0.0
    %163 = vmatmul.mubr.f32.gmra.mrb[0].mxu0 %v79
    %v164 = vpop.f32.mrb[0].mxu0
    %v165 = vadd.f32 %v69, %v164
    %v166 = vpop.f32.mrb[0].mxu0
    %167 = vmatprep.mubr.f32.mxu0 0.0
    %168 = vmatmul.mubr.f32.gmra.mrb[0].mxu0 %v82
    %v169 = vpop.f32.mrb[0].mxu0
    %v170 = vadd.f32 %v69, %v169
    %v171 = vpop.f32.mrb[0].mxu0
    %172 = vdwg.mxu0
    %v173 = vxor.u32 %v155, 2147483648
    %v174 = vxor.u32 %v160, 2147483648
    %v175 = vxor.u32 %v165, 2147483648
    %v176 = vxor.u32 %v170, 2147483648
    %v177 = vmul.f32 %v173, 1.442695
    %v178 = vpow.pop %v177
    %v179 = vmul.f32 %v174, 1.442695
    %v180 = vpow.pop %v179
    %v181 = vmul.f32 %v175, 1.442695
    %v182 = vpow.pop %v181
    %v183 = vmul.f32 %v176, 1.442695
    %v184 = vpow.pop %v183
    %v185 = vadd.f32 %v178, 1.0
    %v186 = vadd.f32 %v180, 1.0
    %v187 = vadd.f32 %v182, 1.0
    %v188 = vadd.f32 %v184, 1.0
    %v189 = vrcp.pop %v185
    %v190 = vmul.f32 1.0, %v189
    %v191 = vrcp.pop %v186
    %v192 = vmul.f32 1.0, %v191
    %v193 = vrcp.pop %v187
    %v194 = vmul.f32 1.0, %v193
    %v195 = vrcp.pop %v188
    %v196 = vmul.f32 1.0, %v195
    %vm197 = vcmask 7168
    %198 = vst.msk [vmem:[%s8] sm:$0xff] %vm197, %v190
    %199 = vst.msk [vmem:[%s8 + $0x8] sm:$0xff] %vm197, %v192
    %200 = vst.msk [vmem:[%s8 + $0x10] sm:$0xff] %vm197, %v194
    %201 = vst.msk [vmem:[%s8 + $0x18] sm:$0xff] %vm197, %v196
    %v202 = vld [vmem:[%s3] sm:$0x7]
    %v203 = vld [vmem:[%s4] sm:$0x1]
    %205 = vset.pattern.permute.xlu0 0
    %206 = vperm.xlu0 %205, %v190
    %v207 = vpop.permute.xlu0 %206
    %210 = vset.pattern.permute.xlu0 0
    %211 = vperm.xlu0 %210, %v192
    %v212 = vpop.permute.xlu0 %211
    %215 = vset.pattern.permute.xlu0 0
    %216 = vperm.xlu0 %215, %v194
    %v217 = vpop.permute.xlu0 %216
    %220 = vset.pattern.permute.xlu0 0
    %221 = vperm.xlu0 %220, %v196
    %v222 = vpop.permute.xlu0 %221
    %v225 = vlaneseq
    %v226 = vshrl.u32 %v225, 7
    %v227 = vsub.s32 0, %v226
    %v228 = vrot.slane %v203, %v227
    %v230 = vmul.f32 %v207, %v228
    %v231 = vmul.f32 %v212, %v228
    %v232 = vmul.f32 %v217, %v228
    %v233 = vmul.f32 %v222, %v228
    %v235 = vsel %vm84, %v202, 0
    %237 = vmatprep.subr.mxu0 0.0
    %238 = vmatpush1.msra.mxu0 %v235
    %239 = vmatprep.subr.mxu0 0.0
    %240 = vmatpush1.msra.mxu0 0.0
    %241 = vmatprep.subr.mxu0 0.0
    %242 = vmatpush1.msra.mxu0 0.0
    %243 = vmatprep.subr.mxu0 0.0
    %244 = vmatpush1.msra.mxu0 0.0
    %245 = vmatprep.subr.mxu0 0.0
    %246 = vmatpush1.msra.mxu0 0.0
    %247 = vmatprep.subr.mxu0 0.0
    %248 = vmatpush1.msra.mxu0 0.0
    %249 = vmatprep.subr.mxu0 0.0
    %250 = vmatpush1.msra.mxu0 0.0
    %251 = vmatprep.subr.mxu0 0.0
    %252 = vmatpush1.msra.mxu0 0.0
    %253 = vmatprep.subr.mxu0 0.0
    %254 = vmatpush1.msra.mxu0 0.0
    %255 = vmatprep.subr.mxu0 0.0
    %256 = vmatpush1.msra.mxu0 0.0
    %257 = vmatprep.subr.mxu0 0.0
    %258 = vmatpush1.msra.mxu0 0.0
    %259 = vmatprep.subr.mxu0 0.0
    %260 = vmatpush1.msra.mxu0 0.0
    %261 = vmatprep.subr.mxu0 0.0
    %262 = vmatpush1.msra.mxu0 0.0
    %263 = vmatprep.subr.mxu0 0.0
    %264 = vmatpush1.msra.mxu0 0.0
    %265 = vmatprep.subr.mxu0 0.0
    %266 = vmatpush1.msra.mxu0 0.0
    %267 = vmatprep.subr.mxu0 0.0
    %268 = vmatpush1.msra.mxu0 0.0
    %269 = vmatprep.subr.mxu0 0.0
    %270 = vmatpush1.msra.mxu0 0.0
    %271 = vmatprep.subr.mxu0 0.0
    %272 = vmatpush1.msra.mxu0 0.0
    %273 = vmatprep.subr.mxu0 0.0
    %274 = vmatpush1.msra.mxu0 0.0
    %275 = vmatprep.subr.mxu0 0.0
    %276 = vmatpush1.msra.mxu0 0.0
    %277 = vmatprep.subr.mxu0 0.0
    %278 = vmatpush1.msra.mxu0 0.0
    %279 = vmatprep.subr.mxu0 0.0
    %280 = vmatpush1.msra.mxu0 0.0
    %281 = vmatprep.subr.mxu0 0.0
    %282 = vmatpush1.msra.mxu0 0.0
    %283 = vmatprep.subr.mxu0 0.0
    %284 = vmatpush1.msra.mxu0 0.0
    %285 = vmatprep.subr.mxu0 0.0
    %286 = vmatpush1.msra.mxu0 0.0
    %287 = vmatprep.subr.mxu0 0.0
    %288 = vmatpush1.msra.mxu0 0.0
    %289 = vmatprep.subr.mxu0 0.0
    %290 = vmatpush1.msra.mxu0 0.0
    %291 = vmatprep.subr.mxu0 0.0
    %292 = vmatpush1.msra.mxu0 0.0
    %293 = vmatprep.subr.mxu0 0.0
    %294 = vmatpush1.msra.mxu0 0.0
    %295 = vmatprep.subr.mxu0 0.0
    %296 = vmatpush1.msra.mxu0 0.0
    %297 = vmatprep.subr.mxu0 0.0
    %298 = vmatpush1.msra.mxu0 0.0
    %299 = vmatprep.subr.mxu0 0.0
    %300 = vmatpush1.msra.mxu0 0.0
    %301 = vmatprep.mubr.f32.mxu0 0.0
    %302 = vmatmul.mubr.f32.gmra.mrb[0].mxu0 %v73
    %v303 = vpop.f32.mrb[0].mxu0
    %v304 = vadd.f32 %v230, %v303
    %v305 = vpop.f32.mrb[0].mxu0
    %306 = vmatprep.mubr.f32.mxu0 0.0
    %307 = vmatmul.mubr.f32.gmra.mrb[0].mxu0 %v76
    %v308 = vpop.f32.mrb[0].mxu0
    %v309 = vadd.f32 %v231, %v308
    %v310 = vpop.f32.mrb[0].mxu0
    %311 = vmatprep.mubr.f32.mxu0 0.0
    %312 = vmatmul.mubr.f32.gmra.mrb[0].mxu0 %v79
    %v313 = vpop.f32.mrb[0].mxu0
    %v314 = vadd.f32 %v232, %v313
    %v315 = vpop.f32.mrb[0].mxu0
    %316 = vmatprep.mubr.f32.mxu0 0.0
    %317 = vmatmul.mubr.f32.gmra.mrb[0].mxu0 %v82
    %v318 = vpop.f32.mrb[0].mxu0
    %v319 = vadd.f32 %v233, %v318
    %v320 = vpop.f32.mrb[0].mxu0
    %321 = vdwg.mxu0
    %v322 = vld [vmem:[#allocation3] sm:$0x1]
    %v324 = vlaneseq
    %v325 = vshrl.u32 %v324, 7
    %v326 = vsub.s32 0, %v325
    %v327 = vrot.slane %v322, %v326
    %v329 = vadd.f32 %v304, %v327
    %v330 = vadd.f32 %v309, %v327
    %v331 = vadd.f32 %v314, %v327
    %v332 = vadd.f32 %v319, %v327
    %v333 = vmax.f32 %v329, 0.0
    %v334 = vmax.f32 %v330, 0.0
    %v335 = vmax.f32 %v331, 0.0
    %v336 = vmax.f32 %v332, 0.0
    %v337 = vpack.c.bf16 %v334, %v333
    %v338 = vpack.c.bf16 %v336, %v335
    %v339 = vld [vmem:[%s6] sm:$0xff]
    %v340 = vld [vmem:[%s6 + $0x8] sm:$0xff]
    %v341 = vld [vmem:[%s6 + $0x10] sm:$0xff]
    %v342 = vld [vmem:[%s6 + $0x18] sm:$0xff]
    %v343 = vld [vmem:[%s6 + $0x20] sm:$0xff]
    %v344 = vld [vmem:[%s6 + $0x28] sm:$0xff]
    %v345 = vld [vmem:[%s6 + $0x30] sm:$0xff]
    %v346 = vld [vmem:[%s6 + $0x38] sm:$0xff]
    %v347 = vld [vmem:[#allocation6] sm:$0x3]
    %v349 = vlaneseq
    %v350 = vshrl.u32 %v349, 7
    %v351 = vsub.s32 0, %v350
    %v352 = vrot.slane %v347, %v351
    %v353 = vlaneseq
    %v354 = vshrl.u32 %v353, 7
    %v355 = vsub.s32 1, %v354
    %v356 = vrot.slane %v347, %v355
    %v367 = vunpack.c.l.b16 %v339
    %v368 = vunpack.c.h.b16 %v339
    %v369 = vunpack.c.l.b16 %v340
    %v370 = vunpack.c.h.b16 %v340
    %v371 = vunpack.c.l.b16 %v341
    %v372 = vunpack.c.h.b16 %v341
    %v373 = vunpack.c.l.b16 %v342
    %v374 = vunpack.c.h.b16 %v342
    %v375 = vunpack.c.l.b16 %v343
    %v376 = vunpack.c.h.b16 %v343
    %v377 = vunpack.c.l.b16 %v344
    %v378 = vunpack.c.h.b16 %v344
    %v379 = vunpack.c.l.b16 %v345
    %v380 = vunpack.c.h.b16 %v345
    %v381 = vunpack.c.l.b16 %v346
    %v382 = vunpack.c.h.b16 %v346
    %v383 = vpack.c.b16 %v369, %v367
    %v384 = vpack.c.b16 %v370, %v368
    %v385 = vpack.c.b16 %v373, %v371
    %v386 = vpack.c.b16 %v374, %v372
    %v387 = vpack.c.b16 %v377, %v375
    %v388 = vpack.c.b16 %v378, %v376
    %v389 = vpack.c.b16 %v381, %v379
    %v390 = vpack.c.b16 %v382, %v380
    %vm399 = vcmask 523264
    %v401 = vsel %vm399, %v337, 0
    %v404 = vsel %vm399, %v338, 0
    %406 = vmatprep.subr.bf16.mxu0 %v384
    %407 = vmatpush1.bf16.msra.mxu0 %v383
    %408 = vmatprep.subr.bf16.mxu0 %v386
    %409 = vmatpush1.bf16.msra.mxu0 %v385
    %410 = vmatprep.subr.bf16.mxu0 %v388
    %411 = vmatpush1.bf16.msra.mxu0 %v387
    %412 = vmatprep.subr.bf16.mxu0 %v390
    %413 = vmatpush1.bf16.msra.mxu0 %v389
    %414 = vmatprep.subr.bf16.mxu0 0
    %415 = vmatpush1.bf16.msra.mxu0 0
    %416 = vmatprep.subr.bf16.mxu0 0
    %417 = vmatpush1.bf16.msra.mxu0 0
    %418 = vmatprep.subr.bf16.mxu0 0
    %419 = vmatpush1.bf16.msra.mxu0 0
    %420 = vmatprep.subr.bf16.mxu0 0
    %421 = vmatpush1.bf16.msra.mxu0 0
    %422 = vmatprep.subr.bf16.mxu0 0
    %423 = vmatpush1.bf16.msra.mxu0 0
    %424 = vmatprep.subr.bf16.mxu0 0
    %425 = vmatpush1.bf16.msra.mxu0 0
    %426 = vmatprep.subr.bf16.mxu0 0
    %427 = vmatpush1.bf16.msra.mxu0 0
    %428 = vmatprep.subr.bf16.mxu0 0
    %429 = vmatpush1.bf16.msra.mxu0 0
    %430 = vmatprep.subr.bf16.mxu0 0
    %431 = vmatpush1.bf16.msra.mxu0 0
    %432 = vmatprep.subr.bf16.mxu0 0
    %433 = vmatpush1.bf16.msra.mxu0 0
    %434 = vmatprep.subr.bf16.mxu0 0
    %435 = vmatpush1.bf16.msra.mxu0 0
    %436 = vmatprep.subr.bf16.mxu0 0
    %437 = vmatpush1.bf16.msra.mxu0 0
    %438 = vmatprep.mubr.bf16.mxu0 0
    %439 = vmatmul.mubr.bf16.gmra.mrb[0].mxu0 %v401
    %v440 = vpop.f32.mrb[0].mxu0
    %v441 = vadd.f32 %v352, %v440
    %v442 = vpop.f32.mrb[0].mxu0
    %v443 = vadd.f32 %v356, %v442
    %v444 = vpop.f32.mrb[0].mxu0
    %v445 = vadd.f32 %v352, %v444
    %v446 = vpop.f32.mrb[0].mxu0
    %v447 = vadd.f32 %v356, %v446
    %448 = vmatprep.mubr.bf16.mxu0 0
    %449 = vmatmul.mubr.bf16.gmra.mrb[0].mxu0 %v404
    %v450 = vpop.f32.mrb[0].mxu0
    %v451 = vadd.f32 %v352, %v450
    %v452 = vpop.f32.mrb[0].mxu0
    %v453 = vadd.f32 %v356, %v452
    %v454 = vpop.f32.mrb[0].mxu0
    %v455 = vadd.f32 %v352, %v454
    %v456 = vpop.f32.mrb[0].mxu0
    %v457 = vadd.f32 %v356, %v456
    %458 = vdwg.mxu0
    %v459 = vmax.f32 %v441, 0.0
    %v460 = vmax.f32 %v443, 0.0
    %v461 = vmax.f32 %v445, 0.0
    %v462 = vmax.f32 %v447, 0.0
    %v463 = vmax.f32 %v451, 0.0
    %v464 = vmax.f32 %v453, 0.0
    %v465 = vmax.f32 %v455, 0.0
    %v466 = vmax.f32 %v457, 0.0
    %v467 = vpack.c.bf16 %v461, %v459
    %v468 = vpack.c.bf16 %v462, %v460
    %v469 = vpack.c.bf16 %v465, %v463
    %v470 = vpack.c.bf16 %v466, %v464
    %v475 = vunpack.c.l.b16 %v467
    %v476 = vunpack.c.l.b16 %v468
    %v477 = vunpack.c.h.b16 %v467
    %v478 = vunpack.c.h.b16 %v468
    %v479 = vunpack.c.l.b16 %v469
    %v480 = vunpack.c.l.b16 %v470
    %v481 = vunpack.c.h.b16 %v469
    %v482 = vunpack.c.h.b16 %v470
    %v483 = vpack.c.b16 %v476, %v475
    %v484 = vpack.c.b16 %v478, %v477
    %v485 = vpack.c.b16 %v480, %v479
    %v486 = vpack.c.b16 %v482, %v481
    %491 = vst [vmem:[#allocation8] sm:$0xff] %v483
    %492 = vst [vmem:[#allocation8 + $0x8] sm:$0xff] %v484
    %493 = vst [vmem:[#allocation8 + $0x10] sm:$0xff] %v485
    %494 = vst [vmem:[#allocation8 + $0x18] sm:$0xff] %v486
    // Predicated region
    $region42: #{noise_aware_feature_extractor.4} parent=1 // pred_check
      _
    $region43: #{noise_aware_feature_extractor.4} parent=1 // pred_check_branch
      %496 = sbr.rel (0) target = $region45
    $region44: #{noise_aware_feature_extractor.4} parent=1 // pred_region
      _
    $region45: #{noise_aware_feature_extractor.4} parent=1 // pred_fallthru
      _
    // Predicated region
    $region46: #{noise_aware_feature_extractor.4} parent=1 // pred_check
      _
    $region47: #{noise_aware_feature_extractor.4} parent=1 // pred_check_branch
      %498 = sbr.rel (0) target = $region49
    $region48: #{noise_aware_feature_extractor.4} parent=1 // pred_region
      %s500 = ssub.s32 512, 512
      %501 = vsyncadd [#allocation5], %s500
      %s502 = sshll.u32 [#allocation8], 4
      %s503 = int_to_ptr.vmem [resolvable:$true] %s502
      %508 = dma.vmem_to_hbm [thread:$0]  %s503, 512, %s9, [#allocation5], 128, 128, 8
    $region49: #{noise_aware_feature_extractor.4} parent=1 // pred_fallthru
      _
    // Predicated region
    $region50: #{noise_aware_feature_extractor.4} parent=1 // pred_check
      _
    $region51: #{noise_aware_feature_extractor.4} parent=1 // pred_check_branch
      %510 = sbr.rel (0) target = $region53
    $region52: #{noise_aware_feature_extractor.4} parent=1 // pred_region
      _
    $region53: #{noise_aware_feature_extractor.4} parent=1 // pred_fallthru
      _
    // Predicated region
    $region54: #{noise_aware_feature_extractor.4} parent=1 // pred_check
      _
    $region55: #{noise_aware_feature_extractor.4} parent=1 // pred_check_branch
      %512 = sbr.rel (0) target = $region57
    $region56: #{noise_aware_feature_extractor.4} parent=1 // pred_region
      %513 = dma.done [#allocation5], 512
    $region57: #{noise_aware_feature_extractor.4} parent=1 // pred_fallthru
      _
    %514 = vsyncpa [#allocation4], 1
    %515 = vsyncpa [#allocation7], 1
    %516 = vsyncpa [#allocation5], 1

// kernel: noise_aware_feature_extractor.5
$region0: #{noise_aware_feature_extractor.5}
  #allocation0 [shape = 'u32[]', space=smem, size = 0x4, offset = 0x4, fixed_abs, tag = 'smem constant byte address 0x4 - core index']
  #allocation1 [shape = 'u32[144,128]{1,0:T(1,128)}', space=vmem, size = 0x12000, scoped, tag = 'internal scratch']
  %s0 = inlined_call_operand.vmem [shape: f32[16,3], index: 0, kind: input, shape index: {}]
  %s1 = inlined_call_operand.vmem [shape: bf16[16,256], index: 1, kind: input, shape index: {}]
  %s2 = inlined_call_operand.vmem [shape: bf16[256,256], index: 2, kind: input, shape index: {}]
  %s3 = inlined_call_operand.vmem [shape: f32[1,256], index: 3, kind: input, shape index: {}]
  %s4 = inlined_call_operand.vmem [shape: f32[3,256], index: 4, kind: input, shape index: {}]
  %s5 = inlined_call_operand.vmem [shape: bf16[256,256], index: 5, kind: input, shape index: {}]
  %s6 = inlined_call_operand.vmem [shape: f32[1,256], index: 6, kind: input, shape index: {}]
  %s7 = inlined_call_operand.vmem [shape: bf16[256,384], index: 7, kind: input, shape index: {}]
  %s8 = inlined_call_operand.vmem [shape: f32[1,384], index: 8, kind: input, shape index: {}]
  %s9 = inlined_call_operand.hbm [shape: bf16[16,384], index: 9, kind: output, shape index: {}]
  %s10 = sld [smem:[#allocation0]]
  $region46: #{noise_aware_feature_extractor.5} parent=0
    _
  %s12 = ssub.s32 1, %s10
  %s13 = scalar_select 0, %s12, %s10
  $region1: #{noise_aware_feature_extractor.5} parent=0
    #allocation2 [shape = 'u8[12288]{0}', space=vmem, size = 0x3000, scoped, tag = 'output window, operand 0, single buffered']
    #allocation3 [shape = 's32[1]{0}', space=sflag, size = 0x4, scoped, tag = 'scoped memory for noise_aware_feature_extractor.5']
    %14 = vsyncpa [#allocation3], 0
    // Predicated region
    $region2: #{noise_aware_feature_extractor.5} parent=1 // pred_check
      _
    $region3: #{noise_aware_feature_extractor.5} parent=1 // pred_check_branch
      %16 = sbr.rel (0) target = $region5
    $region4: #{noise_aware_feature_extractor.5} parent=1 // pred_region
      _
    $region5: #{noise_aware_feature_extractor.5} parent=1 // pred_fallthru
      _
    // Predicated region
    $region6: #{noise_aware_feature_extractor.5} parent=1 // pred_check
      _
    $region7: #{noise_aware_feature_extractor.5} parent=1 // pred_check_branch
      %18 = sbr.rel (0) target = $region9
    $region8: #{noise_aware_feature_extractor.5} parent=1 // pred_region
      _
    $region9: #{noise_aware_feature_extractor.5} parent=1 // pred_fallthru
      _
    // Predicated region
    $region10: #{noise_aware_feature_extractor.5} parent=1 // pred_check
      _
    $region11: #{noise_aware_feature_extractor.5} parent=1 // pred_check_branch
      %20 = sbr.rel (0) target = $region13
    $region12: #{noise_aware_feature_extractor.5} parent=1 // pred_region
      _
    $region13: #{noise_aware_feature_extractor.5} parent=1 // pred_fallthru
      _
    // Predicated region
    $region14: #{noise_aware_feature_extractor.5} parent=1 // pred_check
      _
    $region15: #{noise_aware_feature_extractor.5} parent=1 // pred_check_branch
      %22 = sbr.rel (0) target = $region17
    $region16: #{noise_aware_feature_extractor.5} parent=1 // pred_region
      _
    $region17: #{noise_aware_feature_extractor.5} parent=1 // pred_fallthru
      _
    // Predicated region
    $region18: #{noise_aware_feature_extractor.5} parent=1 // pred_check
      _
    $region19: #{noise_aware_feature_extractor.5} parent=1 // pred_check_branch
      %24 = sbr.rel (0) target = $region21
    $region20: #{noise_aware_feature_extractor.5} parent=1 // pred_region
      _
    $region21: #{noise_aware_feature_extractor.5} parent=1 // pred_fallthru
      _
    // Predicated region
    $region22: #{noise_aware_feature_extractor.5} parent=1 // pred_check
      _
    $region23: #{noise_aware_feature_extractor.5} parent=1 // pred_check_branch
      %26 = sbr.rel (0) target = $region25
    $region24: #{noise_aware_feature_extractor.5} parent=1 // pred_region
      _
    $region25: #{noise_aware_feature_extractor.5} parent=1 // pred_fallthru
      _
    // Predicated region
    $region26: #{noise_aware_feature_extractor.5} parent=1 // pred_check
      _
    $region27: #{noise_aware_feature_extractor.5} parent=1 // pred_check_branch
      %28 = sbr.rel (0) target = $region29
    $region28: #{noise_aware_feature_extractor.5} parent=1 // pred_region
      _
    $region29: #{noise_aware_feature_extractor.5} parent=1 // pred_fallthru
      _
    // Predicated region
    $region30: #{noise_aware_feature_extractor.5} parent=1 // pred_check
      _
    $region31: #{noise_aware_feature_extractor.5} parent=1 // pred_check_branch
      %30 = sbr.rel (0) target = $region33
    $region32: #{noise_aware_feature_extractor.5} parent=1 // pred_region
      _
    $region33: #{noise_aware_feature_extractor.5} parent=1 // pred_fallthru
      _
    // Predicated region
    $region34: #{noise_aware_feature_extractor.5} parent=1 // pred_check
      _
    $region35: #{noise_aware_feature_extractor.5} parent=1 // pred_check_branch
      %32 = sbr.rel (0) target = $region37
    $region36: #{noise_aware_feature_extractor.5} parent=1 // pred_region
      _
    $region37: #{noise_aware_feature_extractor.5} parent=1 // pred_fallthru
      _
    %v34 = vld [vmem:[%s0] sm:$0xff]
    %v35 = vld [vmem:[%s0 + $0x8] sm:$0xff]
    %v36 = vld [vmem:[%s1] sm:$0xff]
    %v37 = vld [vmem:[%s1 + $0x8] sm:$0xff]
    %v38 = vld [vmem:[%s2] sm:$0xff]
    %v39 = vld [vmem:[%s2 + $0x8] sm:$0xff]
    %v40 = vld [vmem:[%s2 + $0x10] sm:$0xff]
    %v41 = vld [vmem:[%s2 + $0x18] sm:$0xff]
    %v42 = vld [vmem:[%s2 + $0x20] sm:$0xff]
    %v43 = vld [vmem:[%s2 + $0x28] sm:$0xff]
    %v44 = vld [vmem:[%s2 + $0x30] sm:$0xff]
    %v45 = vld [vmem:[%s2 + $0x38] sm:$0xff]
    %v46 = vld [vmem:[%s2 + $0x40] sm:$0xff]
    %v47 = vld [vmem:[%s2 + $0x48] sm:$0xff]
    %v48 = vld [vmem:[%s2 + $0x50] sm:$0xff]
    %v49 = vld [vmem:[%s2 + $0x58] sm:$0xff]
    %v50 = vld [vmem:[%s2 + $0x60] sm:$0xff]
    %v51 = vld [vmem:[%s2 + $0x68] sm:$0xff]
    %v52 = vld [vmem:[%s2 + $0x70] sm:$0xff]
    %v53 = vld [vmem:[%s2 + $0x78] sm:$0xff]
    %v54 = vld [vmem:[%s2 + $0x80] sm:$0xff]
    %v55 = vld [vmem:[%s2 + $0x88] sm:$0xff]
    %v56 = vld [vmem:[%s2 + $0x90] sm:$0xff]
    %v57 = vld [vmem:[%s2 + $0x98] sm:$0xff]
    %v58 = vld [vmem:[%s2 + $0xa0] sm:$0xff]
    %v59 = vld [vmem:[%s2 + $0xa8] sm:$0xff]
    %v60 = vld [vmem:[%s2 + $0xb0] sm:$0xff]
    %v61 = vld [vmem:[%s2 + $0xb8] sm:$0xff]
    %v62 = vld [vmem:[%s2 + $0xc0] sm:$0xff]
    %v63 = vld [vmem:[%s2 + $0xc8] sm:$0xff]
    %v64 = vld [vmem:[%s2 + $0xd0] sm:$0xff]
    %v65 = vld [vmem:[%s2 + $0xd8] sm:$0xff]
    %v66 = vld [vmem:[%s2 + $0xe0] sm:$0xff]
    %v67 = vld [vmem:[%s2 + $0xe8] sm:$0xff]
    %v68 = vld [vmem:[%s2 + $0xf0] sm:$0xff]
    %v69 = vld [vmem:[%s2 + $0xf8] sm:$0xff]
    %v70 = vld [vmem:[%s3] sm:$0x3]
    %v72 = vlaneseq
    %v73 = vshrl.u32 %v72, 7
    %v74 = vsub.s32 0, %v73
    %v75 = vrot.slane %v70, %v74
    %v76 = vlaneseq
    %v77 = vshrl.u32 %v76, 7
    %v78 = vsub.s32 1, %v77
    %v79 = vrot.slane %v70, %v78
    %v84 = vunpack.c.l.b16 %v36
    %v85 = vunpack.c.h.b16 %v36
    %v86 = vunpack.c.l.b16 %v37
    %v87 = vunpack.c.h.b16 %v37
    %v88 = vpack.c.b16 %v86, %v84
    %v89 = vpack.c.b16 %v87, %v85
    %v124 = vunpack.c.l.b16 %v38
    %v125 = vunpack.c.h.b16 %v38
    %v126 = vunpack.c.l.b16 %v39
    %v127 = vunpack.c.h.b16 %v39
    %v128 = vunpack.c.l.b16 %v40
    %v129 = vunpack.c.h.b16 %v40
    %v130 = vunpack.c.l.b16 %v41
    %v131 = vunpack.c.h.b16 %v41
    %v132 = vunpack.c.l.b16 %v42
    %v133 = vunpack.c.h.b16 %v42
    %v134 = vunpack.c.l.b16 %v43
    %v135 = vunpack.c.h.b16 %v43
    %v136 = vunpack.c.l.b16 %v44
    %v137 = vunpack.c.h.b16 %v44
    %v138 = vunpack.c.l.b16 %v45
    %v139 = vunpack.c.h.b16 %v45
    %v140 = vunpack.c.l.b16 %v46
    %v141 = vunpack.c.h.b16 %v46
    %v142 = vunpack.c.l.b16 %v47
    %v143 = vunpack.c.h.b16 %v47
    %v144 = vunpack.c.l.b16 %v48
    %v145 = vunpack.c.h.b16 %v48
    %v146 = vunpack.c.l.b16 %v49
    %v147 = vunpack.c.h.b16 %v49
    %v148 = vunpack.c.l.b16 %v50
    %v149 = vunpack.c.h.b16 %v50
    %v150 = vunpack.c.l.b16 %v51
    %v151 = vunpack.c.h.b16 %v51
    %v152 = vunpack.c.l.b16 %v52
    %v153 = vunpack.c.h.b16 %v52
    %v154 = vunpack.c.l.b16 %v53
    %v155 = vunpack.c.h.b16 %v53
    %v156 = vunpack.c.l.b16 %v54
    %v157 = vunpack.c.h.b16 %v54
    %v158 = vunpack.c.l.b16 %v55
    %v159 = vunpack.c.h.b16 %v55
    %v160 = vunpack.c.l.b16 %v56
    %v161 = vunpack.c.h.b16 %v56
    %v162 = vunpack.c.l.b16 %v57
    %v163 = vunpack.c.h.b16 %v57
    %v164 = vunpack.c.l.b16 %v58
    %v165 = vunpack.c.h.b16 %v58
    %v166 = vunpack.c.l.b16 %v59
    %v167 = vunpack.c.h.b16 %v59
    %v168 = vunpack.c.l.b16 %v60
    %v169 = vunpack.c.h.b16 %v60
    %v170 = vunpack.c.l.b16 %v61
    %v171 = vunpack.c.h.b16 %v61
    %v172 = vunpack.c.l.b16 %v62
    %v173 = vunpack.c.h.b16 %v62
    %v174 = vunpack.c.l.b16 %v63
    %v175 = vunpack.c.h.b16 %v63
    %v176 = vunpack.c.l.b16 %v64
    %v177 = vunpack.c.h.b16 %v64
    %v178 = vunpack.c.l.b16 %v65
    %v179 = vunpack.c.h.b16 %v65
    %v180 = vunpack.c.l.b16 %v66
    %v181 = vunpack.c.h.b16 %v66
    %v182 = vunpack.c.l.b16 %v67
    %v183 = vunpack.c.h.b16 %v67
    %v184 = vunpack.c.l.b16 %v68
    %v185 = vunpack.c.h.b16 %v68
    %v186 = vunpack.c.l.b16 %v69
    %v187 = vunpack.c.h.b16 %v69
    %v188 = vpack.c.b16 %v126, %v124
    %v189 = vpack.c.b16 %v127, %v125
    %v190 = vpack.c.b16 %v130, %v128
    %v191 = vpack.c.b16 %v131, %v129
    %v192 = vpack.c.b16 %v134, %v132
    %v193 = vpack.c.b16 %v135, %v133
    %v194 = vpack.c.b16 %v138, %v136
    %v195 = vpack.c.b16 %v139, %v137
    %v196 = vpack.c.b16 %v142, %v140
    %v197 = vpack.c.b16 %v143, %v141
    %v198 = vpack.c.b16 %v146, %v144
    %v199 = vpack.c.b16 %v147, %v145
    %v200 = vpack.c.b16 %v150, %v148
    %v201 = vpack.c.b16 %v151, %v149
    %v202 = vpack.c.b16 %v154, %v152
    %v203 = vpack.c.b16 %v155, %v153
    %v204 = vpack.c.b16 %v158, %v156
    %v205 = vpack.c.b16 %v159, %v157
    %v206 = vpack.c.b16 %v162, %v160
    %v207 = vpack.c.b16 %v163, %v161
    %v208 = vpack.c.b16 %v166, %v164
    %v209 = vpack.c.b16 %v167, %v165
    %v210 = vpack.c.b16 %v170, %v168
    %v211 = vpack.c.b16 %v171, %v169
    %v212 = vpack.c.b16 %v174, %v172
    %v213 = vpack.c.b16 %v175, %v173
    %v214 = vpack.c.b16 %v178, %v176
    %v215 = vpack.c.b16 %v179, %v177
    %v216 = vpack.c.b16 %v182, %v180
    %v217 = vpack.c.b16 %v183, %v181
    %v218 = vpack.c.b16 %v186, %v184
    %v219 = vpack.c.b16 %v187, %v185
    %252 = vmatprep.subr.bf16.mxu0 %v189
    %253 = vmatpush1.bf16.msra.mxu0 %v188
    %254 = vmatprep.subr.bf16.mxu0 %v191
    %255 = vmatpush1.bf16.msra.mxu0 %v190
    %256 = vmatprep.subr.bf16.mxu0 %v193
    %257 = vmatpush1.bf16.msra.mxu0 %v192
    %258 = vmatprep.subr.bf16.mxu0 %v195
    %259 = vmatpush1.bf16.msra.mxu0 %v194
    %260 = vmatprep.subr.bf16.mxu0 %v197
    %261 = vmatpush1.bf16.msra.mxu0 %v196
    %262 = vmatprep.subr.bf16.mxu0 %v199
    %263 = vmatpush1.bf16.msra.mxu0 %v198
    %264 = vmatprep.subr.bf16.mxu0 %v201
    %265 = vmatpush1.bf16.msra.mxu0 %v200
    %266 = vmatprep.subr.bf16.mxu0 %v203
    %267 = vmatpush1.bf16.msra.mxu0 %v202
    %268 = vmatprep.subr.bf16.mxu0 %v205
    %269 = vmatpush1.bf16.msra.mxu0 %v204
    %270 = vmatprep.subr.bf16.mxu0 %v207
    %271 = vmatpush1.bf16.msra.mxu0 %v206
    %272 = vmatprep.subr.bf16.mxu0 %v209
    %273 = vmatpush1.bf16.msra.mxu0 %v208
    %274 = vmatprep.subr.bf16.mxu0 %v211
    %275 = vmatpush1.bf16.msra.mxu0 %v210
    %276 = vmatprep.subr.bf16.mxu0 %v213
    %277 = vmatpush1.bf16.msra.mxu0 %v212
    %278 = vmatprep.subr.bf16.mxu0 %v215
    %279 = vmatpush1.bf16.msra.mxu0 %v214
    %280 = vmatprep.subr.bf16.mxu0 %v217
    %281 = vmatpush1.bf16.msra.mxu0 %v216
    %282 = vmatprep.subr.bf16.mxu0 %v219
    %283 = vmatpush1.bf16.msra.mxu0 %v218
    %284 = vmatprep.mubr.bf16.mxu0 %v89
    %285 = vmatmul.mubr.bf16.gmra.mrb[0].mxu0 %v88
    %v286 = vpop.f32.mrb[0].mxu0
    %v287 = vadd.f32 %v75, %v286
    %v288 = vpop.f32.mrb[0].mxu0
    %v289 = vadd.f32 %v79, %v288
    %v290 = vpop.f32.mrb[0].mxu0
    %v291 = vadd.f32 %v75, %v290
    %v292 = vpop.f32.mrb[0].mxu0
    %v293 = vadd.f32 %v79, %v292
    %294 = vdwg.mxu0
    %v295 = vld [vmem:[%s4] sm:$0x77]
    %v296 = vpack.c.bf16 %v291, %v287
    %v297 = vpack.c.bf16 %v293, %v289
    %v298 = vld [vmem:[%s5] sm:$0xff]
    %v299 = vld [vmem:[%s5 + $0x8] sm:$0xff]
    %v300 = vld [vmem:[%s5 + $0x10] sm:$0xff]
    %v301 = vld [vmem:[%s5 + $0x18] sm:$0xff]
    %v302 = vld [vmem:[%s5 + $0x20] sm:$0xff]
    %v303 = vld [vmem:[%s5 + $0x28] sm:$0xff]
    %v304 = vld [vmem:[%s5 + $0x30] sm:$0xff]
    %v305 = vld [vmem:[%s5 + $0x38] sm:$0xff]
    %v306 = vld [vmem:[%s5 + $0x40] sm:$0xff]
    %v307 = vld [vmem:[%s5 + $0x48] sm:$0xff]
    %v308 = vld [vmem:[%s5 + $0x50] sm:$0xff]
    %v309 = vld [vmem:[%s5 + $0x58] sm:$0xff]
    %v310 = vld [vmem:[%s5 + $0x60] sm:$0xff]
    %v311 = vld [vmem:[%s5 + $0x68] sm:$0xff]
    %v312 = vld [vmem:[%s5 + $0x70] sm:$0xff]
    %v313 = vld [vmem:[%s5 + $0x78] sm:$0xff]
    %v314 = vld [vmem:[%s5 + $0x80] sm:$0xff]
    %v315 = vld [vmem:[%s5 + $0x88] sm:$0xff]
    %v316 = vld [vmem:[%s5 + $0x90] sm:$0xff]
    %v317 = vld [vmem:[%s5 + $0x98] sm:$0xff]
    %v318 = vld [vmem:[%s5 + $0xa0] sm:$0xff]
    %v319 = vld [vmem:[%s5 + $0xa8] sm:$0xff]
    %v320 = vld [vmem:[%s5 + $0xb0] sm:$0xff]
    %v321 = vld [vmem:[%s5 + $0xb8] sm:$0xff]
    %v322 = vld [vmem:[%s5 + $0xc0] sm:$0xff]
    %v323 = vld [vmem:[%s5 + $0xc8] sm:$0xff]
    %v324 = vld [vmem:[%s5 + $0xd0] sm:$0xff]
    %v325 = vld [vmem:[%s5 + $0xd8] sm:$0xff]
    %v326 = vld [vmem:[%s5 + $0xe0] sm:$0xff]
    %v327 = vld [vmem:[%s5 + $0xe8] sm:$0xff]
    %v328 = vld [vmem:[%s5 + $0xf0] sm:$0xff]
    %v329 = vld [vmem:[%s5 + $0xf8] sm:$0xff]
    %v362 = vunpack.c.l.b16 %v298
    %v363 = vunpack.c.h.b16 %v298
    %v364 = vunpack.c.l.b16 %v299
    %v365 = vunpack.c.h.b16 %v299
    %v366 = vunpack.c.l.b16 %v300
    %v367 = vunpack.c.h.b16 %v300
    %v368 = vunpack.c.l.b16 %v301
    %v369 = vunpack.c.h.b16 %v301
    %v370 = vunpack.c.l.b16 %v302
    %v371 = vunpack.c.h.b16 %v302
    %v372 = vunpack.c.l.b16 %v303
    %v373 = vunpack.c.h.b16 %v303
    %v374 = vunpack.c.l.b16 %v304
    %v375 = vunpack.c.h.b16 %v304
    %v376 = vunpack.c.l.b16 %v305
    %v377 = vunpack.c.h.b16 %v305
    %v378 = vunpack.c.l.b16 %v306
    %v379 = vunpack.c.h.b16 %v306
    %v380 = vunpack.c.l.b16 %v307
    %v381 = vunpack.c.h.b16 %v307
    %v382 = vunpack.c.l.b16 %v308
    %v383 = vunpack.c.h.b16 %v308
    %v384 = vunpack.c.l.b16 %v309
    %v385 = vunpack.c.h.b16 %v309
    %v386 = vunpack.c.l.b16 %v310
    %v387 = vunpack.c.h.b16 %v310
    %v388 = vunpack.c.l.b16 %v311
    %v389 = vunpack.c.h.b16 %v311
    %v390 = vunpack.c.l.b16 %v312
    %v391 = vunpack.c.h.b16 %v312
    %v392 = vunpack.c.l.b16 %v313
    %v393 = vunpack.c.h.b16 %v313
    %v394 = vunpack.c.l.b16 %v314
    %v395 = vunpack.c.h.b16 %v314
    %v396 = vunpack.c.l.b16 %v315
    %v397 = vunpack.c.h.b16 %v315
    %v398 = vunpack.c.l.b16 %v316
    %v399 = vunpack.c.h.b16 %v316
    %v400 = vunpack.c.l.b16 %v317
    %v401 = vunpack.c.h.b16 %v317
    %v402 = vunpack.c.l.b16 %v318
    %v403 = vunpack.c.h.b16 %v318
    %v404 = vunpack.c.l.b16 %v319
    %v405 = vunpack.c.h.b16 %v319
    %v406 = vunpack.c.l.b16 %v320
    %v407 = vunpack.c.h.b16 %v320
    %v408 = vunpack.c.l.b16 %v321
    %v409 = vunpack.c.h.b16 %v321
    %v410 = vunpack.c.l.b16 %v322
    %v411 = vunpack.c.h.b16 %v322
    %v412 = vunpack.c.l.b16 %v323
    %v413 = vunpack.c.h.b16 %v323
    %v414 = vunpack.c.l.b16 %v324
    %v415 = vunpack.c.h.b16 %v324
    %v416 = vunpack.c.l.b16 %v325
    %v417 = vunpack.c.h.b16 %v325
    %v418 = vunpack.c.l.b16 %v326
    %v419 = vunpack.c.h.b16 %v326
    %v420 = vunpack.c.l.b16 %v327
    %v421 = vunpack.c.h.b16 %v327
    %v422 = vunpack.c.l.b16 %v328
    %v423 = vunpack.c.h.b16 %v328
    %v424 = vunpack.c.l.b16 %v329
    %v425 = vunpack.c.h.b16 %v329
    %v426 = vpack.c.b16 %v364, %v362
    %v427 = vpack.c.b16 %v365, %v363
    %v428 = vpack.c.b16 %v368, %v366
    %v429 = vpack.c.b16 %v369, %v367
    %v430 = vpack.c.b16 %v372, %v370
    %v431 = vpack.c.b16 %v373, %v371
    %v432 = vpack.c.b16 %v376, %v374
    %v433 = vpack.c.b16 %v377, %v375
    %v434 = vpack.c.b16 %v380, %v378
    %v435 = vpack.c.b16 %v381, %v379
    %v436 = vpack.c.b16 %v384, %v382
    %v437 = vpack.c.b16 %v385, %v383
    %v438 = vpack.c.b16 %v388, %v386
    %v439 = vpack.c.b16 %v389, %v387
    %v440 = vpack.c.b16 %v392, %v390
    %v441 = vpack.c.b16 %v393, %v391
    %v442 = vpack.c.b16 %v396, %v394
    %v443 = vpack.c.b16 %v397, %v395
    %v444 = vpack.c.b16 %v400, %v398
    %v445 = vpack.c.b16 %v401, %v399
    %v446 = vpack.c.b16 %v404, %v402
    %v447 = vpack.c.b16 %v405, %v403
    %v448 = vpack.c.b16 %v408, %v406
    %v449 = vpack.c.b16 %v409, %v407
    %v450 = vpack.c.b16 %v412, %v410
    %v451 = vpack.c.b16 %v413, %v411
    %v452 = vpack.c.b16 %v416, %v414
    %v453 = vpack.c.b16 %v417, %v415
    %v454 = vpack.c.b16 %v420, %v418
    %v455 = vpack.c.b16 %v421, %v419
    %v456 = vpack.c.b16 %v424, %v422
    %v457 = vpack.c.b16 %v425, %v423
    %490 = vmatprep.subr.bf16.mxu0 %v427
    %491 = vmatpush1.bf16.msra.mxu0 %v426
    %492 = vmatprep.subr.bf16.mxu0 %v429
    %493 = vmatpush1.bf16.msra.mxu0 %v428
    %494 = vmatprep.subr.bf16.mxu0 %v431
    %495 = vmatpush1.bf16.msra.mxu0 %v430
    %496 = vmatprep.subr.bf16.mxu0 %v433
    %497 = vmatpush1.bf16.msra.mxu0 %v432
    %498 = vmatprep.subr.bf16.mxu0 %v435
    %499 = vmatpush1.bf16.msra.mxu0 %v434
    %500 = vmatprep.subr.bf16.mxu0 %v437
    %501 = vmatpush1.bf16.msra.mxu0 %v436
    %502 = vmatprep.subr.bf16.mxu0 %v439
    %503 = vmatpush1.bf16.msra.mxu0 %v438
    %504 = vmatprep.subr.bf16.mxu0 %v441
    %505 = vmatpush1.bf16.msra.mxu0 %v440
    %506 = vmatprep.subr.bf16.mxu0 %v443
    %507 = vmatpush1.bf16.msra.mxu0 %v442
    %508 = vmatprep.subr.bf16.mxu0 %v445
    %509 = vmatpush1.bf16.msra.mxu0 %v444
    %510 = vmatprep.subr.bf16.mxu0 %v447
    %511 = vmatpush1.bf16.msra.mxu0 %v446
    %512 = vmatprep.subr.bf16.mxu0 %v449
    %513 = vmatpush1.bf16.msra.mxu0 %v448
    %514 = vmatprep.subr.bf16.mxu0 %v451
    %515 = vmatpush1.bf16.msra.mxu0 %v450
    %516 = vmatprep.subr.bf16.mxu0 %v453
    %517 = vmatpush1.bf16.msra.mxu0 %v452
    %518 = vmatprep.subr.bf16.mxu0 %v455
    %519 = vmatpush1.bf16.msra.mxu0 %v454
    %520 = vmatprep.subr.bf16.mxu0 %v457
    %521 = vmatpush1.bf16.msra.mxu0 %v456
    %522 = vmatprep.mubr.bf16.mxu0 %v297
    %523 = vmatmul.mubr.bf16.gmra.mrb[0].mxu0 %v296
    %v524 = vpop.f32.mrb[0].mxu0
    %v525 = vadd.f32 0.0, %v524
    %v526 = vpop.f32.mrb[0].mxu0
    %v527 = vadd.f32 0.0, %v526
    %v528 = vpop.f32.mrb[0].mxu0
    %v529 = vadd.f32 0.0, %v528
    %v530 = vpop.f32.mrb[0].mxu0
    %v531 = vadd.f32 0.0, %v530
    %532 = vdwg.mxu0
    %v534 = vcombine.high %v295, %v295
    %vm535 = vcmask 23552
    %v537 = vsel %vm535, %v34, 0
    %v540 = vsel %vm535, %v35, 0
    %vm542 = vcmask 1042432
    %v543 = vsel %vm542, %v295, 0
    %v545 = vsel %vm542, %v534, 0
    %547 = vmatprep.subr.mxu0 %v545
    %548 = vmatpush1.msra.mxu0 %v543
    %549 = vmatprep.subr.mxu0 0.0
    %550 = vmatpush1.msra.mxu0 0.0
    %551 = vmatprep.subr.mxu0 0.0
    %552 = vmatpush1.msra.mxu0 0.0
    %553 = vmatprep.subr.mxu0 0.0
    %554 = vmatpush1.msra.mxu0 0.0
    %555 = vmatprep.subr.mxu0 0.0
    %556 = vmatpush1.msra.mxu0 0.0
    %557 = vmatprep.subr.mxu0 0.0
    %558 = vmatpush1.msra.mxu0 0.0
    %559 = vmatprep.subr.mxu0 0.0
    %560 = vmatpush1.msra.mxu0 0.0
    %561 = vmatprep.subr.mxu0 0.0
    %562 = vmatpush1.msra.mxu0 0.0
    %563 = vmatprep.subr.mxu0 0.0
    %564 = vmatpush1.msra.mxu0 0.0
    %565 = vmatprep.subr.mxu0 0.0
    %566 = vmatpush1.msra.mxu0 0.0
    %567 = vmatprep.subr.mxu0 0.0
    %568 = vmatpush1.msra.mxu0 0.0
    %569 = vmatprep.subr.mxu0 0.0
    %570 = vmatpush1.msra.mxu0 0.0
    %571 = vmatprep.subr.mxu0 0.0
    %572 = vmatpush1.msra.mxu0 0.0
    %573 = vmatprep.subr.mxu0 0.0
    %574 = vmatpush1.msra.mxu0 0.0
    %575 = vmatprep.subr.mxu0 0.0
    %576 = vmatpush1.msra.mxu0 0.0
    %577 = vmatprep.subr.mxu0 0.0
    %578 = vmatpush1.msra.mxu0 0.0
    %579 = vmatprep.subr.mxu0 0.0
    %580 = vmatpush1.msra.mxu0 0.0
    %581 = vmatprep.subr.mxu0 0.0
    %582 = vmatpush1.msra.mxu0 0.0
    %583 = vmatprep.subr.mxu0 0.0
    %584 = vmatpush1.msra.mxu0 0.0
    %585 = vmatprep.subr.mxu0 0.0
    %586 = vmatpush1.msra.mxu0 0.0
    %587 = vmatprep.subr.mxu0 0.0
    %588 = vmatpush1.msra.mxu0 0.0
    %589 = vmatprep.subr.mxu0 0.0
    %590 = vmatpush1.msra.mxu0 0.0
    %591 = vmatprep.subr.mxu0 0.0
    %592 = vmatpush1.msra.mxu0 0.0
    %593 = vmatprep.subr.mxu0 0.0
    %594 = vmatpush1.msra.mxu0 0.0
    %595 = vmatprep.subr.mxu0 0.0
    %596 = vmatpush1.msra.mxu0 0.0
    %597 = vmatprep.subr.mxu0 0.0
    %598 = vmatpush1.msra.mxu0 0.0
    %599 = vmatprep.subr.mxu0 0.0
    %600 = vmatpush1.msra.mxu0 0.0
    %601 = vmatprep.subr.mxu0 0.0
    %602 = vmatpush1.msra.mxu0 0.0
    %603 = vmatprep.subr.mxu0 0.0
    %604 = vmatpush1.msra.mxu0 0.0
    %605 = vmatprep.subr.mxu0 0.0
    %606 = vmatpush1.msra.mxu0 0.0
    %607 = vmatprep.subr.mxu0 0.0
    %608 = vmatpush1.msra.mxu0 0.0
    %609 = vmatprep.subr.mxu0 0.0
    %610 = vmatpush1.msra.mxu0 0.0
    %611 = vmatprep.mubr.f32.mxu0 0.0
    %612 = vmatmul.mubr.f32.gmra.mrb[0].mxu0 %v537
    %v613 = vpop.f32.mrb[0].mxu0
    %v614 = vadd.f32 %v525, %v613
    %v615 = vpop.f32.mrb[0].mxu0
    %v616 = vadd.f32 %v527, %v615
    %617 = vmatprep.mubr.f32.mxu0 0.0
    %618 = vmatmul.mubr.f32.gmra.mrb[0].mxu0 %v540
    %v619 = vpop.f32.mrb[0].mxu0
    %v620 = vadd.f32 %v529, %v619
    %v621 = vpop.f32.mrb[0].mxu0
    %v622 = vadd.f32 %v531, %v621
    %623 = vdwg.mxu0
    %v624 = vld [vmem:[%s6] sm:$0x3]
    %v626 = vlaneseq
    %v627 = vshrl.u32 %v626, 7
    %v628 = vsub.s32 0, %v627
    %v629 = vrot.slane %v624, %v628
    %v630 = vlaneseq
    %v631 = vshrl.u32 %v630, 7
    %v632 = vsub.s32 1, %v631
    %v633 = vrot.slane %v624, %v632
    %v636 = vadd.f32 %v614, %v629
    %v637 = vadd.f32 %v616, %v633
    %v638 = vadd.f32 %v620, %v629
    %v639 = vadd.f32 %v622, %v633
    %v640 = vmax.f32 %v636, 0.0
    %v641 = vmax.f32 %v637, 0.0
    %v642 = vmax.f32 %v638, 0.0
    %v643 = vmax.f32 %v639, 0.0
    %v644 = vpack.c.bf16 %v642, %v640
    %v645 = vpack.c.bf16 %v643, %v641
    %v646 = vld [vmem:[%s7] sm:$0xff]
    %v647 = vld [vmem:[%s7 + $0x8] sm:$0xf]
    %v648 = vld [vmem:[%s7 + $0xc] sm:$0xff]
    %v649 = vld [vmem:[%s7 + $0x14] sm:$0xf]
    %v650 = vld [vmem:[%s7 + $0x18] sm:$0xff]
    %v651 = vld [vmem:[%s7 + $0x20] sm:$0xf]
    %v652 = vld [vmem:[%s7 + $0x24] sm:$0xff]
    %v653 = vld [vmem:[%s7 + $0x2c] sm:$0xf]
    %v654 = vld [vmem:[%s7 + $0x30] sm:$0xff]
    %v655 = vld [vmem:[%s7 + $0x38] sm:$0xf]
    %v656 = vld [vmem:[%s7 + $0x3c] sm:$0xff]
    %v657 = vld [vmem:[%s7 + $0x44] sm:$0xf]
    %v658 = vld [vmem:[%s7 + $0x48] sm:$0xff]
    %v659 = vld [vmem:[%s7 + $0x50] sm:$0xf]
    %v660 = vld [vmem:[%s7 + $0x54] sm:$0xff]
    %v661 = vld [vmem:[%s7 + $0x5c] sm:$0xf]
    %v662 = vld [vmem:[%s7 + $0x60] sm:$0xff]
    %v663 = vld [vmem:[%s7 + $0x68] sm:$0xf]
    %v664 = vld [vmem:[%s7 + $0x6c] sm:$0xff]
    %v665 = vld [vmem:[%s7 + $0x74] sm:$0xf]
    %v666 = vld [vmem:[%s7 + $0x78] sm:$0xff]
    %v667 = vld [vmem:[%s7 + $0x80] sm:$0xf]
    %v668 = vld [vmem:[%s7 + $0x84] sm:$0xff]
    %v669 = vld [vmem:[%s7 + $0x8c] sm:$0xf]
    %v670 = vld [vmem:[%s7 + $0x90] sm:$0xff]
    %v671 = vld [vmem:[%s7 + $0x98] sm:$0xf]
    %v672 = vld [vmem:[%s7 + $0x9c] sm:$0xff]
    %v673 = vld [vmem:[%s7 + $0xa4] sm:$0xf]
    %v674 = vld [vmem:[%s7 + $0xa8] sm:$0xff]
    %v675 = vld [vmem:[%s7 + $0xb0] sm:$0xf]
    %v676 = vld [vmem:[%s7 + $0xb4] sm:$0xff]
    %v677 = vld [vmem:[%s7 + $0xbc] sm:$0xf]
    %v678 = vld [vmem:[%s7 + $0xc0] sm:$0xff]
    %v679 = vld [vmem:[%s7 + $0xc8] sm:$0xf]
    %v680 = vld [vmem:[%s7 + $0xcc] sm:$0xff]
    %v681 = vld [vmem:[%s7 + $0xd4] sm:$0xf]
    %v682 = vld [vmem:[%s7 + $0xd8] sm:$0xff]
    %v683 = vld [vmem:[%s7 + $0xe0] sm:$0xf]
    %v684 = vld [vmem:[%s7 + $0xe4] sm:$0xff]
    %v685 = vld [vmem:[%s7 + $0xec] sm:$0xf]
    %v686 = vld [vmem:[%s7 + $0xf0] sm:$0xff]
    %v687 = vld [vmem:[%s7 + $0xf8] sm:$0xf]
    %v688 = vld [vmem:[%s7 + $0xfc] sm:$0xff]
    %v689 = vld [vmem:[%s7 + $0x104] sm:$0xf]
    %v690 = vld [vmem:[%s7 + $0x108] sm:$0xff]
    %v691 = vld [vmem:[%s7 + $0x110] sm:$0xf]
    %v692 = vld [vmem:[%s7 + $0x114] sm:$0xff]
    %v693 = vld [vmem:[%s7 + $0x11c] sm:$0xf]
    %v694 = vld [vmem:[%s7 + $0x120] sm:$0xff]
    %v695 = vld [vmem:[%s7 + $0x128] sm:$0xf]
    %v696 = vld [vmem:[%s7 + $0x12c] sm:$0xff]
    %v697 = vld [vmem:[%s7 + $0x134] sm:$0xf]
    %v698 = vld [vmem:[%s7 + $0x138] sm:$0xff]
    %v699 = vld [vmem:[%s7 + $0x140] sm:$0xf]
    %v700 = vld [vmem:[%s7 + $0x144] sm:$0xff]
    %v701 = vld [vmem:[%s7 + $0x14c] sm:$0xf]
    %v702 = vld [vmem:[%s7 + $0x150] sm:$0xff]
    %v703 = vld [vmem:[%s7 + $0x158] sm:$0xf]
    %v704 = vld [vmem:[%s7 + $0x15c] sm:$0xff]
    %v705 = vld [vmem:[%s7 + $0x164] sm:$0xf]
    %v706 = vld [vmem:[%s7 + $0x168] sm:$0xff]
    %v707 = vld [vmem:[%s7 + $0x170] sm:$0xf]
    %v708 = vld [vmem:[%s7 + $0x174] sm:$0xff]
    %v709 = vld [vmem:[%s7 + $0x17c] sm:$0xf]
    %v710 = vld [vmem:[%s8] sm:$0x7]
    %v712 = vlaneseq
    %v713 = vshrl.u32 %v712, 7
    %v714 = vsub.s32 0, %v713
    %v715 = vrot.slane %v710, %v714
    %v716 = vlaneseq
    %v717 = vshrl.u32 %v716, 7
    %v718 = vsub.s32 1, %v717
    %v719 = vrot.slane %v710, %v718
    %v720 = vlaneseq
    %v721 = vshrl.u32 %v720, 7
    %v722 = vsub.s32 2, %v721
    %v723 = vrot.slane %v710, %v722
    %v791 = vunpack.c.l.b16 %v646
    %v792 = vunpack.c.h.b16 %v646
    %v793 = vunpack.c.l.b16 %v647
    %v794 = vunpack.c.l.b16 %v648
    %v795 = vunpack.c.h.b16 %v648
    %v796 = vunpack.c.l.b16 %v649
    %v797 = vunpack.c.l.b16 %v650
    %v798 = vunpack.c.h.b16 %v650
    %v799 = vunpack.c.l.b16 %v651
    %v800 = vunpack.c.l.b16 %v652
    %v801 = vunpack.c.h.b16 %v652
    %v802 = vunpack.c.l.b16 %v653
    %v803 = vunpack.c.l.b16 %v654
    %v804 = vunpack.c.h.b16 %v654
    %v805 = vunpack.c.l.b16 %v655
    %v806 = vunpack.c.l.b16 %v656
    %v807 = vunpack.c.h.b16 %v656
    %v808 = vunpack.c.l.b16 %v657
    %v809 = vunpack.c.l.b16 %v658
    %v810 = vunpack.c.h.b16 %v658
    %v811 = vunpack.c.l.b16 %v659
    %v812 = vunpack.c.l.b16 %v660
    %v813 = vunpack.c.h.b16 %v660
    %v814 = vunpack.c.l.b16 %v661
    %v815 = vunpack.c.l.b16 %v662
    %v816 = vunpack.c.h.b16 %v662
    %v817 = vunpack.c.l.b16 %v663
    %v818 = vunpack.c.l.b16 %v664
    %v819 = vunpack.c.h.b16 %v664
    %v820 = vunpack.c.l.b16 %v665
    %v821 = vunpack.c.l.b16 %v666
    %v822 = vunpack.c.h.b16 %v666
    %v823 = vunpack.c.l.b16 %v667
    %v824 = vunpack.c.l.b16 %v668
    %v825 = vunpack.c.h.b16 %v668
    %v826 = vunpack.c.l.b16 %v669
    %v827 = vunpack.c.l.b16 %v670
    %v828 = vunpack.c.h.b16 %v670
    %v829 = vunpack.c.l.b16 %v671
    %v830 = vunpack.c.l.b16 %v672
    %v831 = vunpack.c.h.b16 %v672
    %v832 = vunpack.c.l.b16 %v673
    %v833 = vunpack.c.l.b16 %v674
    %v834 = vunpack.c.h.b16 %v674
    %v835 = vunpack.c.l.b16 %v675
    %v836 = vunpack.c.l.b16 %v676
    %v837 = vunpack.c.h.b16 %v676
    %v838 = vunpack.c.l.b16 %v677
    %v839 = vunpack.c.l.b16 %v678
    %v840 = vunpack.c.h.b16 %v678
    %v841 = vunpack.c.l.b16 %v679
    %v842 = vunpack.c.l.b16 %v680
    %v843 = vunpack.c.h.b16 %v680
    %v844 = vunpack.c.l.b16 %v681
    %v845 = vunpack.c.l.b16 %v682
    %v846 = vunpack.c.h.b16 %v682
    %v847 = vunpack.c.l.b16 %v683
    %v848 = vunpack.c.l.b16 %v684
    %v849 = vunpack.c.h.b16 %v684
    %v850 = vunpack.c.l.b16 %v685
    %v851 = vunpack.c.l.b16 %v686
    %v852 = vunpack.c.h.b16 %v686
    %v853 = vunpack.c.l.b16 %v687
    %v854 = vunpack.c.l.b16 %v688
    %v855 = vunpack.c.h.b16 %v688
    %v856 = vunpack.c.l.b16 %v689
    %v857 = vunpack.c.l.b16 %v690
    %v858 = vunpack.c.h.b16 %v690
    %v859 = vunpack.c.l.b16 %v691
    %v860 = vunpack.c.l.b16 %v692
    %v861 = vunpack.c.h.b16 %v692
    %v862 = vunpack.c.l.b16 %v693
    %v863 = vunpack.c.l.b16 %v694
    %v864 = vunpack.c.h.b16 %v694
    %v865 = vunpack.c.l.b16 %v695
    %v866 = vunpack.c.l.b16 %v696
    %v867 = vunpack.c.h.b16 %v696
    %v868 = vunpack.c.l.b16 %v697
    %v869 = vunpack.c.l.b16 %v698
    %v870 = vunpack.c.h.b16 %v698
    %v871 = vunpack.c.l.b16 %v699
    %v872 = vunpack.c.l.b16 %v700
    %v873 = vunpack.c.h.b16 %v700
    %v874 = vunpack.c.l.b16 %v701
    %v875 = vunpack.c.l.b16 %v702
    %v876 = vunpack.c.h.b16 %v702
    %v877 = vunpack.c.l.b16 %v703
    %v878 = vunpack.c.l.b16 %v704
    %v879 = vunpack.c.h.b16 %v704
    %v880 = vunpack.c.l.b16 %v705
    %v881 = vunpack.c.l.b16 %v706
    %v882 = vunpack.c.h.b16 %v706
    %v883 = vunpack.c.l.b16 %v707
    %v884 = vunpack.c.l.b16 %v708
    %v885 = vunpack.c.h.b16 %v708
    %v886 = vunpack.c.l.b16 %v709
    %v887 = vpack.c.b16 %v794, %v791
    %v888 = vpack.c.b16 %v795, %v792
    %v889 = vpack.c.b16 %v796, %v793
    %v890 = vpack.c.b16 %v800, %v797
    %v891 = vpack.c.b16 %v801, %v798
    %v892 = vpack.c.b16 %v802, %v799
    %v893 = vpack.c.b16 %v806, %v803
    %v894 = vpack.c.b16 %v807, %v804
    %v895 = vpack.c.b16 %v808, %v805
    %v896 = vpack.c.b16 %v812, %v809
    %v897 = vpack.c.b16 %v813, %v810
    %v898 = vpack.c.b16 %v814, %v811
    %v899 = vpack.c.b16 %v818, %v815
    %v900 = vpack.c.b16 %v819, %v816
    %v901 = vpack.c.b16 %v820, %v817
    %v902 = vpack.c.b16 %v824, %v821
    %v903 = vpack.c.b16 %v825, %v822
    %v904 = vpack.c.b16 %v826, %v823
    %v905 = vpack.c.b16 %v830, %v827
    %v906 = vpack.c.b16 %v831, %v828
    %v907 = vpack.c.b16 %v832, %v829
    %v908 = vpack.c.b16 %v836, %v833
    %v909 = vpack.c.b16 %v837, %v834
    %v910 = vpack.c.b16 %v838, %v835
    %v911 = vpack.c.b16 %v842, %v839
    %v912 = vpack.c.b16 %v843, %v840
    %v913 = vpack.c.b16 %v844, %v841
    %v914 = vpack.c.b16 %v848, %v845
    %v915 = vpack.c.b16 %v849, %v846
    %v916 = vpack.c.b16 %v850, %v847
    %v917 = vpack.c.b16 %v854, %v851
    %v918 = vpack.c.b16 %v855, %v852
    %v919 = vpack.c.b16 %v856, %v853
    %v920 = vpack.c.b16 %v860, %v857
    %v921 = vpack.c.b16 %v861, %v858
    %v922 = vpack.c.b16 %v862, %v859
    %v923 = vpack.c.b16 %v866, %v863
    %v924 = vpack.c.b16 %v867, %v864
    %v925 = vpack.c.b16 %v868, %v865
    %v926 = vpack.c.b16 %v872, %v869
    %v927 = vpack.c.b16 %v873, %v870
    %v928 = vpack.c.b16 %v874, %v871
    %v929 = vpack.c.b16 %v878, %v875
    %v930 = vpack.c.b16 %v879, %v876
    %v931 = vpack.c.b16 %v880, %v877
    %v932 = vpack.c.b16 %v884, %v881
    %v933 = vpack.c.b16 %v885, %v882
    %v934 = vpack.c.b16 %v886, %v883
    %983 = vmatprep.subr.bf16.mxu0 %v888
    %984 = vmatpush1.bf16.msra.mxu0 %v887
    %985 = vmatprep.subr.bf16.mxu0 %v891
    %986 = vmatpush1.bf16.msra.mxu0 %v890
    %987 = vmatprep.subr.bf16.mxu0 %v894
    %988 = vmatpush1.bf16.msra.mxu0 %v893
    %989 = vmatprep.subr.bf16.mxu0 %v897
    %990 = vmatpush1.bf16.msra.mxu0 %v896
    %991 = vmatprep.subr.bf16.mxu0 %v900
    %992 = vmatpush1.bf16.msra.mxu0 %v899
    %993 = vmatprep.subr.bf16.mxu0 %v903
    %994 = vmatpush1.bf16.msra.mxu0 %v902
    %995 = vmatprep.subr.bf16.mxu0 %v906
    %996 = vmatpush1.bf16.msra.mxu0 %v905
    %997 = vmatprep.subr.bf16.mxu0 %v909
    %998 = vmatpush1.bf16.msra.mxu0 %v908
    %999 = vmatprep.subr.bf16.mxu0 %v912
    %1000 = vmatpush1.bf16.msra.mxu0 %v911
    %1001 = vmatprep.subr.bf16.mxu0 %v915
    %1002 = vmatpush1.bf16.msra.mxu0 %v914
    %1003 = vmatprep.subr.bf16.mxu0 %v918
    %1004 = vmatpush1.bf16.msra.mxu0 %v917
    %1005 = vmatprep.subr.bf16.mxu0 %v921
    %1006 = vmatpush1.bf16.msra.mxu0 %v920
    %1007 = vmatprep.subr.bf16.mxu0 %v924
    %1008 = vmatpush1.bf16.msra.mxu0 %v923
    %1009 = vmatprep.subr.bf16.mxu0 %v927
    %1010 = vmatpush1.bf16.msra.mxu0 %v926
    %1011 = vmatprep.subr.bf16.mxu0 %v930
    %1012 = vmatpush1.bf16.msra.mxu0 %v929
    %1013 = vmatprep.subr.bf16.mxu0 %v933
    %1014 = vmatpush1.bf16.msra.mxu0 %v932
    %1015 = vmatprep.mubr.bf16.mxu0 %v645
    %1016 = vmatmul.mubr.bf16.gmra.mrb[0].mxu0 %v644
    %v1017 = vpop.f32.mrb[0].mxu0
    %v1018 = vadd.f32 %v715, %v1017
    %v1019 = vpop.f32.mrb[0].mxu0
    %v1020 = vadd.f32 %v719, %v1019
    %v1021 = vpop.f32.mrb[0].mxu0
    %v1022 = vadd.f32 %v715, %v1021
    %v1023 = vpop.f32.mrb[0].mxu0
    %v1024 = vadd.f32 %v719, %v1023
    %1025 = vdwg.mxu0
    %1026 = vmatprep.subr.bf16.mxu0 0
    %1027 = vmatpush1.bf16.msra.mxu0 %v889
    %1028 = vmatprep.subr.bf16.mxu0 0
    %1029 = vmatpush1.bf16.msra.mxu0 %v892
    %1030 = vmatprep.subr.bf16.mxu0 0
    %1031 = vmatpush1.bf16.msra.mxu0 %v895
    %1032 = vmatprep.subr.bf16.mxu0 0
    %1033 = vmatpush1.bf16.msra.mxu0 %v898
    %1034 = vmatprep.subr.bf16.mxu0 0
    %1035 = vmatpush1.bf16.msra.mxu0 %v901
    %1036 = vmatprep.subr.bf16.mxu0 0
    %1037 = vmatpush1.bf16.msra.mxu0 %v904
    %1038 = vmatprep.subr.bf16.mxu0 0
    %1039 = vmatpush1.bf16.msra.mxu0 %v907
    %1040 = vmatprep.subr.bf16.mxu0 0
    %1041 = vmatpush1.bf16.msra.mxu0 %v910
    %1042 = vmatprep.subr.bf16.mxu0 0
    %1043 = vmatpush1.bf16.msra.mxu0 %v913
    %1044 = vmatprep.subr.bf16.mxu0 0
    %1045 = vmatpush1.bf16.msra.mxu0 %v916
    %1046 = vmatprep.subr.bf16.mxu0 0
    %1047 = vmatpush1.bf16.msra.mxu0 %v919
    %1048 = vmatprep.subr.bf16.mxu0 0
    %1049 = vmatpush1.bf16.msra.mxu0 %v922
    %1050 = vmatprep.subr.bf16.mxu0 0
    %1051 = vmatpush1.bf16.msra.mxu0 %v925
    %1052 = vmatprep.subr.bf16.mxu0 0
    %1053 = vmatpush1.bf16.msra.mxu0 %v928
    %1054 = vmatprep.subr.bf16.mxu0 0
    %1055 = vmatpush1.bf16.msra.mxu0 %v931
    %1056 = vmatprep.subr.bf16.mxu0 0
    %1057 = vmatpush1.bf16.msra.mxu0 %v934
    %1058 = vmatprep.mubr.bf16.mxu0 %v645
    %1059 = vmatmul.mubr.bf16.gmra.mrb[0].mxu0 %v644
    %v1060 = vpop.f32.mrb[0].mxu0
    %v1061 = vadd.f32 %v723, %v1060
    %v1062 = vpop.f32.mrb[0].mxu0
    %v1063 = vpop.f32.mrb[0].mxu0
    %v1064 = vadd.f32 %v723, %v1063
    %v1065 = vpop.f32.mrb[0].mxu0
    %1066 = vdwg.mxu0
    %v1067 = vmax.f32 %v1018, 0.0
    %v1068 = vmax.f32 %v1020, 0.0
    %v1069 = vmax.f32 %v1061, 0.0
    %v1070 = vmax.f32 %v1022, 0.0
    %v1071 = vmax.f32 %v1024, 0.0
    %v1072 = vmax.f32 %v1064, 0.0
    %v1073 = vpack.c.bf16 %v1070, %v1067
    %v1074 = vpack.c.bf16 %v1071, %v1068
    %v1075 = vpack.c.bf16 %v1072, %v1069
    %v1079 = vunpack.c.l.b16 %v1073
    %v1080 = vunpack.c.l.b16 %v1074
    %v1081 = vunpack.c.l.b16 %v1075
    %v1082 = vunpack.c.h.b16 %v1073
    %v1083 = vunpack.c.h.b16 %v1074
    %v1084 = vunpack.c.h.b16 %v1075
    %v1085 = vpack.c.b16 %v1080, %v1079
    %v1086 = vpack.c.b16 %v1081, %v1081
    %v1087 = vpack.c.b16 %v1083, %v1082
    %v1088 = vpack.c.b16 %v1084, %v1084
    %1093 = vst [vmem:[#allocation2] sm:$0xff] %v1085
    %1094 = vst [vmem:[#allocation2 + $0x8] sm:$0xf] %v1086
    %1095 = vst [vmem:[#allocation2 + $0xc] sm:$0xff] %v1087
    %1096 = vst [vmem:[#allocation2 + $0x14] sm:$0xf] %v1088
    // Predicated region
    $region38: #{noise_aware_feature_extractor.5} parent=1 // pred_check
      _
    $region39: #{noise_aware_feature_extractor.5} parent=1 // pred_check_branch
      %1098 = sbr.rel (0) target = $region41
    $region40: #{noise_aware_feature_extractor.5} parent=1 // pred_region
      %s1100 = ssub.s32 384, 384
      %1101 = vsyncadd [#allocation3], %s1100
      %s1102 = sshll.u32 [#allocation2], 4
      %s1103 = int_to_ptr.vmem [resolvable:$true] %s1102
      %1108 = dma.vmem_to_hbm [thread:$0]  %s1103, 384, %s9, [#allocation3], 192, 192, 12
    $region41: #{noise_aware_feature_extractor.5} parent=1 // pred_fallthru
      _
    // Predicated region
    $region42: #{noise_aware_feature_extractor.5} parent=1 // pred_check
      _
    $region43: #{noise_aware_feature_extractor.5} parent=1 // pred_check_branch
      %1110 = sbr.rel (0) target = $region45
    $region44: #{noise_aware_feature_extractor.5} parent=1 // pred_region
      %1111 = dma.done [#allocation3], 384
    $region45: #{noise_aware_feature_extractor.5} parent=1 // pred_fallthru
      _
    %1112 = vsyncpa [#allocation3], 1

// kernel: noise_aware_feature_extractor.7
$region0: #{noise_aware_feature_extractor.7}
  #allocation0 [shape = 'u32[]', space=smem, size = 0x4, offset = 0x4, fixed_abs, tag = 'smem constant byte address 0x4 - core index']
  #allocation1 [shape = 'u32[144,128]{1,0:T(1,128)}', space=vmem, size = 0x12000, scoped, tag = 'internal scratch']
  #allocation2 [shape = 'f32[1,512]{1,0:T(1,128)}', space=vmem, size = 0x800, scoped, tag = 'scratch operand']
  %s0 = inlined_call_operand.vmem [shape: bf16[2,2,384], index: 0, kind: input, shape index: {}]
  %s1 = inlined_call_operand.vmem [shape: bf16[384,512], index: 1, kind: input, shape index: {}]
  %s2 = inlined_call_operand.vmem [shape: f32[1,512], index: 2, kind: input, shape index: {}]
  %s3 = inlined_call_operand.vmem [shape: f32[2,1,512], index: 3, kind: output, shape index: {}]
  %s4 = sld [smem:[#allocation0]]
  $region53: #{noise_aware_feature_extractor.7} parent=0
    _
  %s6 = ssub.s32 1, %s4
  %s7 = scalar_select 0, %s6, %s4
  loop: start=0, step=1, limit=4
  $region2: #{noise_aware_feature_extractor.7} parent=0 // loop_pre_header
    _
  $region3: #{noise_aware_feature_extractor.7} parent=0 // loop_header
    %s9 = sphi 0, %s13
    %p10 = scmp.ge.s32.totalorder %s9, 4
    %s16 = sphi 0, %s28
    %s17 = sphi 0, %s24
    %s18 = sphi 0, %s16
    %s19 = sphi 0, %s17
    %s20 = sphi 0, %s18
    %s21 = sphi 0, %s19
    %s33 = sphi 0, %s35
    %s36 = sphi 0, %s33
    %s37 = sphi 0, %s36
    %s53 = sphi 0, %s37
    %s57 = sphi 0, %s57
    %s59 = sphi 0, %s57
    %s60 = sphi 0, %s59
    %s74 = sphi 0, %s60
    %s78 = sphi 0, %s78
    %s80 = sphi 0, %s78
    %s81 = sphi 0, %s80
    %s95 = sphi 0, %s81
    %s101 = sphi 0, %s103
    %s104 = sphi 0, %s101
    %s105 = sphi 0, %s104
    %s121 = sphi 0, %s105
  $region4: #{noise_aware_feature_extractor.7} parent=0 // loop_header_branch
    %12 = sbr.rel (%p10) target = $region8
  $region5: #{noise_aware_feature_extractor.7} parent=0 // loop_body
    %s14 = ssub.s32 %s9, 1
    %s15 = ssub.s32 %s9, 2
    %s22 = sadd.s32 1, %s17
    %p23 = scmp.ge.s32.totalorder %s22, 1
    %s24 = scalar_select %p23, 0, %s22
    %s25 = sadd.s32 1, %s16
    %s26 = scalar_select %p23, %s25, %s16
    %p27 = scmp.ge.s32.totalorder %s26, 2
    %s28 = scalar_select %p27, 0, %s26
    %s29 = ssub.s32 %s16, %s28
    %s30 = ssub.s32 %s17, %s24
    %s31 = sor.u32 %s29, %s30
    %p32 = scmp.eq.s32.totalorder %s31, 0
    %s34 = sadd.s32 %s33, 1
    %s35 = scalar_select %p32, %s33, %s34
    %p38 = pneg %p32
    %p39 = scmp.eq.s32.totalorder %s9, 1
    %p40 = por %p38, %p39
    %p41 = scmp.ne.s32.totalorder %s33, %s36
    %p42 = scmp.eq.s32.totalorder %s9, 0
    %p43 = por %p41, %p42
    %p44 = scmp.ne.s32.totalorder %s33, %s36
    %p45 = scmp.eq.s32.totalorder %s14, 1
    %p46 = por %p44, %p45
    %p47 = scmp.ne.s32.totalorder %s36, %s37
    %p48 = scmp.eq.s32.totalorder %s14, 0
    %p49 = por %p47, %p48
    %p50 = scmp.ne.s32.totalorder %s36, %s37
    %p51 = scmp.eq.s32.totalorder %s15, 1
    %p52 = por %p50, %p51
    %p54 = scmp.ne.s32.totalorder %s37, %s53
    %p55 = scmp.eq.s32.totalorder %s15, 0
    %p56 = por %p54, %p55
    %s58 = sadd.s32 %s57, 1
    %p61 = scmp.eq.s32.totalorder %s9, 1
    %p62 = scmp.ne.s32.totalorder %s57, %s59
    %p63 = scmp.eq.s32.totalorder %s9, 0
    %p64 = por %p62, %p63
    %p65 = scmp.ne.s32.totalorder %s57, %s59
    %p66 = scmp.eq.s32.totalorder %s14, 1
    %p67 = por %p65, %p66
    %p68 = scmp.ne.s32.totalorder %s59, %s60
    %p69 = scmp.eq.s32.totalorder %s14, 0
    %p70 = por %p68, %p69
    %p71 = scmp.ne.s32.totalorder %s59, %s60
    %p72 = scmp.eq.s32.totalorder %s15, 1
    %p73 = por %p71, %p72
    %p75 = scmp.ne.s32.totalorder %s60, %s74
    %p76 = scmp.eq.s32.totalorder %s15, 0
    %p77 = por %p75, %p76
    %s79 = sadd.s32 %s78, 1
    %p82 = scmp.eq.s32.totalorder %s9, 1
    %p83 = scmp.ne.s32.totalorder %s78, %s80
    %p84 = scmp.eq.s32.totalorder %s9, 0
    %p85 = por %p83, %p84
    %p86 = scmp.ne.s32.totalorder %s78, %s80
    %p87 = scmp.eq.s32.totalorder %s14, 1
    %p88 = por %p86, %p87
    %p89 = scmp.ne.s32.totalorder %s80, %s81
    %p90 = scmp.eq.s32.totalorder %s14, 0
    %p91 = por %p89, %p90
    %p92 = scmp.ne.s32.totalorder %s80, %s81
    %p93 = scmp.eq.s32.totalorder %s15, 1
    %p94 = por %p92, %p93
    %p96 = scmp.ne.s32.totalorder %s81, %s95
    %p97 = scmp.eq.s32.totalorder %s15, 0
    %p98 = por %p96, %p97
    %s99 = ssub.s32 %s16, %s28
    %p100 = scmp.eq.s32.totalorder %s99, 0
    %s102 = sadd.s32 %s101, 1
    %s103 = scalar_select %p100, %s101, %s102
    %p106 = pneg %p100
    %p107 = scmp.eq.s32.totalorder %s9, 1
    %p108 = por %p106, %p107
    %p109 = scmp.ne.s32.totalorder %s101, %s104
    %p110 = scmp.eq.s32.totalorder %s9, 0
    %p111 = por %p109, %p110
    %p112 = scmp.ne.s32.totalorder %s101, %s104
    %p113 = scmp.eq.s32.totalorder %s14, 1
    %p114 = por %p112, %p113
    %p115 = scmp.ne.s32.totalorder %s104, %s105
    %p116 = scmp.eq.s32.totalorder %s14, 0
    %p117 = por %p115, %p116
    %p118 = scmp.ne.s32.totalorder %s104, %s105
    %p119 = scmp.eq.s32.totalorder %s15, 1
    %p120 = por %p118, %p119
    %p122 = scmp.ne.s32.totalorder %s105, %s121
    %p123 = scmp.eq.s32.totalorder %s15, 0
    %p124 = por %p122, %p123
    %p125 = scmp.le.s32.totalorder 1, %s9
    %p126 = scmp.lt.s32.totalorder %s9, 3
    %p127 = pnand %p125, %p126
    %p128 = pneg %p127
    // Predicated region
    $region9: #{noise_aware_feature_extractor.7} parent=5 // pred_check
      _
    $region10: #{noise_aware_feature_extractor.7} parent=5 // pred_check_branch
      %130 = sbr.rel (%p127) target = $region12
    $region11: #{noise_aware_feature_extractor.7} parent=5 // pred_region
      %s131 = ssub.s32 %s9, 1
      // Predicated region
      $region13: #{noise_aware_feature_extractor.7} parent=11 // pred_check
        %p132 = pneg %p70
      $region14: #{noise_aware_feature_extractor.7} parent=11 // pred_check_branch
        %134 = sbr.rel (%p132) target = $region16
      $region15: #{noise_aware_feature_extractor.7} parent=11 // pred_region
        _
      $region16: #{noise_aware_feature_extractor.7} parent=11 // pred_fallthru
        _
      // Predicated region
      $region17: #{noise_aware_feature_extractor.7} parent=11 // pred_check
        %p135 = pneg %p91
      $region18: #{noise_aware_feature_extractor.7} parent=11 // pred_check_branch
        %137 = sbr.rel (%p135) target = $region20
      $region19: #{noise_aware_feature_extractor.7} parent=11 // pred_region
        _
      $region20: #{noise_aware_feature_extractor.7} parent=11 // pred_fallthru
        _
    $region12: #{noise_aware_feature_extractor.7} parent=5 // pred_fallthru
      _
    %p138 = scmp.lt.s32.totalorder %s9, 2
    // Predicated region
    $region21: #{noise_aware_feature_extractor.7} parent=5 // pred_check
      %p139 = pneg %p138
    $region22: #{noise_aware_feature_extractor.7} parent=5 // pred_check_branch
      %141 = sbr.rel (%p139) target = $region24
    $region23: #{noise_aware_feature_extractor.7} parent=5 // pred_region
      // Predicated region
      $region25: #{noise_aware_feature_extractor.7} parent=23 // pred_check
        %p142 = pneg %p43
      $region26: #{noise_aware_feature_extractor.7} parent=23 // pred_check_branch
        %144 = sbr.rel (%p142) target = $region28
      $region27: #{noise_aware_feature_extractor.7} parent=23 // pred_region
        %p145 = scmp.lt.s32.totalorder %s16, 1
        %s146 = scalar_select %p145, %s16, 1
        %p147 = scmp.lt.s32.totalorder %s17, 0
        %s148 = scalar_select %p147, %s17, 0
        %s149 = smul.addr %s148, 3
        %s150 = smul.addr %s146, 3
        %s151 = sadd.s32 %s149, %s150
        %s152 = scalar_lea.vmem %s0, %s151
      $region28: #{noise_aware_feature_extractor.7} parent=23 // pred_fallthru
        _
    $region24: #{noise_aware_feature_extractor.7} parent=5 // pred_fallthru
      _
    %p153 = scmp.le.s32.totalorder 1, %s9
    %p154 = scmp.lt.s32.totalorder %s9, 3
    %p155 = pnand %p153, %p154
    %p156 = pneg %p155
    // Predicated region
    $region29: #{noise_aware_feature_extractor.7} parent=5 // pred_check
      _
    $region30: #{noise_aware_feature_extractor.7} parent=5 // pred_check_branch
      %158 = sbr.rel (%p155) target = $region32
    $region31: #{noise_aware_feature_extractor.7} parent=5 // pred_region
      %s159 = ssub.s32 %s9, 1
      %p160 = scmp.lt.s32.totalorder %s18, 1
      %s161 = scalar_select %p160, %s18, 1
      %p162 = scmp.lt.s32.totalorder %s19, 0
      %s163 = scalar_select %p162, %s19, 0
      %s164 = smul.addr %s163, 3
      %s165 = smul.addr %s161, 3
      %s166 = sadd.s32 %s164, %s165
      %s167 = scalar_lea.vmem %s0, %s166
      %p168 = pneg %p49
      %p169 = pneg %p46
      %p170 = pneg %p70
      %p171 = pneg %p67
      %p172 = pneg %p91
      %p173 = pneg %p88
      %p174 = pneg %p117
      %p175 = pneg %p114
      %p176 = scmp.lt.s32.totalorder %s18, 1
      %s177 = scalar_select %p176, %s18, 1
      %s178 = smul.addr %s177, 4
      %s179 = scalar_lea.vmem %s3, %s178
      %p180 = scmp.lt.s32.totalorder %s18, 1
      %s181 = scalar_select %p180, %s18, 1
      %p182 = scmp.lt.s32.totalorder %s19, 0
      %s183 = scalar_select %p182, %s19, 0
      %s184 = smul.addr %s183, 3
      %s185 = smul.addr %s181, 3
      %s186 = sadd.s32 %s184, %s185
      %s187 = scalar_lea.vmem %s0, %s186
      %p188 = scmp.lt.s32.totalorder %s18, 1
      %s189 = scalar_select %p188, %s18, 1
      %s190 = smul.addr %s189, 4
      %s191 = scalar_lea.vmem %s3, %s190
      %p193 = scmp.eq.s32.totalorder %s19, 0
      // Predicated region
      $region33: #{noise_aware_feature_extractor.7} parent=31 // pred_check
        %p194 = pneg %p193
      $region34: #{noise_aware_feature_extractor.7} parent=31 // pred_check_branch
        %196 = sbr.rel (%p194) target = $region36
      $region35: #{noise_aware_feature_extractor.7} parent=31 // pred_region
        %v197 = vlaneseq
        %vm198 = vcmp.ge.s32.totalorder %v197, 0
        %vm199 = vcmp.lt.s32.totalorder %v197, 512
        %vm200 = vmand %vm198, %vm199
        %201 = vst.msk [vmem:[#allocation2] sm:$0xf] %vm200, 0.0
      $region36: #{noise_aware_feature_extractor.7} parent=31 // pred_fallthru
        _
      %v202 = vld [vmem:[%s187] sm:$0x7]
      %v203 = vld [vmem:[%s1] sm:$0xff]
      %v204 = vld [vmem:[%s1 + $0x8] sm:$0xff]
      %v205 = vld [vmem:[%s1 + $0x10] sm:$0xff]
      %v206 = vld [vmem:[%s1 + $0x18] sm:$0xff]
      %v207 = vld [vmem:[%s1 + $0x20] sm:$0xff]
      %v208 = vld [vmem:[%s1 + $0x28] sm:$0xff]
      %v209 = vld [vmem:[%s1 + $0x30] sm:$0xff]
      %v210 = vld [vmem:[%s1 + $0x38] sm:$0xff]
      %v211 = vld [vmem:[%s1 + $0x40] sm:$0xff]
      %v212 = vld [vmem:[%s1 + $0x48] sm:$0xff]
      %v213 = vld [vmem:[%s1 + $0x50] sm:$0xff]
      %v214 = vld [vmem:[%s1 + $0x58] sm:$0xff]
      %v215 = vld [vmem:[%s1 + $0x60] sm:$0xff]
      %v216 = vld [vmem:[%s1 + $0x68] sm:$0xff]
      %v217 = vld [vmem:[%s1 + $0x70] sm:$0xff]
      %v218 = vld [vmem:[%s1 + $0x78] sm:$0xff]
      %v219 = vld [vmem:[%s1 + $0x80] sm:$0xff]
      %v220 = vld [vmem:[%s1 + $0x88] sm:$0xff]
      %v221 = vld [vmem:[%s1 + $0x90] sm:$0xff]
      %v222 = vld [vmem:[%s1 + $0x98] sm:$0xff]
      %v223 = vld [vmem:[%s1 + $0xa0] sm:$0xff]
      %v224 = vld [vmem:[%s1 + $0xa8] sm:$0xff]
      %v225 = vld [vmem:[%s1 + $0xb0] sm:$0xff]
      %v226 = vld [vmem:[%s1 + $0xb8] sm:$0xff]
      %v227 = vld [vmem:[%s1 + $0xc0] sm:$0xff]
      %v228 = vld [vmem:[%s1 + $0xc8] sm:$0xff]
      %v229 = vld [vmem:[%s1 + $0xd0] sm:$0xff]
      %v230 = vld [vmem:[%s1 + $0xd8] sm:$0xff]
      %v231 = vld [vmem:[%s1 + $0xe0] sm:$0xff]
      %v232 = vld [vmem:[%s1 + $0xe8] sm:$0xff]
      %v233 = vld [vmem:[%s1 + $0xf0] sm:$0xff]
      %v234 = vld [vmem:[%s1 + $0xf8] sm:$0xff]
      %v235 = vld [vmem:[%s1 + $0x100] sm:$0xff]
      %v236 = vld [vmem:[%s1 + $0x108] sm:$0xff]
      %v237 = vld [vmem:[%s1 + $0x110] sm:$0xff]
      %v238 = vld [vmem:[%s1 + $0x118] sm:$0xff]
      %v239 = vld [vmem:[%s1 + $0x120] sm:$0xff]
      %v240 = vld [vmem:[%s1 + $0x128] sm:$0xff]
      %v241 = vld [vmem:[%s1 + $0x130] sm:$0xff]
      %v242 = vld [vmem:[%s1 + $0x138] sm:$0xff]
      %v243 = vld [vmem:[%s1 + $0x140] sm:$0xff]
      %v244 = vld [vmem:[%s1 + $0x148] sm:$0xff]
      %v245 = vld [vmem:[%s1 + $0x150] sm:$0xff]
      %v246 = vld [vmem:[%s1 + $0x158] sm:$0xff]
      %v247 = vld [vmem:[%s1 + $0x160] sm:$0xff]
      %v248 = vld [vmem:[%s1 + $0x168] sm:$0xff]
      %v249 = vld [vmem:[%s1 + $0x170] sm:$0xff]
      %v250 = vld [vmem:[%s1 + $0x178] sm:$0xff]
      %v251 = vld [vmem:[%s1 + $0x180] sm:$0xff]
      %v252 = vld [vmem:[%s1 + $0x188] sm:$0xff]
      %v253 = vld [vmem:[%s1 + $0x190] sm:$0xff]
      %v254 = vld [vmem:[%s1 + $0x198] sm:$0xff]
      %v255 = vld [vmem:[%s1 + $0x1a0] sm:$0xff]
      %v256 = vld [vmem:[%s1 + $0x1a8] sm:$0xff]
      %v257 = vld [vmem:[%s1 + $0x1b0] sm:$0xff]
      %v258 = vld [vmem:[%s1 + $0x1b8] sm:$0xff]
      %v259 = vld [vmem:[%s1 + $0x1c0] sm:$0xff]
      %v260 = vld [vmem:[%s1 + $0x1c8] sm:$0xff]
      %v261 = vld [vmem:[%s1 + $0x1d0] sm:$0xff]
      %v262 = vld [vmem:[%s1 + $0x1d8] sm:$0xff]
      %v263 = vld [vmem:[%s1 + $0x1e0] sm:$0xff]
      %v264 = vld [vmem:[%s1 + $0x1e8] sm:$0xff]
      %v265 = vld [vmem:[%s1 + $0x1f0] sm:$0xff]
      %v266 = vld [vmem:[%s1 + $0x1f8] sm:$0xff]
      %v267 = vld [vmem:[%s1 + $0x200] sm:$0xff]
      %v268 = vld [vmem:[%s1 + $0x208] sm:$0xff]
      %v269 = vld [vmem:[%s1 + $0x210] sm:$0xff]
      %v270 = vld [vmem:[%s1 + $0x218] sm:$0xff]
      %v271 = vld [vmem:[%s1 + $0x220] sm:$0xff]
      %v272 = vld [vmem:[%s1 + $0x228] sm:$0xff]
      %v273 = vld [vmem:[%s1 + $0x230] sm:$0xff]
      %v274 = vld [vmem:[%s1 + $0x238] sm:$0xff]
      %v275 = vld [vmem:[%s1 + $0x240] sm:$0xff]
      %v276 = vld [vmem:[%s1 + $0x248] sm:$0xff]
      %v277 = vld [vmem:[%s1 + $0x250] sm:$0xff]
      %v278 = vld [vmem:[%s1 + $0x258] sm:$0xff]
      %v279 = vld [vmem:[%s1 + $0x260] sm:$0xff]
      %v280 = vld [vmem:[%s1 + $0x268] sm:$0xff]
      %v281 = vld [vmem:[%s1 + $0x270] sm:$0xff]
      %v282 = vld [vmem:[%s1 + $0x278] sm:$0xff]
      %v283 = vld [vmem:[%s1 + $0x280] sm:$0xff]
      %v284 = vld [vmem:[%s1 + $0x288] sm:$0xff]
      %v285 = vld [vmem:[%s1 + $0x290] sm:$0xff]
      %v286 = vld [vmem:[%s1 + $0x298] sm:$0xff]
      %v287 = vld [vmem:[%s1 + $0x2a0] sm:$0xff]
      %v288 = vld [vmem:[%s1 + $0x2a8] sm:$0xff]
      %v289 = vld [vmem:[%s1 + $0x2b0] sm:$0xff]
      %v290 = vld [vmem:[%s1 + $0x2b8] sm:$0xff]
      %v291 = vld [vmem:[%s1 + $0x2c0] sm:$0xff]
      %v292 = vld [vmem:[%s1 + $0x2c8] sm:$0xff]
      %v293 = vld [vmem:[%s1 + $0x2d0] sm:$0xff]
      %v294 = vld [vmem:[%s1 + $0x2d8] sm:$0xff]
      %v295 = vld [vmem:[%s1 + $0x2e0] sm:$0xff]
      %v296 = vld [vmem:[%s1 + $0x2e8] sm:$0xff]
      %v297 = vld [vmem:[%s1 + $0x2f0] sm:$0xff]
      %v298 = vld [vmem:[%s1 + $0x2f8] sm:$0xff]
      %v299 = vld [vmem:[%s2] sm:$0xf]
      %v301 = vlaneseq
      %v302 = vshrl.u32 %v301, 7
      %v303 = vsub.s32 0, %v302
      %v304 = vrot.slane %v299, %v303
      %v305 = vlaneseq
      %v306 = vshrl.u32 %v305, 7
      %v307 = vsub.s32 1, %v306
      %v308 = vrot.slane %v299, %v307
      %v309 = vlaneseq
      %v310 = vshrl.u32 %v309, 7
      %v311 = vsub.s32 2, %v310
      %v312 = vrot.slane %v299, %v311
      %v313 = vlaneseq
      %v314 = vshrl.u32 %v313, 7
      %v315 = vsub.s32 3, %v314
      %v316 = vrot.slane %v299, %v315
      %v323 = vunpack.c.l.s4 1966171168
      %v324 = vunpack.c.0.s8 %v323
      %v325 = vlaneseq
      %v326 = vshrl.u32 %v325, 7
      %v327 = vsub.s32 %v324, %v326
      %v328 = vrot.slane %v202, %v327
      %v329 = vcombine.high %v328, %v328
      %v331 = vunpack.c.l.s4 1966171168
      %v332 = vunpack.c.0.s8 %v331
      %v333 = vlaneseq
      %v334 = vshrl.u32 %v333, 7
      %v335 = vsub.s32 %v332, %v334
      %v336 = vrot.slane %v328, %v335
      %v338 = vunpack.c.l.s4 1966171168
      %v339 = vunpack.c.0.s8 %v338
      %v340 = vlaneseq
      %v341 = vshrl.u32 %v340, 7
      %v342 = vsub.s32 %v339, %v341
      %v343 = vrot.slane %v329, %v342
      %v344 = vcombine.high %v336, %v336
      %v444 = vunpack.c.l.b16 %v203
      %v445 = vunpack.c.h.b16 %v203
      %v446 = vunpack.c.l.b16 %v204
      %v447 = vunpack.c.h.b16 %v204
      %v448 = vunpack.c.l.b16 %v205
      %v449 = vunpack.c.h.b16 %v205
      %v450 = vunpack.c.l.b16 %v206
      %v451 = vunpack.c.h.b16 %v206
      %v452 = vunpack.c.l.b16 %v207
      %v453 = vunpack.c.h.b16 %v207
      %v454 = vunpack.c.l.b16 %v208
      %v455 = vunpack.c.h.b16 %v208
      %v456 = vunpack.c.l.b16 %v209
      %v457 = vunpack.c.h.b16 %v209
      %v458 = vunpack.c.l.b16 %v210
      %v459 = vunpack.c.h.b16 %v210
      %v460 = vunpack.c.l.b16 %v211
      %v461 = vunpack.c.h.b16 %v211
      %v462 = vunpack.c.l.b16 %v212
      %v463 = vunpack.c.h.b16 %v212
      %v464 = vunpack.c.l.b16 %v213
      %v465 = vunpack.c.h.b16 %v213
      %v466 = vunpack.c.l.b16 %v214
      %v467 = vunpack.c.h.b16 %v214
      %v468 = vunpack.c.l.b16 %v215
      %v469 = vunpack.c.h.b16 %v215
      %v470 = vunpack.c.l.b16 %v216
      %v471 = vunpack.c.h.b16 %v216
      %v472 = vunpack.c.l.b16 %v217
      %v473 = vunpack.c.h.b16 %v217
      %v474 = vunpack.c.l.b16 %v218
      %v475 = vunpack.c.h.b16 %v218
      %v476 = vunpack.c.l.b16 %v219
      %v477 = vunpack.c.h.b16 %v219
      %v478 = vunpack.c.l.b16 %v220
      %v479 = vunpack.c.h.b16 %v220
      %v480 = vunpack.c.l.b16 %v221
      %v481 = vunpack.c.h.b16 %v221
      %v482 = vunpack.c.l.b16 %v222
      %v483 = vunpack.c.h.b16 %v222
      %v484 = vunpack.c.l.b16 %v223
      %v485 = vunpack.c.h.b16 %v223
      %v486 = vunpack.c.l.b16 %v224
      %v487 = vunpack.c.h.b16 %v224
      %v488 = vunpack.c.l.b16 %v225
      %v489 = vunpack.c.h.b16 %v225
      %v490 = vunpack.c.l.b16 %v226
      %v491 = vunpack.c.h.b16 %v226
      %v492 = vunpack.c.l.b16 %v227
      %v493 = vunpack.c.h.b16 %v227
      %v494 = vunpack.c.l.b16 %v228
      %v495 = vunpack.c.h.b16 %v228
      %v496 = vunpack.c.l.b16 %v229
      %v497 = vunpack.c.h.b16 %v229
      %v498 = vunpack.c.l.b16 %v230
      %v499 = vunpack.c.h.b16 %v230
      %v500 = vunpack.c.l.b16 %v231
      %v501 = vunpack.c.h.b16 %v231
      %v502 = vunpack.c.l.b16 %v232
      %v503 = vunpack.c.h.b16 %v232
      %v504 = vunpack.c.l.b16 %v233
      %v505 = vunpack.c.h.b16 %v233
      %v506 = vunpack.c.l.b16 %v234
      %v507 = vunpack.c.h.b16 %v234
      %v508 = vunpack.c.l.b16 %v235
      %v509 = vunpack.c.h.b16 %v235
      %v510 = vunpack.c.l.b16 %v236
      %v511 = vunpack.c.h.b16 %v236
      %v512 = vunpack.c.l.b16 %v237
      %v513 = vunpack.c.h.b16 %v237
      %v514 = vunpack.c.l.b16 %v238
      %v515 = vunpack.c.h.b16 %v238
      %v516 = vunpack.c.l.b16 %v239
      %v517 = vunpack.c.h.b16 %v239
      %v518 = vunpack.c.l.b16 %v240
      %v519 = vunpack.c.h.b16 %v240
      %v520 = vunpack.c.l.b16 %v241
      %v521 = vunpack.c.h.b16 %v241
      %v522 = vunpack.c.l.b16 %v242
      %v523 = vunpack.c.h.b16 %v242
      %v524 = vunpack.c.l.b16 %v243
      %v525 = vunpack.c.h.b16 %v243
      %v526 = vunpack.c.l.b16 %v244
      %v527 = vunpack.c.h.b16 %v244
      %v528 = vunpack.c.l.b16 %v245
      %v529 = vunpack.c.h.b16 %v245
      %v530 = vunpack.c.l.b16 %v246
      %v531 = vunpack.c.h.b16 %v246
      %v532 = vunpack.c.l.b16 %v247
      %v533 = vunpack.c.h.b16 %v247
      %v534 = vunpack.c.l.b16 %v248
      %v535 = vunpack.c.h.b16 %v248
      %v536 = vunpack.c.l.b16 %v249
      %v537 = vunpack.c.h.b16 %v249
      %v538 = vunpack.c.l.b16 %v250
      %v539 = vunpack.c.h.b16 %v250
      %v540 = vunpack.c.l.b16 %v251
      %v541 = vunpack.c.h.b16 %v251
      %v542 = vunpack.c.l.b16 %v252
      %v543 = vunpack.c.h.b16 %v252
      %v544 = vunpack.c.l.b16 %v253
      %v545 = vunpack.c.h.b16 %v253
      %v546 = vunpack.c.l.b16 %v254
      %v547 = vunpack.c.h.b16 %v254
      %v548 = vunpack.c.l.b16 %v255
      %v549 = vunpack.c.h.b16 %v255
      %v550 = vunpack.c.l.b16 %v256
      %v551 = vunpack.c.h.b16 %v256
      %v552 = vunpack.c.l.b16 %v257
      %v553 = vunpack.c.h.b16 %v257
      %v554 = vunpack.c.l.b16 %v258
      %v555 = vunpack.c.h.b16 %v258
      %v556 = vunpack.c.l.b16 %v259
      %v557 = vunpack.c.h.b16 %v259
      %v558 = vunpack.c.l.b16 %v260
      %v559 = vunpack.c.h.b16 %v260
      %v560 = vunpack.c.l.b16 %v261
      %v561 = vunpack.c.h.b16 %v261
      %v562 = vunpack.c.l.b16 %v262
      %v563 = vunpack.c.h.b16 %v262
      %v564 = vunpack.c.l.b16 %v263
      %v565 = vunpack.c.h.b16 %v263
      %v566 = vunpack.c.l.b16 %v264
      %v567 = vunpack.c.h.b16 %v264
      %v568 = vunpack.c.l.b16 %v265
      %v569 = vunpack.c.h.b16 %v265
      %v570 = vunpack.c.l.b16 %v266
      %v571 = vunpack.c.h.b16 %v266
      %v572 = vunpack.c.l.b16 %v267
      %v573 = vunpack.c.h.b16 %v267
      %v574 = vunpack.c.l.b16 %v268
      %v575 = vunpack.c.h.b16 %v268
      %v576 = vunpack.c.l.b16 %v269
      %v577 = vunpack.c.h.b16 %v269
      %v578 = vunpack.c.l.b16 %v270
      %v579 = vunpack.c.h.b16 %v270
      %v580 = vunpack.c.l.b16 %v271
      %v581 = vunpack.c.h.b16 %v271
      %v582 = vunpack.c.l.b16 %v272
      %v583 = vunpack.c.h.b16 %v272
      %v584 = vunpack.c.l.b16 %v273
      %v585 = vunpack.c.h.b16 %v273
      %v586 = vunpack.c.l.b16 %v274
      %v587 = vunpack.c.h.b16 %v274
      %v588 = vunpack.c.l.b16 %v275
      %v589 = vunpack.c.h.b16 %v275
      %v590 = vunpack.c.l.b16 %v276
      %v591 = vunpack.c.h.b16 %v276
      %v592 = vunpack.c.l.b16 %v277
      %v593 = vunpack.c.h.b16 %v277
      %v594 = vunpack.c.l.b16 %v278
      %v595 = vunpack.c.h.b16 %v278
      %v596 = vunpack.c.l.b16 %v279
      %v597 = vunpack.c.h.b16 %v279
      %v598 = vunpack.c.l.b16 %v280
      %v599 = vunpack.c.h.b16 %v280
      %v600 = vunpack.c.l.b16 %v281
      %v601 = vunpack.c.h.b16 %v281
      %v602 = vunpack.c.l.b16 %v282
      %v603 = vunpack.c.h.b16 %v282
      %v604 = vunpack.c.l.b16 %v283
      %v605 = vunpack.c.h.b16 %v283
      %v606 = vunpack.c.l.b16 %v284
      %v607 = vunpack.c.h.b16 %v284
      %v608 = vunpack.c.l.b16 %v285
      %v609 = vunpack.c.h.b16 %v285
      %v610 = vunpack.c.l.b16 %v286
      %v611 = vunpack.c.h.b16 %v286
      %v612 = vunpack.c.l.b16 %v287
      %v613 = vunpack.c.h.b16 %v287
      %v614 = vunpack.c.l.b16 %v288
      %v615 = vunpack.c.h.b16 %v288
      %v616 = vunpack.c.l.b16 %v289
      %v617 = vunpack.c.h.b16 %v289
      %v618 = vunpack.c.l.b16 %v290
      %v619 = vunpack.c.h.b16 %v290
      %v620 = vunpack.c.l.b16 %v291
      %v621 = vunpack.c.h.b16 %v291
      %v622 = vunpack.c.l.b16 %v292
      %v623 = vunpack.c.h.b16 %v292
      %v624 = vunpack.c.l.b16 %v293
      %v625 = vunpack.c.h.b16 %v293
      %v626 = vunpack.c.l.b16 %v294
      %v627 = vunpack.c.h.b16 %v294
      %v628 = vunpack.c.l.b16 %v295
      %v629 = vunpack.c.h.b16 %v295
      %v630 = vunpack.c.l.b16 %v296
      %v631 = vunpack.c.h.b16 %v296
      %v632 = vunpack.c.l.b16 %v297
      %v633 = vunpack.c.h.b16 %v297
      %v634 = vunpack.c.l.b16 %v298
      %v635 = vunpack.c.h.b16 %v298
      %v636 = vpack.c.b16 %v448, %v444
      %v637 = vpack.c.b16 %v449, %v445
      %v638 = vpack.c.b16 %v450, %v446
      %v639 = vpack.c.b16 %v451, %v447
      %v640 = vpack.c.b16 %v456, %v452
      %v641 = vpack.c.b16 %v457, %v453
      %v642 = vpack.c.b16 %v458, %v454
      %v643 = vpack.c.b16 %v459, %v455
      %v644 = vpack.c.b16 %v464, %v460
      %v645 = vpack.c.b16 %v465, %v461
      %v646 = vpack.c.b16 %v466, %v462
      %v647 = vpack.c.b16 %v467, %v463
      %v648 = vpack.c.b16 %v472, %v468
      %v649 = vpack.c.b16 %v473, %v469
      %v650 = vpack.c.b16 %v474, %v470
      %v651 = vpack.c.b16 %v475, %v471
      %v652 = vpack.c.b16 %v480, %v476
      %v653 = vpack.c.b16 %v481, %v477
      %v654 = vpack.c.b16 %v482, %v478
      %v655 = vpack.c.b16 %v483, %v479
      %v656 = vpack.c.b16 %v488, %v484
      %v657 = vpack.c.b16 %v489, %v485
      %v658 = vpack.c.b16 %v490, %v486
      %v659 = vpack.c.b16 %v491, %v487
      %v660 = vpack.c.b16 %v496, %v492
      %v661 = vpack.c.b16 %v497, %v493
      %v662 = vpack.c.b16 %v498, %v494
      %v663 = vpack.c.b16 %v499, %v495
      %v664 = vpack.c.b16 %v504, %v500
      %v665 = vpack.c.b16 %v505, %v501
      %v666 = vpack.c.b16 %v506, %v502
      %v667 = vpack.c.b16 %v507, %v503
      %v668 = vpack.c.b16 %v512, %v508
      %v669 = vpack.c.b16 %v513, %v509
      %v670 = vpack.c.b16 %v514, %v510
      %v671 = vpack.c.b16 %v515, %v511
      %v672 = vpack.c.b16 %v520, %v516
      %v673 = vpack.c.b16 %v521, %v517
      %v674 = vpack.c.b16 %v522, %v518
      %v675 = vpack.c.b16 %v523, %v519
      %v676 = vpack.c.b16 %v528, %v524
      %v677 = vpack.c.b16 %v529, %v525
      %v678 = vpack.c.b16 %v530, %v526
      %v679 = vpack.c.b16 %v531, %v527
      %v680 = vpack.c.b16 %v536, %v532
      %v681 = vpack.c.b16 %v537, %v533
      %v682 = vpack.c.b16 %v538, %v534
      %v683 = vpack.c.b16 %v539, %v535
      %v684 = vpack.c.b16 %v544, %v540
      %v685 = vpack.c.b16 %v545, %v541
      %v686 = vpack.c.b16 %v546, %v542
      %v687 = vpack.c.b16 %v547, %v543
      %v688 = vpack.c.b16 %v552, %v548
      %v689 = vpack.c.b16 %v553, %v549
      %v690 = vpack.c.b16 %v554, %v550
      %v691 = vpack.c.b16 %v555, %v551
      %v692 = vpack.c.b16 %v560, %v556
      %v693 = vpack.c.b16 %v561, %v557
      %v694 = vpack.c.b16 %v562, %v558
      %v695 = vpack.c.b16 %v563, %v559
      %v696 = vpack.c.b16 %v568, %v564
      %v697 = vpack.c.b16 %v569, %v565
      %v698 = vpack.c.b16 %v570, %v566
      %v699 = vpack.c.b16 %v571, %v567
      %v700 = vpack.c.b16 %v576, %v572
      %v701 = vpack.c.b16 %v577, %v573
      %v702 = vpack.c.b16 %v578, %v574
      %v703 = vpack.c.b16 %v579, %v575
      %v704 = vpack.c.b16 %v584, %v580
      %v705 = vpack.c.b16 %v585, %v581
      %v706 = vpack.c.b16 %v586, %v582
      %v707 = vpack.c.b16 %v587, %v583
      %v708 = vpack.c.b16 %v592, %v588
      %v709 = vpack.c.b16 %v593, %v589
      %v710 = vpack.c.b16 %v594, %v590
      %v711 = vpack.c.b16 %v595, %v591
      %v712 = vpack.c.b16 %v600, %v596
      %v713 = vpack.c.b16 %v601, %v597
      %v714 = vpack.c.b16 %v602, %v598
      %v715 = vpack.c.b16 %v603, %v599
      %v716 = vpack.c.b16 %v608, %v604
      %v717 = vpack.c.b16 %v609, %v605
      %v718 = vpack.c.b16 %v610, %v606
      %v719 = vpack.c.b16 %v611, %v607
      %v720 = vpack.c.b16 %v616, %v612
      %v721 = vpack.c.b16 %v617, %v613
      %v722 = vpack.c.b16 %v618, %v614
      %v723 = vpack.c.b16 %v619, %v615
      %v724 = vpack.c.b16 %v624, %v620
      %v725 = vpack.c.b16 %v625, %v621
      %v726 = vpack.c.b16 %v626, %v622
      %v727 = vpack.c.b16 %v627, %v623
      %v728 = vpack.c.b16 %v632, %v628
      %v729 = vpack.c.b16 %v633, %v629
      %v730 = vpack.c.b16 %v634, %v630
      %v731 = vpack.c.b16 %v635, %v631
      %828 = vmatprep.subr.bf16.mxu0 %v637
      %829 = vmatpush1.bf16.msra.mxu0 %v636
      %830 = vmatprep.subr.bf16.mxu0 %v641
      %831 = vmatpush1.bf16.msra.mxu0 %v640
      %832 = vmatprep.subr.bf16.mxu0 %v645
      %833 = vmatpush1.bf16.msra.mxu0 %v644
      %834 = vmatprep.subr.bf16.mxu0 %v649
      %835 = vmatpush1.bf16.msra.mxu0 %v648
      %836 = vmatprep.subr.bf16.mxu0 %v653
      %837 = vmatpush1.bf16.msra.mxu0 %v652
      %838 = vmatprep.subr.bf16.mxu0 %v657
      %839 = vmatpush1.bf16.msra.mxu0 %v656
      %840 = vmatprep.subr.bf16.mxu0 %v661
      %841 = vmatpush1.bf16.msra.mxu0 %v660
      %842 = vmatprep.subr.bf16.mxu0 %v665
      %843 = vmatpush1.bf16.msra.mxu0 %v664
      %844 = vmatprep.subr.bf16.mxu0 %v669
      %845 = vmatpush1.bf16.msra.mxu0 %v668
      %846 = vmatprep.subr.bf16.mxu0 %v673
      %847 = vmatpush1.bf16.msra.mxu0 %v672
      %848 = vmatprep.subr.bf16.mxu0 %v677
      %849 = vmatpush1.bf16.msra.mxu0 %v676
      %850 = vmatprep.subr.bf16.mxu0 %v681
      %851 = vmatpush1.bf16.msra.mxu0 %v680
      %852 = vmatprep.subr.bf16.mxu0 %v685
      %853 = vmatpush1.bf16.msra.mxu0 %v684
      %854 = vmatprep.subr.bf16.mxu0 %v689
      %855 = vmatpush1.bf16.msra.mxu0 %v688
      %856 = vmatprep.subr.bf16.mxu0 %v693
      %857 = vmatpush1.bf16.msra.mxu0 %v692
      %858 = vmatprep.subr.bf16.mxu0 %v697
      %859 = vmatpush1.bf16.msra.mxu0 %v696
      %860 = vmatprep.mubr.bf16.mxu0 %v343
      %861 = vmatmul.mubr.bf16.gmra.mrb[0].mxu0 %v336
      %v862 = vpop.f32.mrb[0].mxu0
      %v863 = vadd.f32 %v304, %v862
      %v864 = vpop.f32.mrb[0].mxu0
      %v865 = vadd.f32 %v308, %v864
      %v866 = vpop.f32.mrb[0].mxu0
      %v867 = vpop.f32.mrb[0].mxu0
      %868 = vdwg.mxu0
      %869 = vmatprep.subr.bf16.mxu0 %v701
      %870 = vmatpush1.bf16.msra.mxu0 %v700
      %871 = vmatprep.subr.bf16.mxu0 %v705
      %872 = vmatpush1.bf16.msra.mxu0 %v704
      %873 = vmatprep.subr.bf16.mxu0 %v709
      %874 = vmatpush1.bf16.msra.mxu0 %v708
      %875 = vmatprep.subr.bf16.mxu0 %v713
      %876 = vmatpush1.bf16.msra.mxu0 %v712
      %877 = vmatprep.subr.bf16.mxu0 %v717
      %878 = vmatpush1.bf16.msra.mxu0 %v716
      %879 = vmatprep.subr.bf16.mxu0 %v721
      %880 = vmatpush1.bf16.msra.mxu0 %v720
      %881 = vmatprep.subr.bf16.mxu0 %v725
      %882 = vmatpush1.bf16.msra.mxu0 %v724
      %883 = vmatprep.subr.bf16.mxu0 %v729
      %884 = vmatpush1.bf16.msra.mxu0 %v728
      %885 = vmatprep.subr.bf16.mxu0 0
      %886 = vmatpush1.bf16.msra.mxu0 0
      %887 = vmatprep.subr.bf16.mxu0 0
      %888 = vmatpush1.bf16.msra.mxu0 0
      %889 = vmatprep.subr.bf16.mxu0 0
      %890 = vmatpush1.bf16.msra.mxu0 0
      %891 = vmatprep.subr.bf16.mxu0 0
      %892 = vmatpush1.bf16.msra.mxu0 0
      %893 = vmatprep.subr.bf16.mxu0 0
      %894 = vmatpush1.bf16.msra.mxu0 0
      %895 = vmatprep.subr.bf16.mxu0 0
      %896 = vmatpush1.bf16.msra.mxu0 0
      %897 = vmatprep.subr.bf16.mxu0 0
      %898 = vmatpush1.bf16.msra.mxu0 0
      %899 = vmatprep.subr.bf16.mxu0 0
      %900 = vmatpush1.bf16.msra.mxu0 0
      %901 = vmatprep.mubr.bf16.mxu0 0
      %902 = vmatmul.mubr.bf16.gmra.mrb[0].mxu0 %v344
      %v903 = vpop.f32.mrb[0].mxu0
      %v904 = vadd.f32 %v863, %v903
      %v905 = vpop.f32.mrb[0].mxu0
      %v906 = vadd.f32 %v865, %v905
      %v907 = vpop.f32.mrb[0].mxu0
      %v908 = vpop.f32.mrb[0].mxu0
      %909 = vdwg.mxu0
      %910 = vmatprep.subr.bf16.mxu0 %v639
      %911 = vmatpush1.bf16.msra.mxu0 %v638
      %912 = vmatprep.subr.bf16.mxu0 %v643
      %913 = vmatpush1.bf16.msra.mxu0 %v642
      %914 = vmatprep.subr.bf16.mxu0 %v647
      %915 = vmatpush1.bf16.msra.mxu0 %v646
      %916 = vmatprep.subr.bf16.mxu0 %v651
      %917 = vmatpush1.bf16.msra.mxu0 %v650
      %918 = vmatprep.subr.bf16.mxu0 %v655
      %919 = vmatpush1.bf16.msra.mxu0 %v654
      %920 = vmatprep.subr.bf16.mxu0 %v659
      %921 = vmatpush1.bf16.msra.mxu0 %v658
      %922 = vmatprep.subr.bf16.mxu0 %v663
      %923 = vmatpush1.bf16.msra.mxu0 %v662
      %924 = vmatprep.subr.bf16.mxu0 %v667
      %925 = vmatpush1.bf16.msra.mxu0 %v666
      %926 = vmatprep.subr.bf16.mxu0 %v671
      %927 = vmatpush1.bf16.msra.mxu0 %v670
      %928 = vmatprep.subr.bf16.mxu0 %v675
      %929 = vmatpush1.bf16.msra.mxu0 %v674
      %930 = vmatprep.subr.bf16.mxu0 %v679
      %931 = vmatpush1.bf16.msra.mxu0 %v678
      %932 = vmatprep.subr.bf16.mxu0 %v683
      %933 = vmatpush1.bf16.msra.mxu0 %v682
      %934 = vmatprep.subr.bf16.mxu0 %v687
      %935 = vmatpush1.bf16.msra.mxu0 %v686
      %936 = vmatprep.subr.bf16.mxu0 %v691
      %937 = vmatpush1.bf16.msra.mxu0 %v690
      %938 = vmatprep.subr.bf16.mxu0 %v695
      %939 = vmatpush1.bf16.msra.mxu0 %v694
      %940 = vmatprep.subr.bf16.mxu0 %v699
      %941 = vmatpush1.bf16.msra.mxu0 %v698
      %942 = vmatprep.mubr.bf16.mxu0 %v343
      %943 = vmatmul.mubr.bf16.gmra.mrb[0].mxu0 %v336
      %v944 = vpop.f32.mrb[0].mxu0
      %v945 = vadd.f32 %v312, %v944
      %v946 = vpop.f32.mrb[0].mxu0
      %v947 = vadd.f32 %v316, %v946
      %v948 = vpop.f32.mrb[0].mxu0
      %v949 = vpop.f32.mrb[0].mxu0
      %950 = vdwg.mxu0
      %951 = vmatprep.subr.bf16.mxu0 %v703
      %952 = vmatpush1.bf16.msra.mxu0 %v702
      %953 = vmatprep.subr.bf16.mxu0 %v707
      %954 = vmatpush1.bf16.msra.mxu0 %v706
      %955 = vmatprep.subr.bf16.mxu0 %v711
      %956 = vmatpush1.bf16.msra.mxu0 %v710
      %957 = vmatprep.subr.bf16.mxu0 %v715
      %958 = vmatpush1.bf16.msra.mxu0 %v714
      %959 = vmatprep.subr.bf16.mxu0 %v719
      %960 = vmatpush1.bf16.msra.mxu0 %v718
      %961 = vmatprep.subr.bf16.mxu0 %v723
      %962 = vmatpush1.bf16.msra.mxu0 %v722
      %963 = vmatprep.subr.bf16.mxu0 %v727
      %964 = vmatpush1.bf16.msra.mxu0 %v726
      %965 = vmatprep.subr.bf16.mxu0 %v731
      %966 = vmatpush1.bf16.msra.mxu0 %v730
      %967 = vmatprep.subr.bf16.mxu0 0
      %968 = vmatpush1.bf16.msra.mxu0 0
      %969 = vmatprep.subr.bf16.mxu0 0
      %970 = vmatpush1.bf16.msra.mxu0 0
      %971 = vmatprep.subr.bf16.mxu0 0
      %972 = vmatpush1.bf16.msra.mxu0 0
      %973 = vmatprep.subr.bf16.mxu0 0
      %974 = vmatpush1.bf16.msra.mxu0 0
      %975 = vmatprep.subr.bf16.mxu0 0
      %976 = vmatpush1.bf16.msra.mxu0 0
      %977 = vmatprep.subr.bf16.mxu0 0
      %978 = vmatpush1.bf16.msra.mxu0 0
      %979 = vmatprep.subr.bf16.mxu0 0
      %980 = vmatpush1.bf16.msra.mxu0 0
      %981 = vmatprep.subr.bf16.mxu0 0
      %982 = vmatpush1.bf16.msra.mxu0 0
      %983 = vmatprep.mubr.bf16.mxu0 0
      %984 = vmatmul.mubr.bf16.gmra.mrb[0].mxu0 %v344
      %v985 = vpop.f32.mrb[0].mxu0
      %v986 = vadd.f32 %v945, %v985
      %v987 = vpop.f32.mrb[0].mxu0
      %v988 = vadd.f32 %v947, %v987
      %v989 = vpop.f32.mrb[0].mxu0
      %v990 = vpop.f32.mrb[0].mxu0
      %991 = vdwg.mxu0
      %v992 = vmax.f32 %v904, 0.0
      %v993 = vmax.f32 %v906, 0.0
      %v994 = vmax.f32 %v986, 0.0
      %v995 = vmax.f32 %v988, 0.0
      %v996 = vld [vmem:[#allocation2] sm:$0xf]
      %vm997 = vcmask 1041408
      %v998 = vsel %vm997, %v992, -inf
      %v999 = vrot.slane %v998, 4
      %v1000 = vmax.f32 %v998, %v999
      %v1001 = vrot.slane %v1000, 2
      %v1002 = vmax.f32 %v1000, %v1001
      %v1003 = vrot.slane %v1002, 1
      %v1004 = vmax.f32 %v1002, %v1003
      %v1005 = vsel %vm997, %v993, -inf
      %v1006 = vrot.slane %v1005, 4
      %v1007 = vmax.f32 %v1005, %v1006
      %v1008 = vrot.slane %v1007, 2
      %v1009 = vmax.f32 %v1007, %v1008
      %v1010 = vrot.slane %v1009, 1
      %v1011 = vmax.f32 %v1009, %v1010
      %v1012 = vsel %vm997, %v994, -inf
      %v1013 = vrot.slane %v1012, 4
      %v1014 = vmax.f32 %v1012, %v1013
      %v1015 = vrot.slane %v1014, 2
      %v1016 = vmax.f32 %v1014, %v1015
      %v1017 = vrot.slane %v1016, 1
      %v1018 = vmax.f32 %v1016, %v1017
      %v1019 = vsel %vm997, %v995, -inf
      %v1020 = vrot.slane %v1019, 4
      %v1021 = vmax.f32 %v1019, %v1020
      %v1022 = vrot.slane %v1021, 2
      %v1023 = vmax.f32 %v1021, %v1022
      %v1024 = vrot.slane %v1023, 1
      %v1025 = vmax.f32 %v1023, %v1024
      %v1030 = vcombine.low %v1004, %v1011
      %v1031 = vcombine.low %v1018, %v1025
      %v1033 = vunpack.c.l.s4 1966171168
      %v1034 = vunpack.c.0.s8 %v1033
      %v1035 = vlaneseq
      %v1036 = vshrl.u32 %v1035, 7
      %v1037 = vsub.s32 %v1034, %v1036
      %v1038 = vrot.slane %v1030, %v1037
      %v1040 = vunpack.c.l.s4 1966171168
      %v1041 = vunpack.c.0.s8 %v1040
      %v1042 = vlaneseq
      %v1043 = vshrl.u32 %v1042, 7
      %v1044 = vsub.s32 %v1041, %v1043
      %v1045 = vrot.slane %v1031, %v1044
      %v1046 = vcombine.low %v1038, %v1045
      %v1048 = vunpack.c.l.s4 1966171168
      %v1049 = vunpack.c.0.s8 %v1048
      %v1050 = vlaneseq
      %v1051 = vshrl.u32 %v1050, 7
      %v1052 = vsub.s32 %v1049, %v1051
      %v1053 = vrot.slane %v1046, %v1052
      %v1055 = vmax.f32 %v996, %v1053
      %v1056 = vlaneseq
      %vm1057 = vcmp.ge.s32.totalorder %v1056, 0
      %vm1058 = vcmp.lt.s32.totalorder %v1056, 512
      %vm1059 = vmand %vm1057, %vm1058
      %1060 = vst.msk [vmem:[#allocation2] sm:$0xf] %vm1059, %v1055
      // Predicated region
      $region37: #{noise_aware_feature_extractor.7} parent=31 // pred_check
        %p1061 = pneg %p193
      $region38: #{noise_aware_feature_extractor.7} parent=31 // pred_check_branch
        %1063 = sbr.rel (%p1061) target = $region40
      $region39: #{noise_aware_feature_extractor.7} parent=31 // pred_region
        %v1064 = vld [vmem:[#allocation2] sm:$0xf]
        %1065 = vst.msk [vmem:[%s191] sm:$0xf] %vm1059, %v1064
      $region40: #{noise_aware_feature_extractor.7} parent=31 // pred_fallthru
        _
      %p1066 = scmp.lt.s32.totalorder %s18, 1
      %s1067 = scalar_select %p1066, %s18, 1
      %s1068 = smul.addr %s1067, 4
      %s1069 = scalar_lea.vmem %s3, %s1068
      // Predicated region
      $region41: #{noise_aware_feature_extractor.7} parent=31 // pred_check
        %p1070 = pneg %p114
      $region42: #{noise_aware_feature_extractor.7} parent=31 // pred_check_branch
        %1072 = sbr.rel (%p1070) target = $region44
      $region43: #{noise_aware_feature_extractor.7} parent=31 // pred_region
        _
      $region44: #{noise_aware_feature_extractor.7} parent=31 // pred_fallthru
        _
    $region32: #{noise_aware_feature_extractor.7} parent=5 // pred_fallthru
      _
    %p1073 = scmp.le.s32.totalorder 2, %s9
    // Predicated region
    $region45: #{noise_aware_feature_extractor.7} parent=5 // pred_check
      %p1074 = pneg %p1073
    $region46: #{noise_aware_feature_extractor.7} parent=5 // pred_check_branch
      %1076 = sbr.rel (%p1074) target = $region48
    $region47: #{noise_aware_feature_extractor.7} parent=5 // pred_region
      %s1077 = ssub.s32 %s9, 2
      // Predicated region
      $region49: #{noise_aware_feature_extractor.7} parent=47 // pred_check
        %p1078 = pneg %p120
      $region50: #{noise_aware_feature_extractor.7} parent=47 // pred_check_branch
        %1080 = sbr.rel (%p1078) target = $region52
      $region51: #{noise_aware_feature_extractor.7} parent=47 // pred_region
        %p1081 = scmp.lt.s32.totalorder %s20, 1
        %s1082 = scalar_select %p1081, %s20, 1
        %s1083 = smul.addr %s1082, 4
        %s1084 = scalar_lea.vmem %s3, %s1083
      $region52: #{noise_aware_feature_extractor.7} parent=47 // pred_fallthru
        _
    $region48: #{noise_aware_feature_extractor.7} parent=5 // pred_fallthru
      _
  $region6: #{noise_aware_feature_extractor.7} parent=0 // loop_footer
    %s13 = sadd.s32 1, %s9
  $region7: #{noise_aware_feature_extractor.7} parent=0 // loop_footer_branch
    %8 = sbr.rel target = $region3
  $region8: #{noise_aware_feature_extractor.7} parent=0 // loop_exit
    _

// kernel: noise_aware_feature_extractor.6
$region0: #{noise_aware_feature_extractor.6}
  #allocation0 [shape = 'u32[]', space=smem, size = 0x4, offset = 0x4, fixed_abs, tag = 'smem constant byte address 0x4 - core index']
  #allocation1 [shape = 'u32[144,128]{1,0:T(1,128)}', space=vmem, size = 0x12000, scoped, tag = 'internal scratch']
  %s0 = inlined_call_operand.vmem [shape: f32[8,3], index: 0, kind: input, shape index: {}]
  %s1 = inlined_call_operand.vmem [shape: bf16[8,384], index: 1, kind: input, shape index: {}]
  %s2 = inlined_call_operand.vmem [shape: bf16[384,384], index: 2, kind: input, shape index: {}]
  %s3 = inlined_call_operand.vmem [shape: f32[1,384], index: 3, kind: input, shape index: {}]
  %s4 = inlined_call_operand.vmem [shape: f32[3,384], index: 4, kind: input, shape index: {}]
  %s5 = inlined_call_operand.vmem [shape: bf16[384,384], index: 5, kind: input, shape index: {}]
  %s6 = inlined_call_operand.vmem [shape: f32[1,384], index: 6, kind: input, shape index: {}]
  %s7 = inlined_call_operand.vmem [shape: bf16[8,384], index: 7, kind: output, shape index: {}]
  %s8 = sld [smem:[#allocation0]]
  $region38: #{noise_aware_feature_extractor.6} parent=0
    _
  %s10 = ssub.s32 1, %s8
  %s11 = scalar_select 0, %s10, %s8
  // Predicated region
  $region2: #{noise_aware_feature_extractor.6} parent=0 // pred_check
    _
  $region3: #{noise_aware_feature_extractor.6} parent=0 // pred_check_branch
    %13 = sbr.rel (0) target = $region5
  $region4: #{noise_aware_feature_extractor.6} parent=0 // pred_region
    _
  $region5: #{noise_aware_feature_extractor.6} parent=0 // pred_fallthru
    _
  // Predicated region
  $region6: #{noise_aware_feature_extractor.6} parent=0 // pred_check
    _
  $region7: #{noise_aware_feature_extractor.6} parent=0 // pred_check_branch
    %15 = sbr.rel (0) target = $region9
  $region8: #{noise_aware_feature_extractor.6} parent=0 // pred_region
    _
  $region9: #{noise_aware_feature_extractor.6} parent=0 // pred_fallthru
    _
  // Predicated region
  $region10: #{noise_aware_feature_extractor.6} parent=0 // pred_check
    _
  $region11: #{noise_aware_feature_extractor.6} parent=0 // pred_check_branch
    %17 = sbr.rel (0) target = $region13
  $region12: #{noise_aware_feature_extractor.6} parent=0 // pred_region
    _
  $region13: #{noise_aware_feature_extractor.6} parent=0 // pred_fallthru
    _
  // Predicated region
  $region14: #{noise_aware_feature_extractor.6} parent=0 // pred_check
    _
  $region15: #{noise_aware_feature_extractor.6} parent=0 // pred_check_branch
    %19 = sbr.rel (0) target = $region17
  $region16: #{noise_aware_feature_extractor.6} parent=0 // pred_region
    _
  $region17: #{noise_aware_feature_extractor.6} parent=0 // pred_fallthru
    _
  // Predicated region
  $region18: #{noise_aware_feature_extractor.6} parent=0 // pred_check
    _
  $region19: #{noise_aware_feature_extractor.6} parent=0 // pred_check_branch
    %21 = sbr.rel (0) target = $region21
  $region20: #{noise_aware_feature_extractor.6} parent=0 // pred_region
    _
  $region21: #{noise_aware_feature_extractor.6} parent=0 // pred_fallthru
    _
  // Predicated region
  $region22: #{noise_aware_feature_extractor.6} parent=0 // pred_check
    _
  $region23: #{noise_aware_feature_extractor.6} parent=0 // pred_check_branch
    %23 = sbr.rel (0) target = $region25
  $region24: #{noise_aware_feature_extractor.6} parent=0 // pred_region
    _
  $region25: #{noise_aware_feature_extractor.6} parent=0 // pred_fallthru
    _
  // Predicated region
  $region26: #{noise_aware_feature_extractor.6} parent=0 // pred_check
    _
  $region27: #{noise_aware_feature_extractor.6} parent=0 // pred_check_branch
    %25 = sbr.rel (0) target = $region29
  $region28: #{noise_aware_feature_extractor.6} parent=0 // pred_region
    _
  $region29: #{noise_aware_feature_extractor.6} parent=0 // pred_fallthru
    _
  %v27 = vld [vmem:[%s0] sm:$0xff]
  %v28 = vld [vmem:[%s1] sm:$0xff]
  %v29 = vld [vmem:[%s1 + $0x8] sm:$0xf]
  %v30 = vld [vmem:[%s2] sm:$0xff]
  %v31 = vld [vmem:[%s2 + $0x8] sm:$0xf]
  %v32 = vld [vmem:[%s2 + $0xc] sm:$0xff]
  %v33 = vld [vmem:[%s2 + $0x14] sm:$0xf]
  %v34 = vld [vmem:[%s2 + $0x18] sm:$0xff]
  %v35 = vld [vmem:[%s2 + $0x20] sm:$0xf]
  %v36 = vld [vmem:[%s2 + $0x24] sm:$0xff]
  %v37 = vld [vmem:[%s2 + $0x2c] sm:$0xf]
  %v38 = vld [vmem:[%s2 + $0x30] sm:$0xff]
  %v39 = vld [vmem:[%s2 + $0x38] sm:$0xf]
  %v40 = vld [vmem:[%s2 + $0x3c] sm:$0xff]
  %v41 = vld [vmem:[%s2 + $0x44] sm:$0xf]
  %v42 = vld [vmem:[%s2 + $0x48] sm:$0xff]
  %v43 = vld [vmem:[%s2 + $0x50] sm:$0xf]
  %v44 = vld [vmem:[%s2 + $0x54] sm:$0xff]
  %v45 = vld [vmem:[%s2 + $0x5c] sm:$0xf]
  %v46 = vld [vmem:[%s2 + $0x60] sm:$0xff]
  %v47 = vld [vmem:[%s2 + $0x68] sm:$0xf]
  %v48 = vld [vmem:[%s2 + $0x6c] sm:$0xff]
  %v49 = vld [vmem:[%s2 + $0x74] sm:$0xf]
  %v50 = vld [vmem:[%s2 + $0x78] sm:$0xff]
  %v51 = vld [vmem:[%s2 + $0x80] sm:$0xf]
  %v52 = vld [vmem:[%s2 + $0x84] sm:$0xff]
  %v53 = vld [vmem:[%s2 + $0x8c] sm:$0xf]
  %v54 = vld [vmem:[%s2 + $0x90] sm:$0xff]
  %v55 = vld [vmem:[%s2 + $0x98] sm:$0xf]
  %v56 = vld [vmem:[%s2 + $0x9c] sm:$0xff]
  %v57 = vld [vmem:[%s2 + $0xa4] sm:$0xf]
  %v58 = vld [vmem:[%s2 + $0xa8] sm:$0xff]
  %v59 = vld [vmem:[%s2 + $0xb0] sm:$0xf]
  %v60 = vld [vmem:[%s2 + $0xb4] sm:$0xff]
  %v61 = vld [vmem:[%s2 + $0xbc] sm:$0xf]
  %v62 = vld [vmem:[%s2 + $0xc0] sm:$0xff]
  %v63 = vld [vmem:[%s2 + $0xc8] sm:$0xf]
  %v64 = vld [vmem:[%s2 + $0xcc] sm:$0xff]
  %v65 = vld [vmem:[%s2 + $0xd4] sm:$0xf]
  %v66 = vld [vmem:[%s2 + $0xd8] sm:$0xff]
  %v67 = vld [vmem:[%s2 + $0xe0] sm:$0xf]
  %v68 = vld [vmem:[%s2 + $0xe4] sm:$0xff]
  %v69 = vld [vmem:[%s2 + $0xec] sm:$0xf]
  %v70 = vld [vmem:[%s2 + $0xf0] sm:$0xff]
  %v71 = vld [vmem:[%s2 + $0xf8] sm:$0xf]
  %v72 = vld [vmem:[%s2 + $0xfc] sm:$0xff]
  %v73 = vld [vmem:[%s2 + $0x104] sm:$0xf]
  %v74 = vld [vmem:[%s2 + $0x108] sm:$0xff]
  %v75 = vld [vmem:[%s2 + $0x110] sm:$0xf]
  %v76 = vld [vmem:[%s2 + $0x114] sm:$0xff]
  %v77 = vld [vmem:[%s2 + $0x11c] sm:$0xf]
  %v78 = vld [vmem:[%s2 + $0x120] sm:$0xff]
  %v79 = vld [vmem:[%s2 + $0x128] sm:$0xf]
  %v80 = vld [vmem:[%s2 + $0x12c] sm:$0xff]
  %v81 = vld [vmem:[%s2 + $0x134] sm:$0xf]
  %v82 = vld [vmem:[%s2 + $0x138] sm:$0xff]
  %v83 = vld [vmem:[%s2 + $0x140] sm:$0xf]
  %v84 = vld [vmem:[%s2 + $0x144] sm:$0xff]
  %v85 = vld [vmem:[%s2 + $0x14c] sm:$0xf]
  %v86 = vld [vmem:[%s2 + $0x150] sm:$0xff]
  %v87 = vld [vmem:[%s2 + $0x158] sm:$0xf]
  %v88 = vld [vmem:[%s2 + $0x15c] sm:$0xff]
  %v89 = vld [vmem:[%s2 + $0x164] sm:$0xf]
  %v90 = vld [vmem:[%s2 + $0x168] sm:$0xff]
  %v91 = vld [vmem:[%s2 + $0x170] sm:$0xf]
  %v92 = vld [vmem:[%s2 + $0x174] sm:$0xff]
  %v93 = vld [vmem:[%s2 + $0x17c] sm:$0xf]
  %v94 = vld [vmem:[%s2 + $0x180] sm:$0xff]
  %v95 = vld [vmem:[%s2 + $0x188] sm:$0xf]
  %v96 = vld [vmem:[%s2 + $0x18c] sm:$0xff]
  %v97 = vld [vmem:[%s2 + $0x194] sm:$0xf]
  %v98 = vld [vmem:[%s2 + $0x198] sm:$0xff]
  %v99 = vld [vmem:[%s2 + $0x1a0] sm:$0xf]
  %v100 = vld [vmem:[%s2 + $0x1a4] sm:$0xff]
  %v101 = vld [vmem:[%s2 + $0x1ac] sm:$0xf]
  %v102 = vld [vmem:[%s2 + $0x1b0] sm:$0xff]
  %v103 = vld [vmem:[%s2 + $0x1b8] sm:$0xf]
  %v104 = vld [vmem:[%s2 + $0x1bc] sm:$0xff]
  %v105 = vld [vmem:[%s2 + $0x1c4] sm:$0xf]
  %v106 = vld [vmem:[%s2 + $0x1c8] sm:$0xff]
  %v107 = vld [vmem:[%s2 + $0x1d0] sm:$0xf]
  %v108 = vld [vmem:[%s2 + $0x1d4] sm:$0xff]
  %v109 = vld [vmem:[%s2 + $0x1dc] sm:$0xf]
  %v110 = vld [vmem:[%s2 + $0x1e0] sm:$0xff]
  %v111 = vld [vmem:[%s2 + $0x1e8] sm:$0xf]
  %v112 = vld [vmem:[%s2 + $0x1ec] sm:$0xff]
  %v113 = vld [vmem:[%s2 + $0x1f4] sm:$0xf]
  %v114 = vld [vmem:[%s2 + $0x1f8] sm:$0xff]
  %v115 = vld [vmem:[%s2 + $0x200] sm:$0xf]
  %v116 = vld [vmem:[%s2 + $0x204] sm:$0xff]
  %v117 = vld [vmem:[%s2 + $0x20c] sm:$0xf]
  %v118 = vld [vmem:[%s2 + $0x210] sm:$0xff]
  %v119 = vld [vmem:[%s2 + $0x218] sm:$0xf]
  %v120 = vld [vmem:[%s2 + $0x21c] sm:$0xff]
  %v121 = vld [vmem:[%s2 + $0x224] sm:$0xf]
  %v122 = vld [vmem:[%s2 + $0x228] sm:$0xff]
  %v123 = vld [vmem:[%s2 + $0x230] sm:$0xf]
  %v124 = vld [vmem:[%s2 + $0x234] sm:$0xff]
  %v125 = vld [vmem:[%s2 + $0x23c] sm:$0xf]
  %v126 = vld [vmem:[%s3] sm:$0x7]
  %v128 = vlaneseq
  %v129 = vshrl.u32 %v128, 7
  %v130 = vsub.s32 0, %v129
  %v131 = vrot.slane %v126, %v130
  %v132 = vlaneseq
  %v133 = vshrl.u32 %v132, 7
  %v134 = vsub.s32 1, %v133
  %v135 = vrot.slane %v126, %v134
  %v136 = vlaneseq
  %v137 = vshrl.u32 %v136, 7
  %v138 = vsub.s32 2, %v137
  %v139 = vrot.slane %v126, %v138
  %v145 = vunpack.c.l.b16 %v28
  %v146 = vunpack.c.h.b16 %v28
  %v147 = vunpack.c.l.b16 %v29
  %v148 = vpack.c.b16 %v145, %v145
  %v149 = vpack.c.b16 %v146, %v146
  %v150 = vpack.c.b16 %v147, %v147
  %v250 = vunpack.c.l.b16 %v30
  %v251 = vunpack.c.h.b16 %v30
  %v252 = vunpack.c.l.b16 %v31
  %v253 = vunpack.c.l.b16 %v32
  %v254 = vunpack.c.h.b16 %v32
  %v255 = vunpack.c.l.b16 %v33
  %v256 = vunpack.c.l.b16 %v34
  %v257 = vunpack.c.h.b16 %v34
  %v258 = vunpack.c.l.b16 %v35
  %v259 = vunpack.c.l.b16 %v36
  %v260 = vunpack.c.h.b16 %v36
  %v261 = vunpack.c.l.b16 %v37
  %v262 = vunpack.c.l.b16 %v38
  %v263 = vunpack.c.h.b16 %v38
  %v264 = vunpack.c.l.b16 %v39
  %v265 = vunpack.c.l.b16 %v40
  %v266 = vunpack.c.h.b16 %v40
  %v267 = vunpack.c.l.b16 %v41
  %v268 = vunpack.c.l.b16 %v42
  %v269 = vunpack.c.h.b16 %v42
  %v270 = vunpack.c.l.b16 %v43
  %v271 = vunpack.c.l.b16 %v44
  %v272 = vunpack.c.h.b16 %v44
  %v273 = vunpack.c.l.b16 %v45
  %v274 = vunpack.c.l.b16 %v46
  %v275 = vunpack.c.h.b16 %v46
  %v276 = vunpack.c.l.b16 %v47
  %v277 = vunpack.c.l.b16 %v48
  %v278 = vunpack.c.h.b16 %v48
  %v279 = vunpack.c.l.b16 %v49
  %v280 = vunpack.c.l.b16 %v50
  %v281 = vunpack.c.h.b16 %v50
  %v282 = vunpack.c.l.b16 %v51
  %v283 = vunpack.c.l.b16 %v52
  %v284 = vunpack.c.h.b16 %v52
  %v285 = vunpack.c.l.b16 %v53
  %v286 = vunpack.c.l.b16 %v54
  %v287 = vunpack.c.h.b16 %v54
  %v288 = vunpack.c.l.b16 %v55
  %v289 = vunpack.c.l.b16 %v56
  %v290 = vunpack.c.h.b16 %v56
  %v291 = vunpack.c.l.b16 %v57
  %v292 = vunpack.c.l.b16 %v58
  %v293 = vunpack.c.h.b16 %v58
  %v294 = vunpack.c.l.b16 %v59
  %v295 = vunpack.c.l.b16 %v60
  %v296 = vunpack.c.h.b16 %v60
  %v297 = vunpack.c.l.b16 %v61
  %v298 = vunpack.c.l.b16 %v62
  %v299 = vunpack.c.h.b16 %v62
  %v300 = vunpack.c.l.b16 %v63
  %v301 = vunpack.c.l.b16 %v64
  %v302 = vunpack.c.h.b16 %v64
  %v303 = vunpack.c.l.b16 %v65
  %v304 = vunpack.c.l.b16 %v66
  %v305 = vunpack.c.h.b16 %v66
  %v306 = vunpack.c.l.b16 %v67
  %v307 = vunpack.c.l.b16 %v68
  %v308 = vunpack.c.h.b16 %v68
  %v309 = vunpack.c.l.b16 %v69
  %v310 = vunpack.c.l.b16 %v70
  %v311 = vunpack.c.h.b16 %v70
  %v312 = vunpack.c.l.b16 %v71
  %v313 = vunpack.c.l.b16 %v72
  %v314 = vunpack.c.h.b16 %v72
  %v315 = vunpack.c.l.b16 %v73
  %v316 = vunpack.c.l.b16 %v74
  %v317 = vunpack.c.h.b16 %v74
  %v318 = vunpack.c.l.b16 %v75
  %v319 = vunpack.c.l.b16 %v76
  %v320 = vunpack.c.h.b16 %v76
  %v321 = vunpack.c.l.b16 %v77
  %v322 = vunpack.c.l.b16 %v78
  %v323 = vunpack.c.h.b16 %v78
  %v324 = vunpack.c.l.b16 %v79
  %v325 = vunpack.c.l.b16 %v80
  %v326 = vunpack.c.h.b16 %v80
  %v327 = vunpack.c.l.b16 %v81
  %v328 = vunpack.c.l.b16 %v82
  %v329 = vunpack.c.h.b16 %v82
  %v330 = vunpack.c.l.b16 %v83
  %v331 = vunpack.c.l.b16 %v84
  %v332 = vunpack.c.h.b16 %v84
  %v333 = vunpack.c.l.b16 %v85
  %v334 = vunpack.c.l.b16 %v86
  %v335 = vunpack.c.h.b16 %v86
  %v336 = vunpack.c.l.b16 %v87
  %v337 = vunpack.c.l.b16 %v88
  %v338 = vunpack.c.h.b16 %v88
  %v339 = vunpack.c.l.b16 %v89
  %v340 = vunpack.c.l.b16 %v90
  %v341 = vunpack.c.h.b16 %v90
  %v342 = vunpack.c.l.b16 %v91
  %v343 = vunpack.c.l.b16 %v92
  %v344 = vunpack.c.h.b16 %v92
  %v345 = vunpack.c.l.b16 %v93
  %v346 = vunpack.c.l.b16 %v94
  %v347 = vunpack.c.h.b16 %v94
  %v348 = vunpack.c.l.b16 %v95
  %v349 = vunpack.c.l.b16 %v96
  %v350 = vunpack.c.h.b16 %v96
  %v351 = vunpack.c.l.b16 %v97
  %v352 = vunpack.c.l.b16 %v98
  %v353 = vunpack.c.h.b16 %v98
  %v354 = vunpack.c.l.b16 %v99
  %v355 = vunpack.c.l.b16 %v100
  %v356 = vunpack.c.h.b16 %v100
  %v357 = vunpack.c.l.b16 %v101
  %v358 = vunpack.c.l.b16 %v102
  %v359 = vunpack.c.h.b16 %v102
  %v360 = vunpack.c.l.b16 %v103
  %v361 = vunpack.c.l.b16 %v104
  %v362 = vunpack.c.h.b16 %v104
  %v363 = vunpack.c.l.b16 %v105
  %v364 = vunpack.c.l.b16 %v106
  %v365 = vunpack.c.h.b16 %v106
  %v366 = vunpack.c.l.b16 %v107
  %v367 = vunpack.c.l.b16 %v108
  %v368 = vunpack.c.h.b16 %v108
  %v369 = vunpack.c.l.b16 %v109
  %v370 = vunpack.c.l.b16 %v110
  %v371 = vunpack.c.h.b16 %v110
  %v372 = vunpack.c.l.b16 %v111
  %v373 = vunpack.c.l.b16 %v112
  %v374 = vunpack.c.h.b16 %v112
  %v375 = vunpack.c.l.b16 %v113
  %v376 = vunpack.c.l.b16 %v114
  %v377 = vunpack.c.h.b16 %v114
  %v378 = vunpack.c.l.b16 %v115
  %v379 = vunpack.c.l.b16 %v116
  %v380 = vunpack.c.h.b16 %v116
  %v381 = vunpack.c.l.b16 %v117
  %v382 = vunpack.c.l.b16 %v118
  %v383 = vunpack.c.h.b16 %v118
  %v384 = vunpack.c.l.b16 %v119
  %v385 = vunpack.c.l.b16 %v120
  %v386 = vunpack.c.h.b16 %v120
  %v387 = vunpack.c.l.b16 %v121
  %v388 = vunpack.c.l.b16 %v122
  %v389 = vunpack.c.h.b16 %v122
  %v390 = vunpack.c.l.b16 %v123
  %v391 = vunpack.c.l.b16 %v124
  %v392 = vunpack.c.h.b16 %v124
  %v393 = vunpack.c.l.b16 %v125
  %v394 = vpack.c.b16 %v253, %v250
  %v395 = vpack.c.b16 %v254, %v251
  %v396 = vpack.c.b16 %v255, %v252
  %v397 = vpack.c.b16 %v259, %v256
  %v398 = vpack.c.b16 %v260, %v257
  %v399 = vpack.c.b16 %v261, %v258
  %v400 = vpack.c.b16 %v265, %v262
  %v401 = vpack.c.b16 %v266, %v263
  %v402 = vpack.c.b16 %v267, %v264
  %v403 = vpack.c.b16 %v271, %v268
  %v404 = vpack.c.b16 %v272, %v269
  %v405 = vpack.c.b16 %v273, %v270
  %v406 = vpack.c.b16 %v277, %v274
  %v407 = vpack.c.b16 %v278, %v275
  %v408 = vpack.c.b16 %v279, %v276
  %v409 = vpack.c.b16 %v283, %v280
  %v410 = vpack.c.b16 %v284, %v281
  %v411 = vpack.c.b16 %v285, %v282
  %v412 = vpack.c.b16 %v289, %v286
  %v413 = vpack.c.b16 %v290, %v287
  %v414 = vpack.c.b16 %v291, %v288
  %v415 = vpack.c.b16 %v295, %v292
  %v416 = vpack.c.b16 %v296, %v293
  %v417 = vpack.c.b16 %v297, %v294
  %v418 = vpack.c.b16 %v301, %v298
  %v419 = vpack.c.b16 %v302, %v299
  %v420 = vpack.c.b16 %v303, %v300
  %v421 = vpack.c.b16 %v307, %v304
  %v422 = vpack.c.b16 %v308, %v305
  %v423 = vpack.c.b16 %v309, %v306
  %v424 = vpack.c.b16 %v313, %v310
  %v425 = vpack.c.b16 %v314, %v311
  %v426 = vpack.c.b16 %v315, %v312
  %v427 = vpack.c.b16 %v319, %v316
  %v428 = vpack.c.b16 %v320, %v317
  %v429 = vpack.c.b16 %v321, %v318
  %v430 = vpack.c.b16 %v325, %v322
  %v431 = vpack.c.b16 %v326, %v323
  %v432 = vpack.c.b16 %v327, %v324
  %v433 = vpack.c.b16 %v331, %v328
  %v434 = vpack.c.b16 %v332, %v329
  %v435 = vpack.c.b16 %v333, %v330
  %v436 = vpack.c.b16 %v337, %v334
  %v437 = vpack.c.b16 %v338, %v335
  %v438 = vpack.c.b16 %v339, %v336
  %v439 = vpack.c.b16 %v343, %v340
  %v440 = vpack.c.b16 %v344, %v341
  %v441 = vpack.c.b16 %v345, %v342
  %v442 = vpack.c.b16 %v349, %v346
  %v443 = vpack.c.b16 %v350, %v347
  %v444 = vpack.c.b16 %v351, %v348
  %v445 = vpack.c.b16 %v355, %v352
  %v446 = vpack.c.b16 %v356, %v353
  %v447 = vpack.c.b16 %v357, %v354
  %v448 = vpack.c.b16 %v361, %v358
  %v449 = vpack.c.b16 %v362, %v359
  %v450 = vpack.c.b16 %v363, %v360
  %v451 = vpack.c.b16 %v367, %v364
  %v452 = vpack.c.b16 %v368, %v365
  %v453 = vpack.c.b16 %v369, %v366
  %v454 = vpack.c.b16 %v373, %v370
  %v455 = vpack.c.b16 %v374, %v371
  %v456 = vpack.c.b16 %v375, %v372
  %v457 = vpack.c.b16 %v379, %v376
  %v458 = vpack.c.b16 %v380, %v377
  %v459 = vpack.c.b16 %v381, %v378
  %v460 = vpack.c.b16 %v385, %v382
  %v461 = vpack.c.b16 %v386, %v383
  %v462 = vpack.c.b16 %v387, %v384
  %v463 = vpack.c.b16 %v391, %v388
  %v464 = vpack.c.b16 %v392, %v389
  %v465 = vpack.c.b16 %v393, %v390
  %538 = vmatprep.subr.bf16.mxu0 %v395
  %539 = vmatpush1.bf16.msra.mxu0 %v394
  %540 = vmatprep.subr.bf16.mxu0 %v398
  %541 = vmatpush1.bf16.msra.mxu0 %v397
  %542 = vmatprep.subr.bf16.mxu0 %v401
  %543 = vmatpush1.bf16.msra.mxu0 %v400
  %544 = vmatprep.subr.bf16.mxu0 %v404
  %545 = vmatpush1.bf16.msra.mxu0 %v403
  %546 = vmatprep.subr.bf16.mxu0 %v407
  %547 = vmatpush1.bf16.msra.mxu0 %v406
  %548 = vmatprep.subr.bf16.mxu0 %v410
  %549 = vmatpush1.bf16.msra.mxu0 %v409
  %550 = vmatprep.subr.bf16.mxu0 %v413
  %551 = vmatpush1.bf16.msra.mxu0 %v412
  %552 = vmatprep.subr.bf16.mxu0 %v416
  %553 = vmatpush1.bf16.msra.mxu0 %v415
  %554 = vmatprep.subr.bf16.mxu0 %v419
  %555 = vmatpush1.bf16.msra.mxu0 %v418
  %556 = vmatprep.subr.bf16.mxu0 %v422
  %557 = vmatpush1.bf16.msra.mxu0 %v421
  %558 = vmatprep.subr.bf16.mxu0 %v425
  %559 = vmatpush1.bf16.msra.mxu0 %v424
  %560 = vmatprep.subr.bf16.mxu0 %v428
  %561 = vmatpush1.bf16.msra.mxu0 %v427
  %562 = vmatprep.subr.bf16.mxu0 %v431
  %563 = vmatpush1.bf16.msra.mxu0 %v430
  %564 = vmatprep.subr.bf16.mxu0 %v434
  %565 = vmatpush1.bf16.msra.mxu0 %v433
  %566 = vmatprep.subr.bf16.mxu0 %v437
  %567 = vmatpush1.bf16.msra.mxu0 %v436
  %568 = vmatprep.subr.bf16.mxu0 %v440
  %569 = vmatpush1.bf16.msra.mxu0 %v439
  %570 = vmatprep.mubr.bf16.mxu0 %v149
  %571 = vmatmul.mubr.bf16.gmra.mrb[0].mxu0 %v148
  %v572 = vpop.f32.mrb[0].mxu0
  %v573 = vadd.f32 %v131, %v572
  %v574 = vpop.f32.mrb[0].mxu0
  %v575 = vadd.f32 %v135, %v574
  %v576 = vpop.f32.mrb[0].mxu0
  %v577 = vpop.f32.mrb[0].mxu0
  %578 = vdwg.mxu0
  %579 = vmatprep.subr.bf16.mxu0 %v443
  %580 = vmatpush1.bf16.msra.mxu0 %v442
  %581 = vmatprep.subr.bf16.mxu0 %v446
  %582 = vmatpush1.bf16.msra.mxu0 %v445
  %583 = vmatprep.subr.bf16.mxu0 %v449
  %584 = vmatpush1.bf16.msra.mxu0 %v448
  %585 = vmatprep.subr.bf16.mxu0 %v452
  %586 = vmatpush1.bf16.msra.mxu0 %v451
  %587 = vmatprep.subr.bf16.mxu0 %v455
  %588 = vmatpush1.bf16.msra.mxu0 %v454
  %589 = vmatprep.subr.bf16.mxu0 %v458
  %590 = vmatpush1.bf16.msra.mxu0 %v457
  %591 = vmatprep.subr.bf16.mxu0 %v461
  %592 = vmatpush1.bf16.msra.mxu0 %v460
  %593 = vmatprep.subr.bf16.mxu0 %v464
  %594 = vmatpush1.bf16.msra.mxu0 %v463
  %595 = vmatprep.subr.bf16.mxu0 0
  %596 = vmatpush1.bf16.msra.mxu0 0
  %597 = vmatprep.subr.bf16.mxu0 0
  %598 = vmatpush1.bf16.msra.mxu0 0
  %599 = vmatprep.subr.bf16.mxu0 0
  %600 = vmatpush1.bf16.msra.mxu0 0
  %601 = vmatprep.subr.bf16.mxu0 0
  %602 = vmatpush1.bf16.msra.mxu0 0
  %603 = vmatprep.subr.bf16.mxu0 0
  %604 = vmatpush1.bf16.msra.mxu0 0
  %605 = vmatprep.subr.bf16.mxu0 0
  %606 = vmatpush1.bf16.msra.mxu0 0
  %607 = vmatprep.subr.bf16.mxu0 0
  %608 = vmatpush1.bf16.msra.mxu0 0
  %609 = vmatprep.subr.bf16.mxu0 0
  %610 = vmatpush1.bf16.msra.mxu0 0
  %611 = vmatprep.mubr.bf16.mxu0 0
  %612 = vmatmul.mubr.bf16.gmra.mrb[0].mxu0 %v150
  %v613 = vpop.f32.mrb[0].mxu0
  %v614 = vadd.f32 %v573, %v613
  %v615 = vpop.f32.mrb[0].mxu0
  %v616 = vadd.f32 %v575, %v615
  %v617 = vpop.f32.mrb[0].mxu0
  %v618 = vpop.f32.mrb[0].mxu0
  %619 = vdwg.mxu0
  %620 = vmatprep.subr.bf16.mxu0 0
  %621 = vmatpush1.bf16.msra.mxu0 %v396
  %622 = vmatprep.subr.bf16.mxu0 0
  %623 = vmatpush1.bf16.msra.mxu0 %v399
  %624 = vmatprep.subr.bf16.mxu0 0
  %625 = vmatpush1.bf16.msra.mxu0 %v402
  %626 = vmatprep.subr.bf16.mxu0 0
  %627 = vmatpush1.bf16.msra.mxu0 %v405
  %628 = vmatprep.subr.bf16.mxu0 0
  %629 = vmatpush1.bf16.msra.mxu0 %v408
  %630 = vmatprep.subr.bf16.mxu0 0
  %631 = vmatpush1.bf16.msra.mxu0 %v411
  %632 = vmatprep.subr.bf16.mxu0 0
  %633 = vmatpush1.bf16.msra.mxu0 %v414
  %634 = vmatprep.subr.bf16.mxu0 0
  %635 = vmatpush1.bf16.msra.mxu0 %v417
  %636 = vmatprep.subr.bf16.mxu0 0
  %637 = vmatpush1.bf16.msra.mxu0 %v420
  %638 = vmatprep.subr.bf16.mxu0 0
  %639 = vmatpush1.bf16.msra.mxu0 %v423
  %640 = vmatprep.subr.bf16.mxu0 0
  %641 = vmatpush1.bf16.msra.mxu0 %v426
  %642 = vmatprep.subr.bf16.mxu0 0
  %643 = vmatpush1.bf16.msra.mxu0 %v429
  %644 = vmatprep.subr.bf16.mxu0 0
  %645 = vmatpush1.bf16.msra.mxu0 %v432
  %646 = vmatprep.subr.bf16.mxu0 0
  %647 = vmatpush1.bf16.msra.mxu0 %v435
  %648 = vmatprep.subr.bf16.mxu0 0
  %649 = vmatpush1.bf16.msra.mxu0 %v438
  %650 = vmatprep.subr.bf16.mxu0 0
  %651 = vmatpush1.bf16.msra.mxu0 %v441
  %652 = vmatprep.mubr.bf16.mxu0 %v149
  %653 = vmatmul.mubr.bf16.gmra.mrb[0].mxu0 %v148
  %v654 = vpop.f32.mrb[0].mxu0
  %v655 = vadd.f32 %v139, %v654
  %v656 = vpop.f32.mrb[0].mxu0
  %v657 = vpop.f32.mrb[0].mxu0
  %v658 = vpop.f32.mrb[0].mxu0
  %659 = vdwg.mxu0
  %660 = vmatprep.subr.bf16.mxu0 0
  %661 = vmatpush1.bf16.msra.mxu0 %v444
  %662 = vmatprep.subr.bf16.mxu0 0
  %663 = vmatpush1.bf16.msra.mxu0 %v447
  %664 = vmatprep.subr.bf16.mxu0 0
  %665 = vmatpush1.bf16.msra.mxu0 %v450
  %666 = vmatprep.subr.bf16.mxu0 0
  %667 = vmatpush1.bf16.msra.mxu0 %v453
  %668 = vmatprep.subr.bf16.mxu0 0
  %669 = vmatpush1.bf16.msra.mxu0 %v456
  %670 = vmatprep.subr.bf16.mxu0 0
  %671 = vmatpush1.bf16.msra.mxu0 %v459
  %672 = vmatprep.subr.bf16.mxu0 0
  %673 = vmatpush1.bf16.msra.mxu0 %v462
  %674 = vmatprep.subr.bf16.mxu0 0
  %675 = vmatpush1.bf16.msra.mxu0 %v465
  %676 = vmatprep.subr.bf16.mxu0 0
  %677 = vmatpush1.bf16.msra.mxu0 0
  %678 = vmatprep.subr.bf16.mxu0 0
  %679 = vmatpush1.bf16.msra.mxu0 0
  %680 = vmatprep.subr.bf16.mxu0 0
  %681 = vmatpush1.bf16.msra.mxu0 0
  %682 = vmatprep.subr.bf16.mxu0 0
  %683 = vmatpush1.bf16.msra.mxu0 0
  %684 = vmatprep.subr.bf16.mxu0 0
  %685 = vmatpush1.bf16.msra.mxu0 0
  %686 = vmatprep.subr.bf16.mxu0 0
  %687 = vmatpush1.bf16.msra.mxu0 0
  %688 = vmatprep.subr.bf16.mxu0 0
  %689 = vmatpush1.bf16.msra.mxu0 0
  %690 = vmatprep.subr.bf16.mxu0 0
  %691 = vmatpush1.bf16.msra.mxu0 0
  %692 = vmatprep.mubr.bf16.mxu0 0
  %693 = vmatmul.mubr.bf16.gmra.mrb[0].mxu0 %v150
  %v694 = vpop.f32.mrb[0].mxu0
  %v695 = vadd.f32 %v655, %v694
  %v696 = vpop.f32.mrb[0].mxu0
  %v697 = vpop.f32.mrb[0].mxu0
  %v698 = vpop.f32.mrb[0].mxu0
  %699 = vdwg.mxu0
  %v700 = vld [vmem:[%s4] sm:$0x77]
  %v701 = vld [vmem:[%s4 + $0x8] sm:$0x7]
  %v702 = vpack.c.bf16 %v614, %v614
  %v703 = vpack.c.bf16 %v616, %v616
  %v704 = vpack.c.bf16 %v695, %v695
  %v705 = vld [vmem:[%s5] sm:$0xff]
  %v706 = vld [vmem:[%s5 + $0x8] sm:$0xf]
  %v707 = vld [vmem:[%s5 + $0xc] sm:$0xff]
  %v708 = vld [vmem:[%s5 + $0x14] sm:$0xf]
  %v709 = vld [vmem:[%s5 + $0x18] sm:$0xff]
  %v710 = vld [vmem:[%s5 + $0x20] sm:$0xf]
  %v711 = vld [vmem:[%s5 + $0x24] sm:$0xff]
  %v712 = vld [vmem:[%s5 + $0x2c] sm:$0xf]
  %v713 = vld [vmem:[%s5 + $0x30] sm:$0xff]
  %v714 = vld [vmem:[%s5 + $0x38] sm:$0xf]
  %v715 = vld [vmem:[%s5 + $0x3c] sm:$0xff]
  %v716 = vld [vmem:[%s5 + $0x44] sm:$0xf]
  %v717 = vld [vmem:[%s5 + $0x48] sm:$0xff]
  %v718 = vld [vmem:[%s5 + $0x50] sm:$0xf]
  %v719 = vld [vmem:[%s5 + $0x54] sm:$0xff]
  %v720 = vld [vmem:[%s5 + $0x5c] sm:$0xf]
  %v721 = vld [vmem:[%s5 + $0x60] sm:$0xff]
  %v722 = vld [vmem:[%s5 + $0x68] sm:$0xf]
  %v723 = vld [vmem:[%s5 + $0x6c] sm:$0xff]
  %v724 = vld [vmem:[%s5 + $0x74] sm:$0xf]
  %v725 = vld [vmem:[%s5 + $0x78] sm:$0xff]
  %v726 = vld [vmem:[%s5 + $0x80] sm:$0xf]
  %v727 = vld [vmem:[%s5 + $0x84] sm:$0xff]
  %v728 = vld [vmem:[%s5 + $0x8c] sm:$0xf]
  %v729 = vld [vmem:[%s5 + $0x90] sm:$0xff]
  %v730 = vld [vmem:[%s5 + $0x98] sm:$0xf]
  %v731 = vld [vmem:[%s5 + $0x9c] sm:$0xff]
  %v732 = vld [vmem:[%s5 + $0xa4] sm:$0xf]
  %v733 = vld [vmem:[%s5 + $0xa8] sm:$0xff]
  %v734 = vld [vmem:[%s5 + $0xb0] sm:$0xf]
  %v735 = vld [vmem:[%s5 + $0xb4] sm:$0xff]
  %v736 = vld [vmem:[%s5 + $0xbc] sm:$0xf]
  %v737 = vld [vmem:[%s5 + $0xc0] sm:$0xff]
  %v738 = vld [vmem:[%s5 + $0xc8] sm:$0xf]
  %v739 = vld [vmem:[%s5 + $0xcc] sm:$0xff]
  %v740 = vld [vmem:[%s5 + $0xd4] sm:$0xf]
  %v741 = vld [vmem:[%s5 + $0xd8] sm:$0xff]
  %v742 = vld [vmem:[%s5 + $0xe0] sm:$0xf]
  %v743 = vld [vmem:[%s5 + $0xe4] sm:$0xff]
  %v744 = vld [vmem:[%s5 + $0xec] sm:$0xf]
  %v745 = vld [vmem:[%s5 + $0xf0] sm:$0xff]
  %v746 = vld [vmem:[%s5 + $0xf8] sm:$0xf]
  %v747 = vld [vmem:[%s5 + $0xfc] sm:$0xff]
  %v748 = vld [vmem:[%s5 + $0x104] sm:$0xf]
  %v749 = vld [vmem:[%s5 + $0x108] sm:$0xff]
  %v750 = vld [vmem:[%s5 + $0x110] sm:$0xf]
  %v751 = vld [vmem:[%s5 + $0x114] sm:$0xff]
  %v752 = vld [vmem:[%s5 + $0x11c] sm:$0xf]
  %v753 = vld [vmem:[%s5 + $0x120] sm:$0xff]
  %v754 = vld [vmem:[%s5 + $0x128] sm:$0xf]
  %v755 = vld [vmem:[%s5 + $0x12c] sm:$0xff]
  %v756 = vld [vmem:[%s5 + $0x134] sm:$0xf]
  %v757 = vld [vmem:[%s5 + $0x138] sm:$0xff]
  %v758 = vld [vmem:[%s5 + $0x140] sm:$0xf]
  %v759 = vld [vmem:[%s5 + $0x144] sm:$0xff]
  %v760 = vld [vmem:[%s5 + $0x14c] sm:$0xf]
  %v761 = vld [vmem:[%s5 + $0x150] sm:$0xff]
  %v762 = vld [vmem:[%s5 + $0x158] sm:$0xf]
  %v763 = vld [vmem:[%s5 + $0x15c] sm:$0xff]
  %v764 = vld [vmem:[%s5 + $0x164] sm:$0xf]
  %v765 = vld [vmem:[%s5 + $0x168] sm:$0xff]
  %v766 = vld [vmem:[%s5 + $0x170] sm:$0xf]
  %v767 = vld [vmem:[%s5 + $0x174] sm:$0xff]
  %v768 = vld [vmem:[%s5 + $0x17c] sm:$0xf]
  %v769 = vld [vmem:[%s5 + $0x180] sm:$0xff]
  %v770 = vld [vmem:[%s5 + $0x188] sm:$0xf]
  %v771 = vld [vmem:[%s5 + $0x18c] sm:$0xff]
  %v772 = vld [vmem:[%s5 + $0x194] sm:$0xf]
  %v773 = vld [vmem:[%s5 + $0x198] sm:$0xff]
  %v774 = vld [vmem:[%s5 + $0x1a0] sm:$0xf]
  %v775 = vld [vmem:[%s5 + $0x1a4] sm:$0xff]
  %v776 = vld [vmem:[%s5 + $0x1ac] sm:$0xf]
  %v777 = vld [vmem:[%s5 + $0x1b0] sm:$0xff]
  %v778 = vld [vmem:[%s5 + $0x1b8] sm:$0xf]
  %v779 = vld [vmem:[%s5 + $0x1bc] sm:$0xff]
  %v780 = vld [vmem:[%s5 + $0x1c4] sm:$0xf]
  %v781 = vld [vmem:[%s5 + $0x1c8] sm:$0xff]
  %v782 = vld [vmem:[%s5 + $0x1d0] sm:$0xf]
  %v783 = vld [vmem:[%s5 + $0x1d4] sm:$0xff]
  %v784 = vld [vmem:[%s5 + $0x1dc] sm:$0xf]
  %v785 = vld [vmem:[%s5 + $0x1e0] sm:$0xff]
  %v786 = vld [vmem:[%s5 + $0x1e8] sm:$0xf]
  %v787 = vld [vmem:[%s5 + $0x1ec] sm:$0xff]
  %v788 = vld [vmem:[%s5 + $0x1f4] sm:$0xf]
  %v789 = vld [vmem:[%s5 + $0x1f8] sm:$0xff]
  %v790 = vld [vmem:[%s5 + $0x200] sm:$0xf]
  %v791 = vld [vmem:[%s5 + $0x204] sm:$0xff]
  %v792 = vld [vmem:[%s5 + $0x20c] sm:$0xf]
  %v793 = vld [vmem:[%s5 + $0x210] sm:$0xff]
  %v794 = vld [vmem:[%s5 + $0x218] sm:$0xf]
  %v795 = vld [vmem:[%s5 + $0x21c] sm:$0xff]
  %v796 = vld [vmem:[%s5 + $0x224] sm:$0xf]
  %v797 = vld [vmem:[%s5 + $0x228] sm:$0xff]
  %v798 = vld [vmem:[%s5 + $0x230] sm:$0xf]
  %v799 = vld [vmem:[%s5 + $0x234] sm:$0xff]
  %v800 = vld [vmem:[%s5 + $0x23c] sm:$0xf]
  %v897 = vunpack.c.l.b16 %v705
  %v898 = vunpack.c.h.b16 %v705
  %v899 = vunpack.c.l.b16 %v706
  %v900 = vunpack.c.l.b16 %v707
  %v901 = vunpack.c.h.b16 %v707
  %v902 = vunpack.c.l.b16 %v708
  %v903 = vunpack.c.l.b16 %v709
  %v904 = vunpack.c.h.b16 %v709
  %v905 = vunpack.c.l.b16 %v710
  %v906 = vunpack.c.l.b16 %v711
  %v907 = vunpack.c.h.b16 %v711
  %v908 = vunpack.c.l.b16 %v712
  %v909 = vunpack.c.l.b16 %v713
  %v910 = vunpack.c.h.b16 %v713
  %v911 = vunpack.c.l.b16 %v714
  %v912 = vunpack.c.l.b16 %v715
  %v913 = vunpack.c.h.b16 %v715
  %v914 = vunpack.c.l.b16 %v716
  %v915 = vunpack.c.l.b16 %v717
  %v916 = vunpack.c.h.b16 %v717
  %v917 = vunpack.c.l.b16 %v718
  %v918 = vunpack.c.l.b16 %v719
  %v919 = vunpack.c.h.b16 %v719
  %v920 = vunpack.c.l.b16 %v720
  %v921 = vunpack.c.l.b16 %v721
  %v922 = vunpack.c.h.b16 %v721
  %v923 = vunpack.c.l.b16 %v722
  %v924 = vunpack.c.l.b16 %v723
  %v925 = vunpack.c.h.b16 %v723
  %v926 = vunpack.c.l.b16 %v724
  %v927 = vunpack.c.l.b16 %v725
  %v928 = vunpack.c.h.b16 %v725
  %v929 = vunpack.c.l.b16 %v726
  %v930 = vunpack.c.l.b16 %v727
  %v931 = vunpack.c.h.b16 %v727
  %v932 = vunpack.c.l.b16 %v728
  %v933 = vunpack.c.l.b16 %v729
  %v934 = vunpack.c.h.b16 %v729
  %v935 = vunpack.c.l.b16 %v730
  %v936 = vunpack.c.l.b16 %v731
  %v937 = vunpack.c.h.b16 %v731
  %v938 = vunpack.c.l.b16 %v732
  %v939 = vunpack.c.l.b16 %v733
  %v940 = vunpack.c.h.b16 %v733
  %v941 = vunpack.c.l.b16 %v734
  %v942 = vunpack.c.l.b16 %v735
  %v943 = vunpack.c.h.b16 %v735
  %v944 = vunpack.c.l.b16 %v736
  %v945 = vunpack.c.l.b16 %v737
  %v946 = vunpack.c.h.b16 %v737
  %v947 = vunpack.c.l.b16 %v738
  %v948 = vunpack.c.l.b16 %v739
  %v949 = vunpack.c.h.b16 %v739
  %v950 = vunpack.c.l.b16 %v740
  %v951 = vunpack.c.l.b16 %v741
  %v952 = vunpack.c.h.b16 %v741
  %v953 = vunpack.c.l.b16 %v742
  %v954 = vunpack.c.l.b16 %v743
  %v955 = vunpack.c.h.b16 %v743
  %v956 = vunpack.c.l.b16 %v744
  %v957 = vunpack.c.l.b16 %v745
  %v958 = vunpack.c.h.b16 %v745
  %v959 = vunpack.c.l.b16 %v746
  %v960 = vunpack.c.l.b16 %v747
  %v961 = vunpack.c.h.b16 %v747
  %v962 = vunpack.c.l.b16 %v748
  %v963 = vunpack.c.l.b16 %v749
  %v964 = vunpack.c.h.b16 %v749
  %v965 = vunpack.c.l.b16 %v750
  %v966 = vunpack.c.l.b16 %v751
  %v967 = vunpack.c.h.b16 %v751
  %v968 = vunpack.c.l.b16 %v752
  %v969 = vunpack.c.l.b16 %v753
  %v970 = vunpack.c.h.b16 %v753
  %v971 = vunpack.c.l.b16 %v754
  %v972 = vunpack.c.l.b16 %v755
  %v973 = vunpack.c.h.b16 %v755
  %v974 = vunpack.c.l.b16 %v756
  %v975 = vunpack.c.l.b16 %v757
  %v976 = vunpack.c.h.b16 %v757
  %v977 = vunpack.c.l.b16 %v758
  %v978 = vunpack.c.l.b16 %v759
  %v979 = vunpack.c.h.b16 %v759
  %v980 = vunpack.c.l.b16 %v760
  %v981 = vunpack.c.l.b16 %v761
  %v982 = vunpack.c.h.b16 %v761
  %v983 = vunpack.c.l.b16 %v762
  %v984 = vunpack.c.l.b16 %v763
  %v985 = vunpack.c.h.b16 %v763
  %v986 = vunpack.c.l.b16 %v764
  %v987 = vunpack.c.l.b16 %v765
  %v988 = vunpack.c.h.b16 %v765
  %v989 = vunpack.c.l.b16 %v766
  %v990 = vunpack.c.l.b16 %v767
  %v991 = vunpack.c.h.b16 %v767
  %v992 = vunpack.c.l.b16 %v768
  %v993 = vunpack.c.l.b16 %v769
  %v994 = vunpack.c.h.b16 %v769
  %v995 = vunpack.c.l.b16 %v770
  %v996 = vunpack.c.l.b16 %v771
  %v997 = vunpack.c.h.b16 %v771
  %v998 = vunpack.c.l.b16 %v772
  %v999 = vunpack.c.l.b16 %v773
  %v1000 = vunpack.c.h.b16 %v773
  %v1001 = vunpack.c.l.b16 %v774
  %v1002 = vunpack.c.l.b16 %v775
  %v1003 = vunpack.c.h.b16 %v775
  %v1004 = vunpack.c.l.b16 %v776
  %v1005 = vunpack.c.l.b16 %v777
  %v1006 = vunpack.c.h.b16 %v777
  %v1007 = vunpack.c.l.b16 %v778
  %v1008 = vunpack.c.l.b16 %v779
  %v1009 = vunpack.c.h.b16 %v779
  %v1010 = vunpack.c.l.b16 %v780
  %v1011 = vunpack.c.l.b16 %v781
  %v1012 = vunpack.c.h.b16 %v781
  %v1013 = vunpack.c.l.b16 %v782
  %v1014 = vunpack.c.l.b16 %v783
  %v1015 = vunpack.c.h.b16 %v783
  %v1016 = vunpack.c.l.b16 %v784
  %v1017 = vunpack.c.l.b16 %v785
  %v1018 = vunpack.c.h.b16 %v785
  %v1019 = vunpack.c.l.b16 %v786
  %v1020 = vunpack.c.l.b16 %v787
  %v1021 = vunpack.c.h.b16 %v787
  %v1022 = vunpack.c.l.b16 %v788
  %v1023 = vunpack.c.l.b16 %v789
  %v1024 = vunpack.c.h.b16 %v789
  %v1025 = vunpack.c.l.b16 %v790
  %v1026 = vunpack.c.l.b16 %v791
  %v1027 = vunpack.c.h.b16 %v791
  %v1028 = vunpack.c.l.b16 %v792
  %v1029 = vunpack.c.l.b16 %v793
  %v1030 = vunpack.c.h.b16 %v793
  %v1031 = vunpack.c.l.b16 %v794
  %v1032 = vunpack.c.l.b16 %v795
  %v1033 = vunpack.c.h.b16 %v795
  %v1034 = vunpack.c.l.b16 %v796
  %v1035 = vunpack.c.l.b16 %v797
  %v1036 = vunpack.c.h.b16 %v797
  %v1037 = vunpack.c.l.b16 %v798
  %v1038 = vunpack.c.l.b16 %v799
  %v1039 = vunpack.c.h.b16 %v799
  %v1040 = vunpack.c.l.b16 %v800
  %v1041 = vpack.c.b16 %v900, %v897
  %v1042 = vpack.c.b16 %v901, %v898
  %v1043 = vpack.c.b16 %v902, %v899
  %v1044 = vpack.c.b16 %v906, %v903
  %v1045 = vpack.c.b16 %v907, %v904
  %v1046 = vpack.c.b16 %v908, %v905
  %v1047 = vpack.c.b16 %v912, %v909
  %v1048 = vpack.c.b16 %v913, %v910
  %v1049 = vpack.c.b16 %v914, %v911
  %v1050 = vpack.c.b16 %v918, %v915
  %v1051 = vpack.c.b16 %v919, %v916
  %v1052 = vpack.c.b16 %v920, %v917
  %v1053 = vpack.c.b16 %v924, %v921
  %v1054 = vpack.c.b16 %v925, %v922
  %v1055 = vpack.c.b16 %v926, %v923
  %v1056 = vpack.c.b16 %v930, %v927
  %v1057 = vpack.c.b16 %v931, %v928
  %v1058 = vpack.c.b16 %v932, %v929
  %v1059 = vpack.c.b16 %v936, %v933
  %v1060 = vpack.c.b16 %v937, %v934
  %v1061 = vpack.c.b16 %v938, %v935
  %v1062 = vpack.c.b16 %v942, %v939
  %v1063 = vpack.c.b16 %v943, %v940
  %v1064 = vpack.c.b16 %v944, %v941
  %v1065 = vpack.c.b16 %v948, %v945
  %v1066 = vpack.c.b16 %v949, %v946
  %v1067 = vpack.c.b16 %v950, %v947
  %v1068 = vpack.c.b16 %v954, %v951
  %v1069 = vpack.c.b16 %v955, %v952
  %v1070 = vpack.c.b16 %v956, %v953
  %v1071 = vpack.c.b16 %v960, %v957
  %v1072 = vpack.c.b16 %v961, %v958
  %v1073 = vpack.c.b16 %v962, %v959
  %v1074 = vpack.c.b16 %v966, %v963
  %v1075 = vpack.c.b16 %v967, %v964
  %v1076 = vpack.c.b16 %v968, %v965
  %v1077 = vpack.c.b16 %v972, %v969
  %v1078 = vpack.c.b16 %v973, %v970
  %v1079 = vpack.c.b16 %v974, %v971
  %v1080 = vpack.c.b16 %v978, %v975
  %v1081 = vpack.c.b16 %v979, %v976
  %v1082 = vpack.c.b16 %v980, %v977
  %v1083 = vpack.c.b16 %v984, %v981
  %v1084 = vpack.c.b16 %v985, %v982
  %v1085 = vpack.c.b16 %v986, %v983
  %v1086 = vpack.c.b16 %v990, %v987
  %v1087 = vpack.c.b16 %v991, %v988
  %v1088 = vpack.c.b16 %v992, %v989
  %v1089 = vpack.c.b16 %v996, %v993
  %v1090 = vpack.c.b16 %v997, %v994
  %v1091 = vpack.c.b16 %v998, %v995
  %v1092 = vpack.c.b16 %v1002, %v999
  %v1093 = vpack.c.b16 %v1003, %v1000
  %v1094 = vpack.c.b16 %v1004, %v1001
  %v1095 = vpack.c.b16 %v1008, %v1005
  %v1096 = vpack.c.b16 %v1009, %v1006
  %v1097 = vpack.c.b16 %v1010, %v1007
  %v1098 = vpack.c.b16 %v1014, %v1011
  %v1099 = vpack.c.b16 %v1015, %v1012
  %v1100 = vpack.c.b16 %v1016, %v1013
  %v1101 = vpack.c.b16 %v1020, %v1017
  %v1102 = vpack.c.b16 %v1021, %v1018
  %v1103 = vpack.c.b16 %v1022, %v1019
  %v1104 = vpack.c.b16 %v1026, %v1023
  %v1105 = vpack.c.b16 %v1027, %v1024
  %v1106 = vpack.c.b16 %v1028, %v1025
  %v1107 = vpack.c.b16 %v1032, %v1029
  %v1108 = vpack.c.b16 %v1033, %v1030
  %v1109 = vpack.c.b16 %v1034, %v1031
  %v1110 = vpack.c.b16 %v1038, %v1035
  %v1111 = vpack.c.b16 %v1039, %v1036
  %v1112 = vpack.c.b16 %v1040, %v1037
  %1185 = vmatprep.subr.bf16.mxu0 %v1042
  %1186 = vmatpush1.bf16.msra.mxu0 %v1041
  %1187 = vmatprep.subr.bf16.mxu0 %v1045
  %1188 = vmatpush1.bf16.msra.mxu0 %v1044
  %1189 = vmatprep.subr.bf16.mxu0 %v1048
  %1190 = vmatpush1.bf16.msra.mxu0 %v1047
  %1191 = vmatprep.subr.bf16.mxu0 %v1051
  %1192 = vmatpush1.bf16.msra.mxu0 %v1050
  %1193 = vmatprep.subr.bf16.mxu0 %v1054
  %1194 = vmatpush1.bf16.msra.mxu0 %v1053
  %1195 = vmatprep.subr.bf16.mxu0 %v1057
  %1196 = vmatpush1.bf16.msra.mxu0 %v1056
  %1197 = vmatprep.subr.bf16.mxu0 %v1060
  %1198 = vmatpush1.bf16.msra.mxu0 %v1059
  %1199 = vmatprep.subr.bf16.mxu0 %v1063
  %1200 = vmatpush1.bf16.msra.mxu0 %v1062
  %1201 = vmatprep.subr.bf16.mxu0 %v1066
  %1202 = vmatpush1.bf16.msra.mxu0 %v1065
  %1203 = vmatprep.subr.bf16.mxu0 %v1069
  %1204 = vmatpush1.bf16.msra.mxu0 %v1068
  %1205 = vmatprep.subr.bf16.mxu0 %v1072
  %1206 = vmatpush1.bf16.msra.mxu0 %v1071
  %1207 = vmatprep.subr.bf16.mxu0 %v1075
  %1208 = vmatpush1.bf16.msra.mxu0 %v1074
  %1209 = vmatprep.subr.bf16.mxu0 %v1078
  %1210 = vmatpush1.bf16.msra.mxu0 %v1077
  %1211 = vmatprep.subr.bf16.mxu0 %v1081
  %1212 = vmatpush1.bf16.msra.mxu0 %v1080
  %1213 = vmatprep.subr.bf16.mxu0 %v1084
  %1214 = vmatpush1.bf16.msra.mxu0 %v1083
  %1215 = vmatprep.subr.bf16.mxu0 %v1087
  %1216 = vmatpush1.bf16.msra.mxu0 %v1086
  %1217 = vmatprep.mubr.bf16.mxu0 %v703
  %1218 = vmatmul.mubr.bf16.gmra.mrb[0].mxu0 %v702
  %v1219 = vpop.f32.mrb[0].mxu0
  %v1220 = vadd.f32 0.0, %v1219
  %v1221 = vpop.f32.mrb[0].mxu0
  %v1222 = vadd.f32 0.0, %v1221
  %v1223 = vpop.f32.mrb[0].mxu0
  %v1224 = vpop.f32.mrb[0].mxu0
  %1225 = vdwg.mxu0
  %1226 = vmatprep.subr.bf16.mxu0 %v1090
  %1227 = vmatpush1.bf16.msra.mxu0 %v1089
  %1228 = vmatprep.subr.bf16.mxu0 %v1093
  %1229 = vmatpush1.bf16.msra.mxu0 %v1092
  %1230 = vmatprep.subr.bf16.mxu0 %v1096
  %1231 = vmatpush1.bf16.msra.mxu0 %v1095
  %1232 = vmatprep.subr.bf16.mxu0 %v1099
  %1233 = vmatpush1.bf16.msra.mxu0 %v1098
  %1234 = vmatprep.subr.bf16.mxu0 %v1102
  %1235 = vmatpush1.bf16.msra.mxu0 %v1101
  %1236 = vmatprep.subr.bf16.mxu0 %v1105
  %1237 = vmatpush1.bf16.msra.mxu0 %v1104
  %1238 = vmatprep.subr.bf16.mxu0 %v1108
  %1239 = vmatpush1.bf16.msra.mxu0 %v1107
  %1240 = vmatprep.subr.bf16.mxu0 %v1111
  %1241 = vmatpush1.bf16.msra.mxu0 %v1110
  %1242 = vmatprep.subr.bf16.mxu0 0
  %1243 = vmatpush1.bf16.msra.mxu0 0
  %1244 = vmatprep.subr.bf16.mxu0 0
  %1245 = vmatpush1.bf16.msra.mxu0 0
  %1246 = vmatprep.subr.bf16.mxu0 0
  %1247 = vmatpush1.bf16.msra.mxu0 0
  %1248 = vmatprep.subr.bf16.mxu0 0
  %1249 = vmatpush1.bf16.msra.mxu0 0
  %1250 = vmatprep.subr.bf16.mxu0 0
  %1251 = vmatpush1.bf16.msra.mxu0 0
  %1252 = vmatprep.subr.bf16.mxu0 0
  %1253 = vmatpush1.bf16.msra.mxu0 0
  %1254 = vmatprep.subr.bf16.mxu0 0
  %1255 = vmatpush1.bf16.msra.mxu0 0
  %1256 = vmatprep.subr.bf16.mxu0 0
  %1257 = vmatpush1.bf16.msra.mxu0 0
  %1258 = vmatprep.mubr.bf16.mxu0 0
  %1259 = vmatmul.mubr.bf16.gmra.mrb[0].mxu0 %v704
  %v1260 = vpop.f32.mrb[0].mxu0
  %v1261 = vadd.f32 %v1220, %v1260
  %v1262 = vpop.f32.mrb[0].mxu0
  %v1263 = vadd.f32 %v1222, %v1262
  %v1264 = vpop.f32.mrb[0].mxu0
  %v1265 = vpop.f32.mrb[0].mxu0
  %1266 = vdwg.mxu0
  %1267 = vmatprep.subr.bf16.mxu0 0
  %1268 = vmatpush1.bf16.msra.mxu0 %v1043
  %1269 = vmatprep.subr.bf16.mxu0 0
  %1270 = vmatpush1.bf16.msra.mxu0 %v1046
  %1271 = vmatprep.subr.bf16.mxu0 0
  %1272 = vmatpush1.bf16.msra.mxu0 %v1049
  %1273 = vmatprep.subr.bf16.mxu0 0
  %1274 = vmatpush1.bf16.msra.mxu0 %v1052
  %1275 = vmatprep.subr.bf16.mxu0 0
  %1276 = vmatpush1.bf16.msra.mxu0 %v1055
  %1277 = vmatprep.subr.bf16.mxu0 0
  %1278 = vmatpush1.bf16.msra.mxu0 %v1058
  %1279 = vmatprep.subr.bf16.mxu0 0
  %1280 = vmatpush1.bf16.msra.mxu0 %v1061
  %1281 = vmatprep.subr.bf16.mxu0 0
  %1282 = vmatpush1.bf16.msra.mxu0 %v1064
  %1283 = vmatprep.subr.bf16.mxu0 0
  %1284 = vmatpush1.bf16.msra.mxu0 %v1067
  %1285 = vmatprep.subr.bf16.mxu0 0
  %1286 = vmatpush1.bf16.msra.mxu0 %v1070
  %1287 = vmatprep.subr.bf16.mxu0 0
  %1288 = vmatpush1.bf16.msra.mxu0 %v1073
  %1289 = vmatprep.subr.bf16.mxu0 0
  %1290 = vmatpush1.bf16.msra.mxu0 %v1076
  %1291 = vmatprep.subr.bf16.mxu0 0
  %1292 = vmatpush1.bf16.msra.mxu0 %v1079
  %1293 = vmatprep.subr.bf16.mxu0 0
  %1294 = vmatpush1.bf16.msra.mxu0 %v1082
  %1295 = vmatprep.subr.bf16.mxu0 0
  %1296 = vmatpush1.bf16.msra.mxu0 %v1085
  %1297 = vmatprep.subr.bf16.mxu0 0
  %1298 = vmatpush1.bf16.msra.mxu0 %v1088
  %1299 = vmatprep.mubr.bf16.mxu0 %v703
  %1300 = vmatmul.mubr.bf16.gmra.mrb[0].mxu0 %v702
  %v1301 = vpop.f32.mrb[0].mxu0
  %v1302 = vadd.f32 0.0, %v1301
  %v1303 = vpop.f32.mrb[0].mxu0
  %v1304 = vpop.f32.mrb[0].mxu0
  %v1305 = vpop.f32.mrb[0].mxu0
  %1306 = vdwg.mxu0
  %1307 = vmatprep.subr.bf16.mxu0 0
  %1308 = vmatpush1.bf16.msra.mxu0 %v1091
  %1309 = vmatprep.subr.bf16.mxu0 0
  %1310 = vmatpush1.bf16.msra.mxu0 %v1094
  %1311 = vmatprep.subr.bf16.mxu0 0
  %1312 = vmatpush1.bf16.msra.mxu0 %v1097
  %1313 = vmatprep.subr.bf16.mxu0 0
  %1314 = vmatpush1.bf16.msra.mxu0 %v1100
  %1315 = vmatprep.subr.bf16.mxu0 0
  %1316 = vmatpush1.bf16.msra.mxu0 %v1103
  %1317 = vmatprep.subr.bf16.mxu0 0
  %1318 = vmatpush1.bf16.msra.mxu0 %v1106
  %1319 = vmatprep.subr.bf16.mxu0 0
  %1320 = vmatpush1.bf16.msra.mxu0 %v1109
  %1321 = vmatprep.subr.bf16.mxu0 0
  %1322 = vmatpush1.bf16.msra.mxu0 %v1112
  %1323 = vmatprep.subr.bf16.mxu0 0
  %1324 = vmatpush1.bf16.msra.mxu0 0
  %1325 = vmatprep.subr.bf16.mxu0 0
  %1326 = vmatpush1.bf16.msra.mxu0 0
  %1327 = vmatprep.subr.bf16.mxu0 0
  %1328 = vmatpush1.bf16.msra.mxu0 0
  %1329 = vmatprep.subr.bf16.mxu0 0
  %1330 = vmatpush1.bf16.msra.mxu0 0
  %1331 = vmatprep.subr.bf16.mxu0 0
  %1332 = vmatpush1.bf16.msra.mxu0 0
  %1333 = vmatprep.subr.bf16.mxu0 0
  %1334 = vmatpush1.bf16.msra.mxu0 0
  %1335 = vmatprep.subr.bf16.mxu0 0
  %1336 = vmatpush1.bf16.msra.mxu0 0
  %1337 = vmatprep.subr.bf16.mxu0 0
  %1338 = vmatpush1.bf16.msra.mxu0 0
  %1339 = vmatprep.mubr.bf16.mxu0 0
  %1340 = vmatmul.mubr.bf16.gmra.mrb[0].mxu0 %v704
  %v1341 = vpop.f32.mrb[0].mxu0
  %v1342 = vadd.f32 %v1302, %v1341
  %v1343 = vpop.f32.mrb[0].mxu0
  %v1344 = vpop.f32.mrb[0].mxu0
  %v1345 = vpop.f32.mrb[0].mxu0
  %1346 = vdwg.mxu0
  %v1349 = vcombine.high %v700, %v700
  %vm1350 = vcmask 23552
  %v1352 = vsel %vm1350, %v27, 0
  %vm1354 = vcmask 1042432
  %v1355 = vsel %vm1354, %v700, 0
  %v1357 = vsel %vm1354, %v1349, 0
  %v1359 = vsel %vm1354, %v701, 0
  %1361 = vmatprep.subr.mxu0 %v1357
  %1362 = vmatpush1.msra.mxu0 %v1355
  %1363 = vmatprep.subr.mxu0 0.0
  %1364 = vmatpush1.msra.mxu0 0.0
  %1365 = vmatprep.subr.mxu0 0.0
  %1366 = vmatpush1.msra.mxu0 0.0
  %1367 = vmatprep.subr.mxu0 0.0
  %1368 = vmatpush1.msra.mxu0 0.0
  %1369 = vmatprep.subr.mxu0 0.0
  %1370 = vmatpush1.msra.mxu0 0.0
  %1371 = vmatprep.subr.mxu0 0.0
  %1372 = vmatpush1.msra.mxu0 0.0
  %1373 = vmatprep.subr.mxu0 0.0
  %1374 = vmatpush1.msra.mxu0 0.0
  %1375 = vmatprep.subr.mxu0 0.0
  %1376 = vmatpush1.msra.mxu0 0.0
  %1377 = vmatprep.subr.mxu0 0.0
  %1378 = vmatpush1.msra.mxu0 0.0
  %1379 = vmatprep.subr.mxu0 0.0
  %1380 = vmatpush1.msra.mxu0 0.0
  %1381 = vmatprep.subr.mxu0 0.0
  %1382 = vmatpush1.msra.mxu0 0.0
  %1383 = vmatprep.subr.mxu0 0.0
  %1384 = vmatpush1.msra.mxu0 0.0
  %1385 = vmatprep.subr.mxu0 0.0
  %1386 = vmatpush1.msra.mxu0 0.0
  %1387 = vmatprep.subr.mxu0 0.0
  %1388 = vmatpush1.msra.mxu0 0.0
  %1389 = vmatprep.subr.mxu0 0.0
  %1390 = vmatpush1.msra.mxu0 0.0
  %1391 = vmatprep.subr.mxu0 0.0
  %1392 = vmatpush1.msra.mxu0 0.0
  %1393 = vmatprep.subr.mxu0 0.0
  %1394 = vmatpush1.msra.mxu0 0.0
  %1395 = vmatprep.subr.mxu0 0.0
  %1396 = vmatpush1.msra.mxu0 0.0
  %1397 = vmatprep.subr.mxu0 0.0
  %1398 = vmatpush1.msra.mxu0 0.0
  %1399 = vmatprep.subr.mxu0 0.0
  %1400 = vmatpush1.msra.mxu0 0.0
  %1401 = vmatprep.subr.mxu0 0.0
  %1402 = vmatpush1.msra.mxu0 0.0
  %1403 = vmatprep.subr.mxu0 0.0
  %1404 = vmatpush1.msra.mxu0 0.0
  %1405 = vmatprep.subr.mxu0 0.0
  %1406 = vmatpush1.msra.mxu0 0.0
  %1407 = vmatprep.subr.mxu0 0.0
  %1408 = vmatpush1.msra.mxu0 0.0
  %1409 = vmatprep.subr.mxu0 0.0
  %1410 = vmatpush1.msra.mxu0 0.0
  %1411 = vmatprep.subr.mxu0 0.0
  %1412 = vmatpush1.msra.mxu0 0.0
  %1413 = vmatprep.subr.mxu0 0.0
  %1414 = vmatpush1.msra.mxu0 0.0
  %1415 = vmatprep.subr.mxu0 0.0
  %1416 = vmatpush1.msra.mxu0 0.0
  %1417 = vmatprep.subr.mxu0 0.0
  %1418 = vmatpush1.msra.mxu0 0.0
  %1419 = vmatprep.subr.mxu0 0.0
  %1420 = vmatpush1.msra.mxu0 0.0
  %1421 = vmatprep.subr.mxu0 0.0
  %1422 = vmatpush1.msra.mxu0 0.0
  %1423 = vmatprep.subr.mxu0 0.0
  %1424 = vmatpush1.msra.mxu0 0.0
  %1425 = vmatprep.mubr.f32.mxu0 0.0
  %1426 = vmatmul.mubr.f32.gmra.mrb[0].mxu0 %v1352
  %v1427 = vpop.f32.mrb[0].mxu0
  %v1428 = vadd.f32 %v1261, %v1427
  %v1429 = vpop.f32.mrb[0].mxu0
  %v1430 = vadd.f32 %v1263, %v1429
  %1431 = vdwg.mxu0
  %1432 = vmatprep.subr.mxu0 0.0
  %1433 = vmatpush1.msra.mxu0 %v1359
  %1434 = vmatprep.subr.mxu0 0.0
  %1435 = vmatpush1.msra.mxu0 0.0
  %1436 = vmatprep.subr.mxu0 0.0
  %1437 = vmatpush1.msra.mxu0 0.0
  %1438 = vmatprep.subr.mxu0 0.0
  %1439 = vmatpush1.msra.mxu0 0.0
  %1440 = vmatprep.subr.mxu0 0.0
  %1441 = vmatpush1.msra.mxu0 0.0
  %1442 = vmatprep.subr.mxu0 0.0
  %1443 = vmatpush1.msra.mxu0 0.0
  %1444 = vmatprep.subr.mxu0 0.0
  %1445 = vmatpush1.msra.mxu0 0.0
  %1446 = vmatprep.subr.mxu0 0.0
  %1447 = vmatpush1.msra.mxu0 0.0
  %1448 = vmatprep.subr.mxu0 0.0
  %1449 = vmatpush1.msra.mxu0 0.0
  %1450 = vmatprep.subr.mxu0 0.0
  %1451 = vmatpush1.msra.mxu0 0.0
  %1452 = vmatprep.subr.mxu0 0.0
  %1453 = vmatpush1.msra.mxu0 0.0
  %1454 = vmatprep.subr.mxu0 0.0
  %1455 = vmatpush1.msra.mxu0 0.0
  %1456 = vmatprep.subr.mxu0 0.0
  %1457 = vmatpush1.msra.mxu0 0.0
  %1458 = vmatprep.subr.mxu0 0.0
  %1459 = vmatpush1.msra.mxu0 0.0
  %1460 = vmatprep.subr.mxu0 0.0
  %1461 = vmatpush1.msra.mxu0 0.0
  %1462 = vmatprep.subr.mxu0 0.0
  %1463 = vmatpush1.msra.mxu0 0.0
  %1464 = vmatprep.subr.mxu0 0.0
  %1465 = vmatpush1.msra.mxu0 0.0
  %1466 = vmatprep.subr.mxu0 0.0
  %1467 = vmatpush1.msra.mxu0 0.0
  %1468 = vmatprep.subr.mxu0 0.0
  %1469 = vmatpush1.msra.mxu0 0.0
  %1470 = vmatprep.subr.mxu0 0.0
  %1471 = vmatpush1.msra.mxu0 0.0
  %1472 = vmatprep.subr.mxu0 0.0
  %1473 = vmatpush1.msra.mxu0 0.0
  %1474 = vmatprep.subr.mxu0 0.0
  %1475 = vmatpush1.msra.mxu0 0.0
  %1476 = vmatprep.subr.mxu0 0.0
  %1477 = vmatpush1.msra.mxu0 0.0
  %1478 = vmatprep.subr.mxu0 0.0
  %1479 = vmatpush1.msra.mxu0 0.0
  %1480 = vmatprep.subr.mxu0 0.0
  %1481 = vmatpush1.msra.mxu0 0.0
  %1482 = vmatprep.subr.mxu0 0.0
  %1483 = vmatpush1.msra.mxu0 0.0
  %1484 = vmatprep.subr.mxu0 0.0
  %1485 = vmatpush1.msra.mxu0 0.0
  %1486 = vmatprep.subr.mxu0 0.0
  %1487 = vmatpush1.msra.mxu0 0.0
  %1488 = vmatprep.subr.mxu0 0.0
  %1489 = vmatpush1.msra.mxu0 0.0
  %1490 = vmatprep.subr.mxu0 0.0
  %1491 = vmatpush1.msra.mxu0 0.0
  %1492 = vmatprep.subr.mxu0 0.0
  %1493 = vmatpush1.msra.mxu0 0.0
  %1494 = vmatprep.subr.mxu0 0.0
  %1495 = vmatpush1.msra.mxu0 0.0
  %1496 = vmatprep.mubr.f32.mxu0 0.0
  %1497 = vmatmul.mubr.f32.gmra.mrb[0].mxu0 %v1352
  %v1498 = vpop.f32.mrb[0].mxu0
  %v1499 = vadd.f32 %v1342, %v1498
  %v1500 = vpop.f32.mrb[0].mxu0
  %1501 = vdwg.mxu0
  %v1502 = vld [vmem:[%s6] sm:$0x7]
  %v1504 = vlaneseq
  %v1505 = vshrl.u32 %v1504, 7
  %v1506 = vsub.s32 0, %v1505
  %v1507 = vrot.slane %v1502, %v1506
  %v1508 = vlaneseq
  %v1509 = vshrl.u32 %v1508, 7
  %v1510 = vsub.s32 1, %v1509
  %v1511 = vrot.slane %v1502, %v1510
  %v1512 = vlaneseq
  %v1513 = vshrl.u32 %v1512, 7
  %v1514 = vsub.s32 2, %v1513
  %v1515 = vrot.slane %v1502, %v1514
  %v1519 = vadd.f32 %v1428, %v1507
  %v1520 = vadd.f32 %v1430, %v1511
  %v1521 = vadd.f32 %v1499, %v1515
  %v1522 = vmax.f32 %v1519, 0.0
  %v1523 = vmax.f32 %v1520, 0.0
  %v1524 = vmax.f32 %v1521, 0.0
  %v1525 = vpack.c.bf16 %v1522, %v1522
  %v1526 = vpack.c.bf16 %v1523, %v1523
  %v1527 = vpack.c.bf16 %v1524, %v1524
  %v1531 = vunpack.c.l.b16 %v1525
  %v1532 = vunpack.c.l.b16 %v1526
  %v1533 = vunpack.c.l.b16 %v1527
  %v1534 = vpack.c.b16 %v1532, %v1531
  %v1535 = vpack.c.b16 %v1533, %v1533
  %1538 = vst [vmem:[%s7] sm:$0xff] %v1534
  %1539 = vst [vmem:[%s7 + $0x8] sm:$0xf] %v1535
  // Predicated region
  $region30: #{noise_aware_feature_extractor.6} parent=0 // pred_check
    _
  $region31: #{noise_aware_feature_extractor.6} parent=0 // pred_check_branch
    %1541 = sbr.rel (0) target = $region33
  $region32: #{noise_aware_feature_extractor.6} parent=0 // pred_region
    _
  $region33: #{noise_aware_feature_extractor.6} parent=0 // pred_fallthru
    _
  // Predicated region
  $region34: #{noise_aware_feature_extractor.6} parent=0 // pred_check
    _
  $region35: #{noise_aware_feature_extractor.6} parent=0 // pred_check_branch
    %1543 = sbr.rel (0) target = $region37
  $region36: #{noise_aware_feature_extractor.6} parent=0 // pred_region
    _
  $region37: #{noise_aware_feature_extractor.6} parent=0 // pred_fallthru
    _

</llo_original>
